<compile_context>
chip_gen: v5e
topology: v5e:2x2
jax: 0.10.0
libtpu: 0.0.40
codegen_flags: <defaults>
</compile_context>

<pallas_src>
import functools

import jax
import jax.numpy as jnp
from jax import lax
from jax.experimental import pallas as pl
from jax.experimental.pallas import tpu as pltpu


# ------------------------------ fused kernel ------------------------------

def _cnn_fused_kernel(n_batch,
                      x_ref, gamma_ref, beta_ref,
                      w1_ref, b1_ref, w2_ref, b2_ref,
                      w3_ref, b3_ref, w4_ref, b4_ref,
                      wl_ref, bl_ref,
                      o_ref,
                      slab1, obuf1, slab2, obuf2, slab3, obuf3, slab4, obuf4,
                      a4buf):
    # x_ref: (N*L, C)  -- batch blocks stacked along rows, channels on lanes.
    # wK_ref: (3*Cin, Cout) bf16 conv tap slabs; bK_ref: (1, Cout) f32.
    # wl_ref: (LF, CF, 512) bf16 linear weight chunks; bl_ref: (1, 512) f32.
    # o_ref : (N, 512) f32.
    N = n_batch
    M0, C = x_ref.shape

    # ---------- BatchNorm1d (training-mode batch stats, biased var, eps=1e-5), one pass ----------
    x = x_ref[...]                                            # (N*L, C) f32
    inv_cnt = 1.0 / float(M0)
    mu = jnp.sum(x, axis=0, keepdims=True) * inv_cnt          # (1, C)
    msq = jnp.sum(x * x, axis=0, keepdims=True) * inv_cnt
    var = msq - mu * mu
    scale = gamma_ref[...] * lax.rsqrt(var + 1e-5)            # (1, C)
    shift = beta_ref[...] - mu * scale
    a = x * scale + shift                                     # BN applied, (N*L, C) f32

    layers = ((w1_ref, b1_ref, slab1, obuf1),
              (w2_ref, b2_ref, slab2, obuf2),
              (w3_ref, b3_ref, slab3, obuf3),
              (w4_ref, b4_ref, slab4, obuf4))

    for (w_ref, b_ref, slab_ref, obuf_ref) in layers:
        M, Cin = a.shape
        L = M // N                                            # per-batch length at this layer
        # ----- (M, 3*Cin) tap slab with per-batch replicate padding, one dot for all batches -----
        slab_ref[:, pl.ds(Cin, Cin)] = a                                   # tap k=1: x[l]
        slab_ref[pl.ds(1, M - 1), pl.ds(0, Cin)] = a[0:M - 1, :]           # tap k=0: x[l-1]
        slab_ref[pl.ds(0, M - 1), pl.ds(2 * Cin, Cin)] = a[1:M, :]         # tap k=2: x[l+1]
        for n in range(N):                                                 # replicate edges per batch
            s = n * L
            e = s + L - 1
            slab_ref[pl.ds(s, 1), pl.ds(0, Cin)] = a[s:s + 1, :]
            slab_ref[pl.ds(e, 1), pl.ds(2 * Cin, Cin)] = a[e:e + 1, :]
        # bf16 MXU operands, f32 accumulation.
        out = jnp.dot(slab_ref[...].astype(jnp.bfloat16), w_ref[...],
                      preferred_element_type=jnp.float32)                  # (M, Cout)
        out = jnp.maximum(out + b_ref[...], 0.0)
        # ----- MaxPool1d(kernel=2, stride=2): dense store + two stride-2 reads -----
        obuf_ref[...] = out
        half = M // 2
        a = jnp.maximum(obuf_ref[pl.ds(0, half, stride=2), :],
                        obuf_ref[pl.ds(1, half, stride=2), :])             # (M/2, Cout)

    # ---------- flatten + Linear as LF accumulated chunk-dots (no flatten buffer) ----------
    # a: (N*LF, CF) with row = n*LF + l.  out[n,:] = sum_l a[n*LF+l,:] @ Wl[l]
    a4buf[...] = a
    LF = a.shape[0] // N
    acc = jnp.zeros(o_ref.shape, jnp.float32)
    for l in range(LF):
        tile = a4buf[pl.ds(l, N, stride=LF), :].astype(jnp.bfloat16)       # (N, CF)
        acc = acc + jnp.dot(tile, wl_ref[l], preferred_element_type=jnp.float32)
    # TODO(synk): nn.Dropout is identity at inference; training-mode masking not implemented.
    o_ref[...] = acc + bl_ref[...]


# ------------------------------ wrapper ------------------------------

def cnn_forward(params, x):
    # x: (N, C, L) float32, NCL like PyTorch.
    N, C, L = x.shape
    O, F = params["lin_w"].shape          # (512, C*160)
    CF = 16 * C
    assert L % 16 == 0, "need 4 pooling halvings"
    LF = L // 16
    assert CF * LF == F, "input length must satisfy the module's reshape(-1, C*160)"

    x_flat = jnp.transpose(x, (0, 2, 1)).reshape(N * L, C).astype(jnp.float32)
    args = [x_flat,
            params["bn_gamma"].reshape(1, C).astype(jnp.float32),
            params["bn_beta"].reshape(1, C).astype(jnp.float32)]

    # Conv weights -> (3*Cin, Cout) tap slabs (bf16): slab[k*Cin + i, o] = W[o, i, k]
    cin = C
    for (w, b) in params["convs"]:
        cout = w.shape[0]
        w_slab = jnp.transpose(w, (2, 1, 0)).reshape(3 * cin, cout).astype(jnp.bfloat16)
        args += [w_slab, b.reshape(1, cout).astype(jnp.float32)]
        cin = cout

    # Linear weight split into LF chunks: wl[l, c, o] = W_pt[o, c*LF + l]  (PyTorch flatten = c*LF+l)
    wl = params["lin_w"].reshape(O, CF, LF).transpose(2, 1, 0).astype(jnp.bfloat16)
    args += [wl, params["lin_b"].reshape(1, O).astype(jnp.float32)]

    # Scratch: tap slab + pre-pool output per layer, plus the pooled layer-4 activations.
    scratch = []
    Lc, Cc = L, C
    for _ in range(4):
        M = N * Lc
        scratch.append(pltpu.VMEM((M, 3 * Cc), jnp.float32))   # tap slab
        scratch.append(pltpu.VMEM((M, 2 * Cc), jnp.float32))   # pre-pool conv output
        Lc, Cc = Lc // 2, Cc * 2
    scratch.append(pltpu.VMEM((N * LF, CF), jnp.float32))      # pooled layer-4 output

    # Advisory cost estimate for XLA scheduling.
    flops = 0
    Lc, Cc = L, C
    for _ in range(4):
        flops += 2 * (N * Lc) * (3 * Cc) * (2 * Cc)
        Lc, Cc = Lc // 2, Cc * 2
    flops += 2 * N * F * O
    bytes_accessed = int(x_flat.size * 4 + N * O * 4
                         + sum(int(a.size) * a.dtype.itemsize for a in args[1:]))

    kernel = functools.partial(_cnn_fused_kernel, N)
    return pl.pallas_call(
        kernel,
        out_shape=jax.ShapeDtypeStruct((N, O), jnp.float32),
        scratch_shapes=scratch,
        cost_estimate=pl.CostEstimate(flops=flops, transcendentals=C,
                                      bytes_accessed=bytes_accessed),
    )(*args)


# -------------------------- pure-JAX reference --------------------------

def reference_forward(params, x):
    # Mirrors the PyTorch module (NCL layout), dropout = identity (inference).
    C = x.shape[1]
    g = params["bn_gamma"].reshape(1, C, 1)
    b = params["bn_beta"].reshape(1, C, 1)
    mu = jnp.mean(x, axis=(0, 2), keepdims=True)
    var = jnp.mean((x - mu) ** 2, axis=(0, 2), keepdims=True)
    h = (x - mu) * lax.rsqrt(var + 1e-5) * g + b
    for (w, bias) in params["convs"]:
        Lc = h.shape[2]
        hp = jnp.pad(h, ((0, 0), (0, 0), (1, 1)), mode="edge")
        h = (jnp.einsum("oi,nil->nol", w[:, :, 0], hp[:, :, 0:Lc])
             + jnp.einsum("oi,nil->nol", w[:, :, 1], hp[:, :, 1:Lc + 1])
             + jnp.einsum("oi,nil->nol", w[:, :, 2], hp[:, :, 2:Lc + 2])
             + bias.reshape(1, -1, 1))
        h = jnp.maximum(h, 0.0)
        h = jnp.maximum(h[:, :, 0::2], h[:, :, 1::2])
    h = h.reshape(-1, h.shape[1] * h.shape[2])
    return h @ params["lin_w"].T + params["lin_b"]


# ------------------------------ params ------------------------------

def init_params(key, num_channel):
    C = num_channel
    keys = iter(jax.random.split(key, 16))

    def unif(shape, bound):
        return jax.random.uniform(next(keys), shape, jnp.float32, -bound, bound)

    params = {"bn_gamma": jnp.ones((C,), jnp.float32),
              "bn_beta": jnp.zeros((C,), jnp.float32)}
    convs = []
    cin = C
    for mult in (2, 4, 8, 16):
        cout = C * mult
        bound = 1.0 / (cin * 3) ** 0.5
        convs.append((unif((cout, cin, 3), bound), unif((cout,), bound)))
        cin = cout
    params["convs"] = convs
    fin = C * 160
    bound = 1.0 / fin ** 0.5
    params["lin_w"] = unif((512, fin), bound)
    params["lin_b"] = unif((512,), bound)
    return params


# ------------------------------ main ------------------------------

if __name__ == "__main__":
    NUM_CHANNEL = 4
    DROPOUT = 0.1            # defined by the module; identity at inference
    N, L = 2, 160            # L = 160 so reshape(-1, num_channel*160) works (4 pools of /2)

    key = jax.random.PRNGKey(0)
    kx, kp = jax.random.split(key)
    x = jax.random.normal(kx, (N, NUM_CHANNEL, L), jnp.float32)
    params = init_params(kp, NUM_CHANNEL)

    fwd = jax.jit(cnn_forward)
    out = fwd(params, x)
    jax.block_until_ready(out)

    ref = reference_forward(params, x)
    assert out.shape == (N, 512)
    # bf16 MXU operands in the kernel -> 2e-2 tolerance against the f32 reference.
    assert bool(jnp.allclose(out, ref, rtol=2e-2, atol=2e-2)), "mismatch vs reference"
    print("KERNEL_OK")
</pallas_src>

<mosaic_0001>
module attributes {stable_mosaic.version = 11 : i64} {
  func.func @_cnn_fused_kernel(%arg0: memref<320x4xf32, #tpu.memory_space<vmem>>, %arg1: memref<1x4xf32, #tpu.memory_space<vmem>>, %arg2: memref<1x4xf32, #tpu.memory_space<vmem>>, %arg3: memref<12x8xbf16, #tpu.memory_space<vmem>>, %arg4: memref<1x8xf32, #tpu.memory_space<vmem>>, %arg5: memref<24x16xbf16, #tpu.memory_space<vmem>>, %arg6: memref<1x16xf32, #tpu.memory_space<vmem>>, %arg7: memref<48x32xbf16, #tpu.memory_space<vmem>>, %arg8: memref<1x32xf32, #tpu.memory_space<vmem>>, %arg9: memref<96x64xbf16, #tpu.memory_space<vmem>>, %arg10: memref<1x64xf32, #tpu.memory_space<vmem>>, %arg11: memref<10x64x512xbf16, #tpu.memory_space<vmem>>, %arg12: memref<1x512xf32, #tpu.memory_space<vmem>>, %arg13: memref<2x512xf32, #tpu.memory_space<vmem>>, %arg14: memref<320x12xf32, #tpu.memory_space<vmem>>, %arg15: memref<320x8xf32, #tpu.memory_space<vmem>>, %arg16: memref<160x24xf32, #tpu.memory_space<vmem>>, %arg17: memref<160x16xf32, #tpu.memory_space<vmem>>, %arg18: memref<80x48xf32, #tpu.memory_space<vmem>>, %arg19: memref<80x32xf32, #tpu.memory_space<vmem>>, %arg20: memref<40x96xf32, #tpu.memory_space<vmem>>, %arg21: memref<40x64xf32, #tpu.memory_space<vmem>>, %arg22: memref<20x64xf32, #tpu.memory_space<vmem>>) attributes {dimension_semantics = [], scalar_prefetch = 0 : i64, scratch_operands = 9 : i64, tpu.core_type = #tpu.core_type<tc>} {
    %c0 = arith.constant 0 : index
    %c0_0 = arith.constant 0 : index
    %0 = vector.load %arg0[%c0, %c0_0] : memref<320x4xf32, #tpu.memory_space<vmem>>, vector<320x4xf32>
    %cst = arith.constant dense<0.000000e+00> : vector<4xf32>
    %1 = vector.multi_reduction <add>, %0, %cst [0] : vector<320x4xf32> to vector<4xf32>
    %2 = vector.shape_cast %1 : vector<4xf32> to vector<1x4xf32>
    %cst_1 = arith.constant 3.125000e-03 : f32
    %3 = vector.broadcast %cst_1 : f32 to vector<1x4xf32>
    %4 = arith.mulf %2, %3 : vector<1x4xf32>
    %5 = arith.mulf %0, %0 : vector<320x4xf32>
    %cst_2 = arith.constant dense<0.000000e+00> : vector<4xf32>
    %6 = vector.multi_reduction <add>, %5, %cst_2 [0] : vector<320x4xf32> to vector<4xf32>
    %7 = vector.shape_cast %6 : vector<4xf32> to vector<1x4xf32>
    %cst_3 = arith.constant 3.125000e-03 : f32
    %8 = vector.broadcast %cst_3 : f32 to vector<1x4xf32>
    %9 = arith.mulf %7, %8 : vector<1x4xf32>
    %10 = arith.mulf %4, %4 : vector<1x4xf32>
    %11 = arith.subf %9, %10 : vector<1x4xf32>
    %c0_4 = arith.constant 0 : index
    %c0_5 = arith.constant 0 : index
    %12 = vector.load %arg1[%c0_4, %c0_5] : memref<1x4xf32, #tpu.memory_space<vmem>>, vector<1x4xf32>
    %cst_6 = arith.constant 9.99999974E-6 : f32
    %13 = vector.broadcast %cst_6 : f32 to vector<1x4xf32>
    %14 = arith.addf %11, %13 : vector<1x4xf32>
    %15 = math.rsqrt %14 : vector<1x4xf32>
    %16 = arith.mulf %12, %15 : vector<1x4xf32>
    %c0_7 = arith.constant 0 : index
    %c0_8 = arith.constant 0 : index
    %17 = vector.load %arg2[%c0_7, %c0_8] : memref<1x4xf32, #tpu.memory_space<vmem>>, vector<1x4xf32>
    %18 = arith.mulf %4, %16 : vector<1x4xf32>
    %19 = arith.subf %17, %18 : vector<1x4xf32>
    %20 = vector.broadcast %16 : vector<1x4xf32> to vector<320x4xf32>
    %21 = arith.mulf %0, %20 : vector<320x4xf32>
    %22 = vector.broadcast %19 : vector<1x4xf32> to vector<320x4xf32>
    %23 = arith.addf %21, %22 : vector<320x4xf32>
    %c0_9 = arith.constant 0 : index
    %c4 = arith.constant 4 : index
    %24 = vector.load %arg14[%c0_9, %c4] : memref<320x12xf32, #tpu.memory_space<vmem>>, vector<320x4xf32>
    tpu.vector_store %arg14[%c0_9, %c4], %23 {strides = array<i32>} : memref<320x12xf32, #tpu.memory_space<vmem>>, vector<320x4xf32>,
    %25 = vector.extract_strided_slice %23 {offsets = [0, 0], sizes = [319, 4], strides = [1, 1]} : vector<320x4xf32> to vector<319x4xf32>
    %c1 = arith.constant 1 : index
    %c0_10 = arith.constant 0 : index
    %26 = vector.load %arg14[%c1, %c0_10] : memref<320x12xf32, #tpu.memory_space<vmem>>, vector<319x4xf32>
    tpu.vector_store %arg14[%c1, %c0_10], %25 {strides = array<i32>} : memref<320x12xf32, #tpu.memory_space<vmem>>, vector<319x4xf32>,
    %27 = vector.extract_strided_slice %23 {offsets = [1, 0], sizes = [319, 4], strides = [1, 1]} : vector<320x4xf32> to vector<319x4xf32>
    %c0_11 = arith.constant 0 : index
    %c8 = arith.constant 8 : index
    %28 = vector.load %arg14[%c0_11, %c8] : memref<320x12xf32, #tpu.memory_space<vmem>>, vector<319x4xf32>
    tpu.vector_store %arg14[%c0_11, %c8], %27 {strides = array<i32>} : memref<320x12xf32, #tpu.memory_space<vmem>>, vector<319x4xf32>,
    %29 = vector.extract_strided_slice %23 {offsets = [0, 0], sizes = [1, 4], strides = [1, 1]} : vector<320x4xf32> to vector<1x4xf32>
    %c0_12 = arith.constant 0 : index
    %c0_13 = arith.constant 0 : index
    %30 = vector.load %arg14[%c0_12, %c0_13] : memref<320x12xf32, #tpu.memory_space<vmem>>, vector<1x4xf32>
    tpu.vector_store %arg14[%c0_12, %c0_13], %29 {strides = array<i32>} : memref<320x12xf32, #tpu.memory_space<vmem>>, vector<1x4xf32>,
    %31 = vector.extract_strided_slice %23 {offsets = [159, 0], sizes = [1, 4], strides = [1, 1]} : vector<320x4xf32> to vector<1x4xf32>
    %c159 = arith.constant 159 : index
    %c8_14 = arith.constant 8 : index
    %32 = vector.load %arg14[%c159, %c8_14] : memref<320x12xf32, #tpu.memory_space<vmem>>, vector<1x4xf32>
    tpu.vector_store %arg14[%c159, %c8_14], %31 {strides = array<i32>} : memref<320x12xf32, #tpu.memory_space<vmem>>, vector<1x4xf32>,
    %33 = vector.extract_strided_slice %23 {offsets = [160, 0], sizes = [1, 4], strides = [1, 1]} : vector<320x4xf32> to vector<1x4xf32>
    %c160 = arith.constant 160 : index
    %c0_15 = arith.constant 0 : index
    %34 = vector.load %arg14[%c160, %c0_15] : memref<320x12xf32, #tpu.memory_space<vmem>>, vector<1x4xf32>
    tpu.vector_store %arg14[%c160, %c0_15], %33 {strides = array<i32>} : memref<320x12xf32, #tpu.memory_space<vmem>>, vector<1x4xf32>,
    %35 = vector.extract_strided_slice %23 {offsets = [319, 0], sizes = [1, 4], strides = [1, 1]} : vector<320x4xf32> to vector<1x4xf32>
    %c319 = arith.constant 319 : index
    %c8_16 = arith.constant 8 : index
    %36 = vector.load %arg14[%c319, %c8_16] : memref<320x12xf32, #tpu.memory_space<vmem>>, vector<1x4xf32>
    tpu.vector_store %arg14[%c319, %c8_16], %35 {strides = array<i32>} : memref<320x12xf32, #tpu.memory_space<vmem>>, vector<1x4xf32>,
    %c0_17 = arith.constant 0 : index
    %c0_18 = arith.constant 0 : index
    %37 = vector.load %arg14[%c0_17, %c0_18] : memref<320x12xf32, #tpu.memory_space<vmem>>, vector<320x12xf32>
    %38 = arith.truncf %37 : vector<320x12xf32> to vector<320x12xbf16>
    %c0_19 = arith.constant 0 : index
    %c0_20 = arith.constant 0 : index
    %39 = vector.load %arg3[%c0_19, %c0_20] : memref<12x8xbf16, #tpu.memory_space<vmem>>, vector<12x8xbf16>
    %cst_21 = arith.constant dense<0.000000e+00> : vector<320x8xf32>
    %40 = tpu.matmul %38, %39, %cst_21 {dimension_numbers = #tpu.dot_dimension_numbers<[1], [0], [0], [1], [0, 0, 1, 1], [], []>} : vector<320x12xbf16>, vector<12x8xbf16>, vector<320x8xf32> -> vector<320x8xf32>
    %c0_22 = arith.constant 0 : index
    %c0_23 = arith.constant 0 : index
    %41 = vector.load %arg4[%c0_22, %c0_23] : memref<1x8xf32, #tpu.memory_space<vmem>>, vector<1x8xf32>
    %42 = vector.broadcast %41 : vector<1x8xf32> to vector<320x8xf32>
    %43 = arith.addf %40, %42 : vector<320x8xf32>
    %cst_24 = arith.constant 0.000000e+00 : f32
    %44 = vector.broadcast %cst_24 : f32 to vector<320x8xf32>
    %45 = arith.maximumf %43, %44 : vector<320x8xf32>
    %c0_25 = arith.constant 0 : index
    %c0_26 = arith.constant 0 : index
    %46 = vector.load %arg15[%c0_25, %c0_26] : memref<320x8xf32, #tpu.memory_space<vmem>>, vector<320x8xf32>
    tpu.vector_store %arg15[%c0_25, %c0_26], %45 {strides = array<i32>} : memref<320x8xf32, #tpu.memory_space<vmem>>, vector<320x8xf32>,
    %c0_27 = arith.constant 0 : index
    %c0_28 = arith.constant 0 : index
    %47 = tpu.strided_load %arg15[%c0_27, %c0_28] {strides = array<i32: 2, 1>} : memref<320x8xf32, #tpu.memory_space<vmem>>, vector<160x8xf32>
    %c1_29 = arith.constant 1 : index
    %c0_30 = arith.constant 0 : index
    %48 = tpu.strided_load %arg15[%c1_29, %c0_30] {strides = array<i32: 2, 1>} : memref<320x8xf32, #tpu.memory_space<vmem>>, vector<160x8xf32>
    %49 = arith.maximumf %47, %48 : vector<160x8xf32>
    %c0_31 = arith.constant 0 : index
    %c8_32 = arith.constant 8 : index
    %50 = vector.load %arg16[%c0_31, %c8_32] : memref<160x24xf32, #tpu.memory_space<vmem>>, vector<160x8xf32>
    tpu.vector_store %arg16[%c0_31, %c8_32], %49 {strides = array<i32>} : memref<160x24xf32, #tpu.memory_space<vmem>>, vector<160x8xf32>,
    %51 = vector.extract_strided_slice %49 {offsets = [0, 0], sizes = [159, 8], strides = [1, 1]} : vector<160x8xf32> to vector<159x8xf32>
    %c1_33 = arith.constant 1 : index
    %c0_34 = arith.constant 0 : index
    %52 = vector.load %arg16[%c1_33, %c0_34] : memref<160x24xf32, #tpu.memory_space<vmem>>, vector<159x8xf32>
    tpu.vector_store %arg16[%c1_33, %c0_34], %51 {strides = array<i32>} : memref<160x24xf32, #tpu.memory_space<vmem>>, vector<159x8xf32>,
    %53 = vector.extract_strided_slice %49 {offsets = [1, 0], sizes = [159, 8], strides = [1, 1]} : vector<160x8xf32> to vector<159x8xf32>
    %c0_35 = arith.constant 0 : index
    %c16 = arith.constant 16 : index
    %54 = vector.load %arg16[%c0_35, %c16] : memref<160x24xf32, #tpu.memory_space<vmem>>, vector<159x8xf32>
    tpu.vector_store %arg16[%c0_35, %c16], %53 {strides = array<i32>} : memref<160x24xf32, #tpu.memory_space<vmem>>, vector<159x8xf32>,
    %55 = vector.extract_strided_slice %49 {offsets = [0, 0], sizes = [1, 8], strides = [1, 1]} : vector<160x8xf32> to vector<1x8xf32>
    %c0_36 = arith.constant 0 : index
    %c0_37 = arith.constant 0 : index
    %56 = vector.load %arg16[%c0_36, %c0_37] : memref<160x24xf32, #tpu.memory_space<vmem>>, vector<1x8xf32>
    tpu.vector_store %arg16[%c0_36, %c0_37], %55 {strides = array<i32>} : memref<160x24xf32, #tpu.memory_space<vmem>>, vector<1x8xf32>,
    %57 = vector.extract_strided_slice %49 {offsets = [79, 0], sizes = [1, 8], strides = [1, 1]} : vector<160x8xf32> to vector<1x8xf32>
    %c79 = arith.constant 79 : index
    %c16_38 = arith.constant 16 : index
    %58 = vector.load %arg16[%c79, %c16_38] : memref<160x24xf32, #tpu.memory_space<vmem>>, vector<1x8xf32>
    tpu.vector_store %arg16[%c79, %c16_38], %57 {strides = array<i32>} : memref<160x24xf32, #tpu.memory_space<vmem>>, vector<1x8xf32>,
    %59 = vector.extract_strided_slice %49 {offsets = [80, 0], sizes = [1, 8], strides = [1, 1]} : vector<160x8xf32> to vector<1x8xf32>
    %c80 = arith.constant 80 : index
    %c0_39 = arith.constant 0 : index
    %60 = vector.load %arg16[%c80, %c0_39] : memref<160x24xf32, #tpu.memory_space<vmem>>, vector<1x8xf32>
    tpu.vector_store %arg16[%c80, %c0_39], %59 {strides = array<i32>} : memref<160x24xf32, #tpu.memory_space<vmem>>, vector<1x8xf32>,
    %61 = vector.extract_strided_slice %49 {offsets = [159, 0], sizes = [1, 8], strides = [1, 1]} : vector<160x8xf32> to vector<1x8xf32>
    %c159_40 = arith.constant 159 : index
    %c16_41 = arith.constant 16 : index
    %62 = vector.load %arg16[%c159_40, %c16_41] : memref<160x24xf32, #tpu.memory_space<vmem>>, vector<1x8xf32>
    tpu.vector_store %arg16[%c159_40, %c16_41], %61 {strides = array<i32>} : memref<160x24xf32, #tpu.memory_space<vmem>>, vector<1x8xf32>,
    %c0_42 = arith.constant 0 : index
    %c0_43 = arith.constant 0 : index
    %63 = vector.load %arg16[%c0_42, %c0_43] : memref<160x24xf32, #tpu.memory_space<vmem>>, vector<160x24xf32>
    %64 = arith.truncf %63 : vector<160x24xf32> to vector<160x24xbf16>
    %c0_44 = arith.constant 0 : index
    %c0_45 = arith.constant 0 : index
    %65 = vector.load %arg5[%c0_44, %c0_45] : memref<24x16xbf16, #tpu.memory_space<vmem>>, vector<24x16xbf16>
    %cst_46 = arith.constant dense<0.000000e+00> : vector<160x16xf32>
    %66 = tpu.matmul %64, %65, %cst_46 {dimension_numbers = #tpu.dot_dimension_numbers<[1], [0], [0], [1], [0, 0, 1, 1], [], []>} : vector<160x24xbf16>, vector<24x16xbf16>, vector<160x16xf32> -> vector<160x16xf32>
    %c0_47 = arith.constant 0 : index
    %c0_48 = arith.constant 0 : index
    %67 = vector.load %arg6[%c0_47, %c0_48] : memref<1x16xf32, #tpu.memory_space<vmem>>, vector<1x16xf32>
    %68 = vector.broadcast %67 : vector<1x16xf32> to vector<160x16xf32>
    %69 = arith.addf %66, %68 : vector<160x16xf32>
    %cst_49 = arith.constant 0.000000e+00 : f32
    %70 = vector.broadcast %cst_49 : f32 to vector<160x16xf32>
    %71 = arith.maximumf %69, %70 : vector<160x16xf32>
    %c0_50 = arith.constant 0 : index
    %c0_51 = arith.constant 0 : index
    %72 = vector.load %arg17[%c0_50, %c0_51] : memref<160x16xf32, #tpu.memory_space<vmem>>, vector<160x16xf32>
    tpu.vector_store %arg17[%c0_50, %c0_51], %71 {strides = array<i32>} : memref<160x16xf32, #tpu.memory_space<vmem>>, vector<160x16xf32>,
    %c0_52 = arith.constant 0 : index
    %c0_53 = arith.constant 0 : index
    %73 = tpu.strided_load %arg17[%c0_52, %c0_53] {strides = array<i32: 2, 1>} : memref<160x16xf32, #tpu.memory_space<vmem>>, vector<80x16xf32>
    %c1_54 = arith.constant 1 : index
    %c0_55 = arith.constant 0 : index
    %74 = tpu.strided_load %arg17[%c1_54, %c0_55] {strides = array<i32: 2, 1>} : memref<160x16xf32, #tpu.memory_space<vmem>>, vector<80x16xf32>
    %75 = arith.maximumf %73, %74 : vector<80x16xf32>
    %c0_56 = arith.constant 0 : index
    %c16_57 = arith.constant 16 : index
    %76 = vector.load %arg18[%c0_56, %c16_57] : memref<80x48xf32, #tpu.memory_space<vmem>>, vector<80x16xf32>
    tpu.vector_store %arg18[%c0_56, %c16_57], %75 {strides = array<i32>} : memref<80x48xf32, #tpu.memory_space<vmem>>, vector<80x16xf32>,
    %77 = vector.extract_strided_slice %75 {offsets = [0, 0], sizes = [79, 16], strides = [1, 1]} : vector<80x16xf32> to vector<79x16xf32>
    %c1_58 = arith.constant 1 : index
    %c0_59 = arith.constant 0 : index
    %78 = vector.load %arg18[%c1_58, %c0_59] : memref<80x48xf32, #tpu.memory_space<vmem>>, vector<79x16xf32>
    tpu.vector_store %arg18[%c1_58, %c0_59], %77 {strides = array<i32>} : memref<80x48xf32, #tpu.memory_space<vmem>>, vector<79x16xf32>,
    %79 = vector.extract_strided_slice %75 {offsets = [1, 0], sizes = [79, 16], strides = [1, 1]} : vector<80x16xf32> to vector<79x16xf32>
    %c0_60 = arith.constant 0 : index
    %c32 = arith.constant 32 : index
    %80 = vector.load %arg18[%c0_60, %c32] : memref<80x48xf32, #tpu.memory_space<vmem>>, vector<79x16xf32>
    tpu.vector_store %arg18[%c0_60, %c32], %79 {strides = array<i32>} : memref<80x48xf32, #tpu.memory_space<vmem>>, vector<79x16xf32>,
    %81 = vector.extract_strided_slice %75 {offsets = [0, 0], sizes = [1, 16], strides = [1, 1]} : vector<80x16xf32> to vector<1x16xf32>
    %c0_61 = arith.constant 0 : index
    %c0_62 = arith.constant 0 : index
    %82 = vector.load %arg18[%c0_61, %c0_62] : memref<80x48xf32, #tpu.memory_space<vmem>>, vector<1x16xf32>
    tpu.vector_store %arg18[%c0_61, %c0_62], %81 {strides = array<i32>} : memref<80x48xf32, #tpu.memory_space<vmem>>, vector<1x16xf32>,
    %83 = vector.extract_strided_slice %75 {offsets = [39, 0], sizes = [1, 16], strides = [1, 1]} : vector<80x16xf32> to vector<1x16xf32>
    %c39 = arith.constant 39 : index
    %c32_63 = arith.constant 32 : index
    %84 = vector.load %arg18[%c39, %c32_63] : memref<80x48xf32, #tpu.memory_space<vmem>>, vector<1x16xf32>
    tpu.vector_store %arg18[%c39, %c32_63], %83 {strides = array<i32>} : memref<80x48xf32, #tpu.memory_space<vmem>>, vector<1x16xf32>,
    %85 = vector.extract_strided_slice %75 {offsets = [40, 0], sizes = [1, 16], strides = [1, 1]} : vector<80x16xf32> to vector<1x16xf32>
    %c40 = arith.constant 40 : index
    %c0_64 = arith.constant 0 : index
    %86 = vector.load %arg18[%c40, %c0_64] : memref<80x48xf32, #tpu.memory_space<vmem>>, vector<1x16xf32>
    tpu.vector_store %arg18[%c40, %c0_64], %85 {strides = array<i32>} : memref<80x48xf32, #tpu.memory_space<vmem>>, vector<1x16xf32>,
    %87 = vector.extract_strided_slice %75 {offsets = [79, 0], sizes = [1, 16], strides = [1, 1]} : vector<80x16xf32> to vector<1x16xf32>
    %c79_65 = arith.constant 79 : index
    %c32_66 = arith.constant 32 : index
    %88 = vector.load %arg18[%c79_65, %c32_66] : memref<80x48xf32, #tpu.memory_space<vmem>>, vector<1x16xf32>
    tpu.vector_store %arg18[%c79_65, %c32_66], %87 {strides = array<i32>} : memref<80x48xf32, #tpu.memory_space<vmem>>, vector<1x16xf32>,
    %c0_67 = arith.constant 0 : index
    %c0_68 = arith.constant 0 : index
    %89 = vector.load %arg18[%c0_67, %c0_68] : memref<80x48xf32, #tpu.memory_space<vmem>>, vector<80x48xf32>
    %90 = arith.truncf %89 : vector<80x48xf32> to vector<80x48xbf16>
    %c0_69 = arith.constant 0 : index
    %c0_70 = arith.constant 0 : index
    %91 = vector.load %arg7[%c0_69, %c0_70] : memref<48x32xbf16, #tpu.memory_space<vmem>>, vector<48x32xbf16>
    %cst_71 = arith.constant dense<0.000000e+00> : vector<80x32xf32>
    %92 = tpu.matmul %90, %91, %cst_71 {dimension_numbers = #tpu.dot_dimension_numbers<[1], [0], [0], [1], [0, 0, 1, 1], [], []>} : vector<80x48xbf16>, vector<48x32xbf16>, vector<80x32xf32> -> vector<80x32xf32>
    %c0_72 = arith.constant 0 : index
    %c0_73 = arith.constant 0 : index
    %93 = vector.load %arg8[%c0_72, %c0_73] : memref<1x32xf32, #tpu.memory_space<vmem>>, vector<1x32xf32>
    %94 = vector.broadcast %93 : vector<1x32xf32> to vector<80x32xf32>
    %95 = arith.addf %92, %94 : vector<80x32xf32>
    %cst_74 = arith.constant 0.000000e+00 : f32
    %96 = vector.broadcast %cst_74 : f32 to vector<80x32xf32>
    %97 = arith.maximumf %95, %96 : vector<80x32xf32>
    %c0_75 = arith.constant 0 : index
    %c0_76 = arith.constant 0 : index
    %98 = vector.load %arg19[%c0_75, %c0_76] : memref<80x32xf32, #tpu.memory_space<vmem>>, vector<80x32xf32>
    tpu.vector_store %arg19[%c0_75, %c0_76], %97 {strides = array<i32>} : memref<80x32xf32, #tpu.memory_space<vmem>>, vector<80x32xf32>,
    %c0_77 = arith.constant 0 : index
    %c0_78 = arith.constant 0 : index
    %99 = tpu.strided_load %arg19[%c0_77, %c0_78] {strides = array<i32: 2, 1>} : memref<80x32xf32, #tpu.memory_space<vmem>>, vector<40x32xf32>
    %c1_79 = arith.constant 1 : index
    %c0_80 = arith.constant 0 : index
    %100 = tpu.strided_load %arg19[%c1_79, %c0_80] {strides = array<i32: 2, 1>} : memref<80x32xf32, #tpu.memory_space<vmem>>, vector<40x32xf32>
    %101 = arith.maximumf %99, %100 : vector<40x32xf32>
    %c0_81 = arith.constant 0 : index
    %c32_82 = arith.constant 32 : index
    %102 = vector.load %arg20[%c0_81, %c32_82] : memref<40x96xf32, #tpu.memory_space<vmem>>, vector<40x32xf32>
    tpu.vector_store %arg20[%c0_81, %c32_82], %101 {strides = array<i32>} : memref<40x96xf32, #tpu.memory_space<vmem>>, vector<40x32xf32>,
    %103 = vector.extract_strided_slice %101 {offsets = [0, 0], sizes = [39, 32], strides = [1, 1]} : vector<40x32xf32> to vector<39x32xf32>
    %c1_83 = arith.constant 1 : index
    %c0_84 = arith.constant 0 : index
    %104 = vector.load %arg20[%c1_83, %c0_84] : memref<40x96xf32, #tpu.memory_space<vmem>>, vector<39x32xf32>
    tpu.vector_store %arg20[%c1_83, %c0_84], %103 {strides = array<i32>} : memref<40x96xf32, #tpu.memory_space<vmem>>, vector<39x32xf32>,
    %105 = vector.extract_strided_slice %101 {offsets = [1, 0], sizes = [39, 32], strides = [1, 1]} : vector<40x32xf32> to vector<39x32xf32>
    %c0_85 = arith.constant 0 : index
    %c64 = arith.constant 64 : index
    %106 = vector.load %arg20[%c0_85, %c64] : memref<40x96xf32, #tpu.memory_space<vmem>>, vector<39x32xf32>
    tpu.vector_store %arg20[%c0_85, %c64], %105 {strides = array<i32>} : memref<40x96xf32, #tpu.memory_space<vmem>>, vector<39x32xf32>,
    %107 = vector.extract_strided_slice %101 {offsets = [0, 0], sizes = [1, 32], strides = [1, 1]} : vector<40x32xf32> to vector<1x32xf32>
    %c0_86 = arith.constant 0 : index
    %c0_87 = arith.constant 0 : index
    %108 = vector.load %arg20[%c0_86, %c0_87] : memref<40x96xf32, #tpu.memory_space<vmem>>, vector<1x32xf32>
    tpu.vector_store %arg20[%c0_86, %c0_87], %107 {strides = array<i32>} : memref<40x96xf32, #tpu.memory_space<vmem>>, vector<1x32xf32>,
    %109 = vector.extract_strided_slice %101 {offsets = [19, 0], sizes = [1, 32], strides = [1, 1]} : vector<40x32xf32> to vector<1x32xf32>
    %c19 = arith.constant 19 : index
    %c64_88 = arith.constant 64 : index
    %110 = vector.load %arg20[%c19, %c64_88] : memref<40x96xf32, #tpu.memory_space<vmem>>, vector<1x32xf32>
    tpu.vector_store %arg20[%c19, %c64_88], %109 {strides = array<i32>} : memref<40x96xf32, #tpu.memory_space<vmem>>, vector<1x32xf32>,
    %111 = vector.extract_strided_slice %101 {offsets = [20, 0], sizes = [1, 32], strides = [1, 1]} : vector<40x32xf32> to vector<1x32xf32>
    %c20 = arith.constant 20 : index
    %c0_89 = arith.constant 0 : index
    %112 = vector.load %arg20[%c20, %c0_89] : memref<40x96xf32, #tpu.memory_space<vmem>>, vector<1x32xf32>
    tpu.vector_store %arg20[%c20, %c0_89], %111 {strides = array<i32>} : memref<40x96xf32, #tpu.memory_space<vmem>>, vector<1x32xf32>,
    %113 = vector.extract_strided_slice %101 {offsets = [39, 0], sizes = [1, 32], strides = [1, 1]} : vector<40x32xf32> to vector<1x32xf32>
    %c39_90 = arith.constant 39 : index
    %c64_91 = arith.constant 64 : index
    %114 = vector.load %arg20[%c39_90, %c64_91] : memref<40x96xf32, #tpu.memory_space<vmem>>, vector<1x32xf32>
    tpu.vector_store %arg20[%c39_90, %c64_91], %113 {strides = array<i32>} : memref<40x96xf32, #tpu.memory_space<vmem>>, vector<1x32xf32>,
    %c0_92 = arith.constant 0 : index
    %c0_93 = arith.constant 0 : index
    %115 = vector.load %arg20[%c0_92, %c0_93] : memref<40x96xf32, #tpu.memory_space<vmem>>, vector<40x96xf32>
    %116 = arith.truncf %115 : vector<40x96xf32> to vector<40x96xbf16>
    %c0_94 = arith.constant 0 : index
    %c0_95 = arith.constant 0 : index
    %117 = vector.load %arg9[%c0_94, %c0_95] : memref<96x64xbf16, #tpu.memory_space<vmem>>, vector<96x64xbf16>
    %cst_96 = arith.constant dense<0.000000e+00> : vector<40x64xf32>
    %118 = tpu.matmul %116, %117, %cst_96 {dimension_numbers = #tpu.dot_dimension_numbers<[1], [0], [0], [1], [0, 0, 1, 1], [], []>} : vector<40x96xbf16>, vector<96x64xbf16>, vector<40x64xf32> -> vector<40x64xf32>
    %c0_97 = arith.constant 0 : index
    %c0_98 = arith.constant 0 : index
    %119 = vector.load %arg10[%c0_97, %c0_98] : memref<1x64xf32, #tpu.memory_space<vmem>>, vector<1x64xf32>
    %120 = vector.broadcast %119 : vector<1x64xf32> to vector<40x64xf32>
    %121 = arith.addf %118, %120 : vector<40x64xf32>
    %cst_99 = arith.constant 0.000000e+00 : f32
    %122 = vector.broadcast %cst_99 : f32 to vector<40x64xf32>
    %123 = arith.maximumf %121, %122 : vector<40x64xf32>
    %c0_100 = arith.constant 0 : index
    %c0_101 = arith.constant 0 : index
    %124 = vector.load %arg21[%c0_100, %c0_101] : memref<40x64xf32, #tpu.memory_space<vmem>>, vector<40x64xf32>
    tpu.vector_store %arg21[%c0_100, %c0_101], %123 {strides = array<i32>} : memref<40x64xf32, #tpu.memory_space<vmem>>, vector<40x64xf32>,
    %c0_102 = arith.constant 0 : index
    %c0_103 = arith.constant 0 : index
    %125 = tpu.strided_load %arg21[%c0_102, %c0_103] {strides = array<i32: 2, 1>} : memref<40x64xf32, #tpu.memory_space<vmem>>, vector<20x64xf32>
    %c1_104 = arith.constant 1 : index
    %c0_105 = arith.constant 0 : index
    %126 = tpu.strided_load %arg21[%c1_104, %c0_105] {strides = array<i32: 2, 1>} : memref<40x64xf32, #tpu.memory_space<vmem>>, vector<20x64xf32>
    %127 = arith.maximumf %125, %126 : vector<20x64xf32>
    %c0_106 = arith.constant 0 : index
    %c0_107 = arith.constant 0 : index
    %128 = vector.load %arg22[%c0_106, %c0_107] : memref<20x64xf32, #tpu.memory_space<vmem>>, vector<20x64xf32>
    tpu.vector_store %arg22[%c0_106, %c0_107], %127 {strides = array<i32>} : memref<20x64xf32, #tpu.memory_space<vmem>>, vector<20x64xf32>,
    %cst_108 = arith.constant 0.000000e+00 : f32
    %129 = vector.broadcast %cst_108 : f32 to vector<2x512xf32>
    %c0_109 = arith.constant 0 : index
    %c0_110 = arith.constant 0 : index
    %130 = tpu.strided_load %arg22[%c0_109, %c0_110] {strides = array<i32: 10, 1>} : memref<20x64xf32, #tpu.memory_space<vmem>>, vector<2x64xf32>
    %131 = arith.truncf %130 : vector<2x64xf32> to vector<2x64xbf16>
    %c0_111 = arith.constant 0 : index
    %c0_112 = arith.constant 0 : index
    %c0_113 = arith.constant 0 : index
    %132 = vector.load %arg11[%c0_111, %c0_112, %c0_113] : memref<10x64x512xbf16, #tpu.memory_space<vmem>>, vector<1x64x512xbf16>
    %133 = vector.shape_cast %132 : vector<1x64x512xbf16> to vector<64x512xbf16>
    %cst_114 = arith.constant dense<0.000000e+00> : vector<2x512xf32>
    %134 = tpu.matmul %131, %133, %cst_114 {dimension_numbers = #tpu.dot_dimension_numbers<[1], [0], [0], [1], [0, 0, 1, 1], [], []>} : vector<2x64xbf16>, vector<64x512xbf16>, vector<2x512xf32> -> vector<2x512xf32>
    %135 = arith.addf %129, %134 : vector<2x512xf32>
    %c1_115 = arith.constant 1 : index
    %c0_116 = arith.constant 0 : index
    %136 = tpu.strided_load %arg22[%c1_115, %c0_116] {strides = array<i32: 10, 1>} : memref<20x64xf32, #tpu.memory_space<vmem>>, vector<2x64xf32>
    %137 = arith.truncf %136 : vector<2x64xf32> to vector<2x64xbf16>
    %c1_117 = arith.constant 1 : index
    %c0_118 = arith.constant 0 : index
    %c0_119 = arith.constant 0 : index
    %138 = vector.load %arg11[%c1_117, %c0_118, %c0_119] : memref<10x64x512xbf16, #tpu.memory_space<vmem>>, vector<1x64x512xbf16>
    %139 = vector.shape_cast %138 : vector<1x64x512xbf16> to vector<64x512xbf16>
    %cst_120 = arith.constant dense<0.000000e+00> : vector<2x512xf32>
    %140 = tpu.matmul %137, %139, %cst_120 {dimension_numbers = #tpu.dot_dimension_numbers<[1], [0], [0], [1], [0, 0, 1, 1], [], []>} : vector<2x64xbf16>, vector<64x512xbf16>, vector<2x512xf32> -> vector<2x512xf32>
    %141 = arith.addf %135, %140 : vector<2x512xf32>
    %c2 = arith.constant 2 : index
    %c0_121 = arith.constant 0 : index
    %142 = tpu.strided_load %arg22[%c2, %c0_121] {strides = array<i32: 10, 1>} : memref<20x64xf32, #tpu.memory_space<vmem>>, vector<2x64xf32>
    %143 = arith.truncf %142 : vector<2x64xf32> to vector<2x64xbf16>
    %c2_122 = arith.constant 2 : index
    %c0_123 = arith.constant 0 : index
    %c0_124 = arith.constant 0 : index
    %144 = vector.load %arg11[%c2_122, %c0_123, %c0_124] : memref<10x64x512xbf16, #tpu.memory_space<vmem>>, vector<1x64x512xbf16>
    %145 = vector.shape_cast %144 : vector<1x64x512xbf16> to vector<64x512xbf16>
    %cst_125 = arith.constant dense<0.000000e+00> : vector<2x512xf32>
    %146 = tpu.matmul %143, %145, %cst_125 {dimension_numbers = #tpu.dot_dimension_numbers<[1], [0], [0], [1], [0, 0, 1, 1], [], []>} : vector<2x64xbf16>, vector<64x512xbf16>, vector<2x512xf32> -> vector<2x512xf32>
    %147 = arith.addf %141, %146 : vector<2x512xf32>
    %c3 = arith.constant 3 : index
    %c0_126 = arith.constant 0 : index
    %148 = tpu.strided_load %arg22[%c3, %c0_126] {strides = array<i32: 10, 1>} : memref<20x64xf32, #tpu.memory_space<vmem>>, vector<2x64xf32>
    %149 = arith.truncf %148 : vector<2x64xf32> to vector<2x64xbf16>
    %c3_127 = arith.constant 3 : index
    %c0_128 = arith.constant 0 : index
    %c0_129 = arith.constant 0 : index
    %150 = vector.load %arg11[%c3_127, %c0_128, %c0_129] : memref<10x64x512xbf16, #tpu.memory_space<vmem>>, vector<1x64x512xbf16>
    %151 = vector.shape_cast %150 : vector<1x64x512xbf16> to vector<64x512xbf16>
    %cst_130 = arith.constant dense<0.000000e+00> : vector<2x512xf32>
    %152 = tpu.matmul %149, %151, %cst_130 {dimension_numbers = #tpu.dot_dimension_numbers<[1], [0], [0], [1], [0, 0, 1, 1], [], []>} : vector<2x64xbf16>, vector<64x512xbf16>, vector<2x512xf32> -> vector<2x512xf32>
    %153 = arith.addf %147, %152 : vector<2x512xf32>
    %c4_131 = arith.constant 4 : index
    %c0_132 = arith.constant 0 : index
    %154 = tpu.strided_load %arg22[%c4_131, %c0_132] {strides = array<i32: 10, 1>} : memref<20x64xf32, #tpu.memory_space<vmem>>, vector<2x64xf32>
    %155 = arith.truncf %154 : vector<2x64xf32> to vector<2x64xbf16>
    %c4_133 = arith.constant 4 : index
    %c0_134 = arith.constant 0 : index
    %c0_135 = arith.constant 0 : index
    %156 = vector.load %arg11[%c4_133, %c0_134, %c0_135] : memref<10x64x512xbf16, #tpu.memory_space<vmem>>, vector<1x64x512xbf16>
    %157 = vector.shape_cast %156 : vector<1x64x512xbf16> to vector<64x512xbf16>
    %cst_136 = arith.constant dense<0.000000e+00> : vector<2x512xf32>
    %158 = tpu.matmul %155, %157, %cst_136 {dimension_numbers = #tpu.dot_dimension_numbers<[1], [0], [0], [1], [0, 0, 1, 1], [], []>} : vector<2x64xbf16>, vector<64x512xbf16>, vector<2x512xf32> -> vector<2x512xf32>
    %159 = arith.addf %153, %158 : vector<2x512xf32>
    %c5 = arith.constant 5 : index
    %c0_137 = arith.constant 0 : index
    %160 = tpu.strided_load %arg22[%c5, %c0_137] {strides = array<i32: 10, 1>} : memref<20x64xf32, #tpu.memory_space<vmem>>, vector<2x64xf32>
    %161 = arith.truncf %160 : vector<2x64xf32> to vector<2x64xbf16>
    %c5_138 = arith.constant 5 : index
    %c0_139 = arith.constant 0 : index
    %c0_140 = arith.constant 0 : index
    %162 = vector.load %arg11[%c5_138, %c0_139, %c0_140] : memref<10x64x512xbf16, #tpu.memory_space<vmem>>, vector<1x64x512xbf16>
    %163 = vector.shape_cast %162 : vector<1x64x512xbf16> to vector<64x512xbf16>
    %cst_141 = arith.constant dense<0.000000e+00> : vector<2x512xf32>
    %164 = tpu.matmul %161, %163, %cst_141 {dimension_numbers = #tpu.dot_dimension_numbers<[1], [0], [0], [1], [0, 0, 1, 1], [], []>} : vector<2x64xbf16>, vector<64x512xbf16>, vector<2x512xf32> -> vector<2x512xf32>
    %165 = arith.addf %159, %164 : vector<2x512xf32>
    %c6 = arith.constant 6 : index
    %c0_142 = arith.constant 0 : index
    %166 = tpu.strided_load %arg22[%c6, %c0_142] {strides = array<i32: 10, 1>} : memref<20x64xf32, #tpu.memory_space<vmem>>, vector<2x64xf32>
    %167 = arith.truncf %166 : vector<2x64xf32> to vector<2x64xbf16>
    %c6_143 = arith.constant 6 : index
    %c0_144 = arith.constant 0 : index
    %c0_145 = arith.constant 0 : index
    %168 = vector.load %arg11[%c6_143, %c0_144, %c0_145] : memref<10x64x512xbf16, #tpu.memory_space<vmem>>, vector<1x64x512xbf16>
    %169 = vector.shape_cast %168 : vector<1x64x512xbf16> to vector<64x512xbf16>
    %cst_146 = arith.constant dense<0.000000e+00> : vector<2x512xf32>
    %170 = tpu.matmul %167, %169, %cst_146 {dimension_numbers = #tpu.dot_dimension_numbers<[1], [0], [0], [1], [0, 0, 1, 1], [], []>} : vector<2x64xbf16>, vector<64x512xbf16>, vector<2x512xf32> -> vector<2x512xf32>
    %171 = arith.addf %165, %170 : vector<2x512xf32>
    %c7 = arith.constant 7 : index
    %c0_147 = arith.constant 0 : index
    %172 = tpu.strided_load %arg22[%c7, %c0_147] {strides = array<i32: 10, 1>} : memref<20x64xf32, #tpu.memory_space<vmem>>, vector<2x64xf32>
    %173 = arith.truncf %172 : vector<2x64xf32> to vector<2x64xbf16>
    %c7_148 = arith.constant 7 : index
    %c0_149 = arith.constant 0 : index
    %c0_150 = arith.constant 0 : index
    %174 = vector.load %arg11[%c7_148, %c0_149, %c0_150] : memref<10x64x512xbf16, #tpu.memory_space<vmem>>, vector<1x64x512xbf16>
    %175 = vector.shape_cast %174 : vector<1x64x512xbf16> to vector<64x512xbf16>
    %cst_151 = arith.constant dense<0.000000e+00> : vector<2x512xf32>
    %176 = tpu.matmul %173, %175, %cst_151 {dimension_numbers = #tpu.dot_dimension_numbers<[1], [0], [0], [1], [0, 0, 1, 1], [], []>} : vector<2x64xbf16>, vector<64x512xbf16>, vector<2x512xf32> -> vector<2x512xf32>
    %177 = arith.addf %171, %176 : vector<2x512xf32>
    %c8_152 = arith.constant 8 : index
    %c0_153 = arith.constant 0 : index
    %178 = tpu.strided_load %arg22[%c8_152, %c0_153] {strides = array<i32: 10, 1>} : memref<20x64xf32, #tpu.memory_space<vmem>>, vector<2x64xf32>
    %179 = arith.truncf %178 : vector<2x64xf32> to vector<2x64xbf16>
    %c8_154 = arith.constant 8 : index
    %c0_155 = arith.constant 0 : index
    %c0_156 = arith.constant 0 : index
    %180 = vector.load %arg11[%c8_154, %c0_155, %c0_156] : memref<10x64x512xbf16, #tpu.memory_space<vmem>>, vector<1x64x512xbf16>
    %181 = vector.shape_cast %180 : vector<1x64x512xbf16> to vector<64x512xbf16>
    %cst_157 = arith.constant dense<0.000000e+00> : vector<2x512xf32>
    %182 = tpu.matmul %179, %181, %cst_157 {dimension_numbers = #tpu.dot_dimension_numbers<[1], [0], [0], [1], [0, 0, 1, 1], [], []>} : vector<2x64xbf16>, vector<64x512xbf16>, vector<2x512xf32> -> vector<2x512xf32>
    %183 = arith.addf %177, %182 : vector<2x512xf32>
    %c9 = arith.constant 9 : index
    %c0_158 = arith.constant 0 : index
    %184 = tpu.strided_load %arg22[%c9, %c0_158] {strides = array<i32: 10, 1>} : memref<20x64xf32, #tpu.memory_space<vmem>>, vector<2x64xf32>
    %185 = arith.truncf %184 : vector<2x64xf32> to vector<2x64xbf16>
    %c9_159 = arith.constant 9 : index
    %c0_160 = arith.constant 0 : index
    %c0_161 = arith.constant 0 : index
    %186 = vector.load %arg11[%c9_159, %c0_160, %c0_161] : memref<10x64x512xbf16, #tpu.memory_space<vmem>>, vector<1x64x512xbf16>
    %187 = vector.shape_cast %186 : vector<1x64x512xbf16> to vector<64x512xbf16>
    %cst_162 = arith.constant dense<0.000000e+00> : vector<2x512xf32>
    %188 = tpu.matmul %185, %187, %cst_162 {dimension_numbers = #tpu.dot_dimension_numbers<[1], [0], [0], [1], [0, 0, 1, 1], [], []>} : vector<2x64xbf16>, vector<64x512xbf16>, vector<2x512xf32> -> vector<2x512xf32>
    %189 = arith.addf %183, %188 : vector<2x512xf32>
    %c0_163 = arith.constant 0 : index
    %c0_164 = arith.constant 0 : index
    %190 = vector.load %arg12[%c0_163, %c0_164] : memref<1x512xf32, #tpu.memory_space<vmem>>, vector<1x512xf32>
    %191 = vector.broadcast %190 : vector<1x512xf32> to vector<2x512xf32>
    %192 = arith.addf %189, %191 : vector<2x512xf32>
    %c0_165 = arith.constant 0 : index
    %c0_166 = arith.constant 0 : index
    %193 = vector.load %arg13[%c0_165, %c0_166] : memref<2x512xf32, #tpu.memory_space<vmem>>, vector<2x512xf32>
    tpu.vector_store %arg13[%c0_165, %c0_166], %192 {strides = array<i32>} : memref<2x512xf32, #tpu.memory_space<vmem>>, vector<2x512xf32>,
    return
  }
}

</mosaic_0001>

<llo_original>
// kernel: cnn_forward.1
$region0: #{cnn_forward.1}
  #allocation0 [shape = 'u32[]', space=smem, size = 0x4, offset = 0x4, fixed_abs, tag = 'smem constant byte address 0x4 - core index']
  #allocation1 [shape = 'u32[72,128]{1,0:T(1,128)}', space=vmem, size = 0x9000, scoped, tag = 'internal scratch']
  #allocation2 [shape = 'f32[320,12]{1,0:T(8,128)}', space=vmem, size = 0x28000, scoped, tag = 'scratch operand']
  #allocation3 [shape = 'f32[320,8]{1,0:T(8,128)}', space=vmem, size = 0x28000, scoped, tag = 'scratch operand']
  #allocation4 [shape = 'f32[160,24]{1,0:T(8,128)}', space=vmem, size = 0x14000, scoped, tag = 'scratch operand']
  #allocation5 [shape = 'f32[160,16]{1,0:T(8,128)}', space=vmem, size = 0x14000, scoped, tag = 'scratch operand']
  #allocation6 [shape = 'f32[80,48]{1,0:T(8,128)}', space=vmem, size = 0xa000, scoped, tag = 'scratch operand']
  #allocation7 [shape = 'f32[80,32]{1,0:T(8,128)}', space=vmem, size = 0xa000, scoped, tag = 'scratch operand']
  #allocation8 [shape = 'f32[40,96]{1,0:T(8,128)}', space=vmem, size = 0x5000, scoped, tag = 'scratch operand']
  #allocation9 [shape = 'f32[40,64]{1,0:T(8,128)}', space=vmem, size = 0x5000, scoped, tag = 'scratch operand']
  #allocation10 [shape = 'f32[20,64]{1,0:T(8,128)}', space=vmem, size = 0x3000, scoped, tag = 'scratch operand']
  %s0 = inlined_call_operand.vmem [shape: f32[320,4], index: 0, kind: input, shape index: {}]
  %s1 = inlined_call_operand.vmem [shape: f32[1,4], index: 1, kind: input, shape index: {}]
  %s2 = inlined_call_operand.vmem [shape: f32[1,4], index: 2, kind: input, shape index: {}]
  %s3 = inlined_call_operand.vmem [shape: bf16[12,8], index: 3, kind: input, shape index: {}]
  %s4 = inlined_call_operand.vmem [shape: f32[1,8], index: 4, kind: input, shape index: {}]
  %s5 = inlined_call_operand.vmem [shape: bf16[24,16], index: 5, kind: input, shape index: {}]
  %s6 = inlined_call_operand.vmem [shape: f32[1,16], index: 6, kind: input, shape index: {}]
  %s7 = inlined_call_operand.vmem [shape: bf16[48,32], index: 7, kind: input, shape index: {}]
  %s8 = inlined_call_operand.vmem [shape: f32[1,32], index: 8, kind: input, shape index: {}]
  %s9 = inlined_call_operand.vmem [shape: bf16[96,64], index: 9, kind: input, shape index: {}]
  %s10 = inlined_call_operand.vmem [shape: f32[1,64], index: 10, kind: input, shape index: {}]
  %s11 = inlined_call_operand.vmem [shape: bf16[10,64,512], index: 11, kind: input, shape index: {}]
  %s12 = inlined_call_operand.vmem [shape: f32[1,512], index: 12, kind: input, shape index: {}]
  %s13 = inlined_call_operand.hbm [shape: f32[2,512], index: 13, kind: output, shape index: {}]
  %s14 = sld [smem:[#allocation0]]
  $region62: #{cnn_forward.1} parent=0
    _
  %s16 = ssub.s32 1, %s14
  %s17 = scalar_select 0, %s16, %s14
  $region1: #{cnn_forward.1} parent=0
    #allocation11 [shape = 'u8[4096]{0}', space=vmem, size = 0x1000, scoped, tag = 'output window, operand 0, single buffered']
    #allocation12 [shape = 's32[1]{0}', space=sflag, size = 0x4, scoped, tag = 'scoped memory for cnn_forward.1']
    %18 = vsyncpa [#allocation12], 0
    // Predicated region
    $region2: #{cnn_forward.1} parent=1 // pred_check
      _
    $region3: #{cnn_forward.1} parent=1 // pred_check_branch
      %20 = sbr.rel (0) target = $region5
    $region4: #{cnn_forward.1} parent=1 // pred_region
      _
    $region5: #{cnn_forward.1} parent=1 // pred_fallthru
      _
    // Predicated region
    $region6: #{cnn_forward.1} parent=1 // pred_check
      _
    $region7: #{cnn_forward.1} parent=1 // pred_check_branch
      %22 = sbr.rel (0) target = $region9
    $region8: #{cnn_forward.1} parent=1 // pred_region
      _
    $region9: #{cnn_forward.1} parent=1 // pred_fallthru
      _
    // Predicated region
    $region10: #{cnn_forward.1} parent=1 // pred_check
      _
    $region11: #{cnn_forward.1} parent=1 // pred_check_branch
      %24 = sbr.rel (0) target = $region13
    $region12: #{cnn_forward.1} parent=1 // pred_region
      _
    $region13: #{cnn_forward.1} parent=1 // pred_fallthru
      _
    // Predicated region
    $region14: #{cnn_forward.1} parent=1 // pred_check
      _
    $region15: #{cnn_forward.1} parent=1 // pred_check_branch
      %26 = sbr.rel (0) target = $region17
    $region16: #{cnn_forward.1} parent=1 // pred_region
      _
    $region17: #{cnn_forward.1} parent=1 // pred_fallthru
      _
    // Predicated region
    $region18: #{cnn_forward.1} parent=1 // pred_check
      _
    $region19: #{cnn_forward.1} parent=1 // pred_check_branch
      %28 = sbr.rel (0) target = $region21
    $region20: #{cnn_forward.1} parent=1 // pred_region
      _
    $region21: #{cnn_forward.1} parent=1 // pred_fallthru
      _
    // Predicated region
    $region22: #{cnn_forward.1} parent=1 // pred_check
      _
    $region23: #{cnn_forward.1} parent=1 // pred_check_branch
      %30 = sbr.rel (0) target = $region25
    $region24: #{cnn_forward.1} parent=1 // pred_region
      _
    $region25: #{cnn_forward.1} parent=1 // pred_fallthru
      _
    // Predicated region
    $region26: #{cnn_forward.1} parent=1 // pred_check
      _
    $region27: #{cnn_forward.1} parent=1 // pred_check_branch
      %32 = sbr.rel (0) target = $region29
    $region28: #{cnn_forward.1} parent=1 // pred_region
      _
    $region29: #{cnn_forward.1} parent=1 // pred_fallthru
      _
    // Predicated region
    $region30: #{cnn_forward.1} parent=1 // pred_check
      _
    $region31: #{cnn_forward.1} parent=1 // pred_check_branch
      %34 = sbr.rel (0) target = $region33
    $region32: #{cnn_forward.1} parent=1 // pred_region
      _
    $region33: #{cnn_forward.1} parent=1 // pred_fallthru
      _
    // Predicated region
    $region34: #{cnn_forward.1} parent=1 // pred_check
      _
    $region35: #{cnn_forward.1} parent=1 // pred_check_branch
      %36 = sbr.rel (0) target = $region37
    $region36: #{cnn_forward.1} parent=1 // pred_region
      _
    $region37: #{cnn_forward.1} parent=1 // pred_fallthru
      _
    // Predicated region
    $region38: #{cnn_forward.1} parent=1 // pred_check
      _
    $region39: #{cnn_forward.1} parent=1 // pred_check_branch
      %38 = sbr.rel (0) target = $region41
    $region40: #{cnn_forward.1} parent=1 // pred_region
      _
    $region41: #{cnn_forward.1} parent=1 // pred_fallthru
      _
    // Predicated region
    $region42: #{cnn_forward.1} parent=1 // pred_check
      _
    $region43: #{cnn_forward.1} parent=1 // pred_check_branch
      %40 = sbr.rel (0) target = $region45
    $region44: #{cnn_forward.1} parent=1 // pred_region
      _
    $region45: #{cnn_forward.1} parent=1 // pred_fallthru
      _
    // Predicated region
    $region46: #{cnn_forward.1} parent=1 // pred_check
      _
    $region47: #{cnn_forward.1} parent=1 // pred_check_branch
      %42 = sbr.rel (0) target = $region49
    $region48: #{cnn_forward.1} parent=1 // pred_region
      _
    $region49: #{cnn_forward.1} parent=1 // pred_fallthru
      _
    // Predicated region
    $region50: #{cnn_forward.1} parent=1 // pred_check
      _
    $region51: #{cnn_forward.1} parent=1 // pred_check_branch
      %44 = sbr.rel (0) target = $region53
    $region52: #{cnn_forward.1} parent=1 // pred_region
      _
    $region53: #{cnn_forward.1} parent=1 // pred_fallthru
      _
    %v46 = vld [vmem:[%s0] sm:$0xff]
    %v47 = vld [vmem:[%s0 + $0x8] sm:$0xff]
    %v48 = vld [vmem:[%s0 + $0x10] sm:$0xff]
    %v49 = vld [vmem:[%s0 + $0x18] sm:$0xff]
    %v50 = vld [vmem:[%s0 + $0x20] sm:$0xff]
    %v51 = vld [vmem:[%s0 + $0x28] sm:$0xff]
    %v52 = vld [vmem:[%s0 + $0x30] sm:$0xff]
    %v53 = vld [vmem:[%s0 + $0x38] sm:$0xff]
    %v54 = vld [vmem:[%s0 + $0x40] sm:$0xff]
    %v55 = vld [vmem:[%s0 + $0x48] sm:$0xff]
    %v56 = vld [vmem:[%s0 + $0x50] sm:$0xff]
    %v57 = vld [vmem:[%s0 + $0x58] sm:$0xff]
    %v58 = vld [vmem:[%s0 + $0x60] sm:$0xff]
    %v59 = vld [vmem:[%s0 + $0x68] sm:$0xff]
    %v60 = vld [vmem:[%s0 + $0x70] sm:$0xff]
    %v61 = vld [vmem:[%s0 + $0x78] sm:$0xff]
    %v62 = vld [vmem:[%s0 + $0x80] sm:$0xff]
    %v63 = vld [vmem:[%s0 + $0x88] sm:$0xff]
    %v64 = vld [vmem:[%s0 + $0x90] sm:$0xff]
    %v65 = vld [vmem:[%s0 + $0x98] sm:$0xff]
    %v66 = vld [vmem:[%s0 + $0xa0] sm:$0xff]
    %v67 = vld [vmem:[%s0 + $0xa8] sm:$0xff]
    %v68 = vld [vmem:[%s0 + $0xb0] sm:$0xff]
    %v69 = vld [vmem:[%s0 + $0xb8] sm:$0xff]
    %v70 = vld [vmem:[%s0 + $0xc0] sm:$0xff]
    %v71 = vld [vmem:[%s0 + $0xc8] sm:$0xff]
    %v72 = vld [vmem:[%s0 + $0xd0] sm:$0xff]
    %v73 = vld [vmem:[%s0 + $0xd8] sm:$0xff]
    %v74 = vld [vmem:[%s0 + $0xe0] sm:$0xff]
    %v75 = vld [vmem:[%s0 + $0xe8] sm:$0xff]
    %v76 = vld [vmem:[%s0 + $0xf0] sm:$0xff]
    %v77 = vld [vmem:[%s0 + $0xf8] sm:$0xff]
    %v78 = vld [vmem:[%s0 + $0x100] sm:$0xff]
    %v79 = vld [vmem:[%s0 + $0x108] sm:$0xff]
    %v80 = vld [vmem:[%s0 + $0x110] sm:$0xff]
    %v81 = vld [vmem:[%s0 + $0x118] sm:$0xff]
    %v82 = vld [vmem:[%s0 + $0x120] sm:$0xff]
    %v83 = vld [vmem:[%s0 + $0x128] sm:$0xff]
    %v84 = vld [vmem:[%s0 + $0x130] sm:$0xff]
    %v85 = vld [vmem:[%s0 + $0x138] sm:$0xff]
    %vm86 = vcmask 31744
    %v87 = vsel %vm86, %v46, 0.0
    %v88 = vsel %vm86, %v47, 0.0
    %v89 = vadd.f32 %v87, %v88
    %v90 = vsel %vm86, %v48, 0.0
    %v91 = vadd.f32 %v89, %v90
    %v92 = vsel %vm86, %v49, 0.0
    %v93 = vadd.f32 %v91, %v92
    %v94 = vsel %vm86, %v50, 0.0
    %v95 = vadd.f32 %v93, %v94
    %v96 = vsel %vm86, %v51, 0.0
    %v97 = vadd.f32 %v95, %v96
    %v98 = vsel %vm86, %v52, 0.0
    %v99 = vadd.f32 %v97, %v98
    %v100 = vsel %vm86, %v53, 0.0
    %v101 = vadd.f32 %v99, %v100
    %v102 = vsel %vm86, %v54, 0.0
    %v103 = vadd.f32 %v101, %v102
    %v104 = vsel %vm86, %v55, 0.0
    %v105 = vadd.f32 %v103, %v104
    %v106 = vsel %vm86, %v56, 0.0
    %v107 = vadd.f32 %v105, %v106
    %v108 = vsel %vm86, %v57, 0.0
    %v109 = vadd.f32 %v107, %v108
    %v110 = vsel %vm86, %v58, 0.0
    %v111 = vadd.f32 %v109, %v110
    %v112 = vsel %vm86, %v59, 0.0
    %v113 = vadd.f32 %v111, %v112
    %v114 = vsel %vm86, %v60, 0.0
    %v115 = vadd.f32 %v113, %v114
    %v116 = vsel %vm86, %v61, 0.0
    %v117 = vadd.f32 %v115, %v116
    %v118 = vsel %vm86, %v62, 0.0
    %v119 = vadd.f32 %v117, %v118
    %v120 = vsel %vm86, %v63, 0.0
    %v121 = vadd.f32 %v119, %v120
    %v122 = vsel %vm86, %v64, 0.0
    %v123 = vadd.f32 %v121, %v122
    %v124 = vsel %vm86, %v65, 0.0
    %v125 = vadd.f32 %v123, %v124
    %v126 = vsel %vm86, %v66, 0.0
    %v127 = vadd.f32 %v125, %v126
    %v128 = vsel %vm86, %v67, 0.0
    %v129 = vadd.f32 %v127, %v128
    %v130 = vsel %vm86, %v68, 0.0
    %v131 = vadd.f32 %v129, %v130
    %v132 = vsel %vm86, %v69, 0.0
    %v133 = vadd.f32 %v131, %v132
    %v134 = vsel %vm86, %v70, 0.0
    %v135 = vadd.f32 %v133, %v134
    %v136 = vsel %vm86, %v71, 0.0
    %v137 = vadd.f32 %v135, %v136
    %v138 = vsel %vm86, %v72, 0.0
    %v139 = vadd.f32 %v137, %v138
    %v140 = vsel %vm86, %v73, 0.0
    %v141 = vadd.f32 %v139, %v140
    %v142 = vsel %vm86, %v74, 0.0
    %v143 = vadd.f32 %v141, %v142
    %v144 = vsel %vm86, %v75, 0.0
    %v145 = vadd.f32 %v143, %v144
    %v146 = vsel %vm86, %v76, 0.0
    %v147 = vadd.f32 %v145, %v146
    %v148 = vsel %vm86, %v77, 0.0
    %v149 = vadd.f32 %v147, %v148
    %v150 = vsel %vm86, %v78, 0.0
    %v151 = vadd.f32 %v149, %v150
    %v152 = vsel %vm86, %v79, 0.0
    %v153 = vadd.f32 %v151, %v152
    %v154 = vsel %vm86, %v80, 0.0
    %v155 = vadd.f32 %v153, %v154
    %v156 = vsel %vm86, %v81, 0.0
    %v157 = vadd.f32 %v155, %v156
    %v158 = vsel %vm86, %v82, 0.0
    %v159 = vadd.f32 %v157, %v158
    %v160 = vsel %vm86, %v83, 0.0
    %v161 = vadd.f32 %v159, %v160
    %v162 = vsel %vm86, %v84, 0.0
    %v163 = vadd.f32 %v161, %v162
    %v164 = vsel %vm86, %v85, 0.0
    %v165 = vadd.f32 %v163, %v164
    %v166 = vrot.slane %v165, 4
    %v167 = vadd.f32 %v165, %v166
    %v168 = vrot.slane %v167, 2
    %v169 = vadd.f32 %v167, %v168
    %v170 = vrot.slane %v169, 1
    %v171 = vadd.f32 %v169, %v170
    %v172 = vmul.f32 %v171, 0.003125
    %v173 = vmul.f32 %v46, %v46
    %v174 = vmul.f32 %v47, %v47
    %v175 = vmul.f32 %v48, %v48
    %v176 = vmul.f32 %v49, %v49
    %v177 = vmul.f32 %v50, %v50
    %v178 = vmul.f32 %v51, %v51
    %v179 = vmul.f32 %v52, %v52
    %v180 = vmul.f32 %v53, %v53
    %v181 = vmul.f32 %v54, %v54
    %v182 = vmul.f32 %v55, %v55
    %v183 = vmul.f32 %v56, %v56
    %v184 = vmul.f32 %v57, %v57
    %v185 = vmul.f32 %v58, %v58
    %v186 = vmul.f32 %v59, %v59
    %v187 = vmul.f32 %v60, %v60
    %v188 = vmul.f32 %v61, %v61
    %v189 = vmul.f32 %v62, %v62
    %v190 = vmul.f32 %v63, %v63
    %v191 = vmul.f32 %v64, %v64
    %v192 = vmul.f32 %v65, %v65
    %v193 = vmul.f32 %v66, %v66
    %v194 = vmul.f32 %v67, %v67
    %v195 = vmul.f32 %v68, %v68
    %v196 = vmul.f32 %v69, %v69
    %v197 = vmul.f32 %v70, %v70
    %v198 = vmul.f32 %v71, %v71
    %v199 = vmul.f32 %v72, %v72
    %v200 = vmul.f32 %v73, %v73
    %v201 = vmul.f32 %v74, %v74
    %v202 = vmul.f32 %v75, %v75
    %v203 = vmul.f32 %v76, %v76
    %v204 = vmul.f32 %v77, %v77
    %v205 = vmul.f32 %v78, %v78
    %v206 = vmul.f32 %v79, %v79
    %v207 = vmul.f32 %v80, %v80
    %v208 = vmul.f32 %v81, %v81
    %v209 = vmul.f32 %v82, %v82
    %v210 = vmul.f32 %v83, %v83
    %v211 = vmul.f32 %v84, %v84
    %v212 = vmul.f32 %v85, %v85
    %v213 = vsel %vm86, %v173, 0.0
    %v214 = vsel %vm86, %v174, 0.0
    %v215 = vadd.f32 %v213, %v214
    %v216 = vsel %vm86, %v175, 0.0
    %v217 = vadd.f32 %v215, %v216
    %v218 = vsel %vm86, %v176, 0.0
    %v219 = vadd.f32 %v217, %v218
    %v220 = vsel %vm86, %v177, 0.0
    %v221 = vadd.f32 %v219, %v220
    %v222 = vsel %vm86, %v178, 0.0
    %v223 = vadd.f32 %v221, %v222
    %v224 = vsel %vm86, %v179, 0.0
    %v225 = vadd.f32 %v223, %v224
    %v226 = vsel %vm86, %v180, 0.0
    %v227 = vadd.f32 %v225, %v226
    %v228 = vsel %vm86, %v181, 0.0
    %v229 = vadd.f32 %v227, %v228
    %v230 = vsel %vm86, %v182, 0.0
    %v231 = vadd.f32 %v229, %v230
    %v232 = vsel %vm86, %v183, 0.0
    %v233 = vadd.f32 %v231, %v232
    %v234 = vsel %vm86, %v184, 0.0
    %v235 = vadd.f32 %v233, %v234
    %v236 = vsel %vm86, %v185, 0.0
    %v237 = vadd.f32 %v235, %v236
    %v238 = vsel %vm86, %v186, 0.0
    %v239 = vadd.f32 %v237, %v238
    %v240 = vsel %vm86, %v187, 0.0
    %v241 = vadd.f32 %v239, %v240
    %v242 = vsel %vm86, %v188, 0.0
    %v243 = vadd.f32 %v241, %v242
    %v244 = vsel %vm86, %v189, 0.0
    %v245 = vadd.f32 %v243, %v244
    %v246 = vsel %vm86, %v190, 0.0
    %v247 = vadd.f32 %v245, %v246
    %v248 = vsel %vm86, %v191, 0.0
    %v249 = vadd.f32 %v247, %v248
    %v250 = vsel %vm86, %v192, 0.0
    %v251 = vadd.f32 %v249, %v250
    %v252 = vsel %vm86, %v193, 0.0
    %v253 = vadd.f32 %v251, %v252
    %v254 = vsel %vm86, %v194, 0.0
    %v255 = vadd.f32 %v253, %v254
    %v256 = vsel %vm86, %v195, 0.0
    %v257 = vadd.f32 %v255, %v256
    %v258 = vsel %vm86, %v196, 0.0
    %v259 = vadd.f32 %v257, %v258
    %v260 = vsel %vm86, %v197, 0.0
    %v261 = vadd.f32 %v259, %v260
    %v262 = vsel %vm86, %v198, 0.0
    %v263 = vadd.f32 %v261, %v262
    %v264 = vsel %vm86, %v199, 0.0
    %v265 = vadd.f32 %v263, %v264
    %v266 = vsel %vm86, %v200, 0.0
    %v267 = vadd.f32 %v265, %v266
    %v268 = vsel %vm86, %v201, 0.0
    %v269 = vadd.f32 %v267, %v268
    %v270 = vsel %vm86, %v202, 0.0
    %v271 = vadd.f32 %v269, %v270
    %v272 = vsel %vm86, %v203, 0.0
    %v273 = vadd.f32 %v271, %v272
    %v274 = vsel %vm86, %v204, 0.0
    %v275 = vadd.f32 %v273, %v274
    %v276 = vsel %vm86, %v205, 0.0
    %v277 = vadd.f32 %v275, %v276
    %v278 = vsel %vm86, %v206, 0.0
    %v279 = vadd.f32 %v277, %v278
    %v280 = vsel %vm86, %v207, 0.0
    %v281 = vadd.f32 %v279, %v280
    %v282 = vsel %vm86, %v208, 0.0
    %v283 = vadd.f32 %v281, %v282
    %v284 = vsel %vm86, %v209, 0.0
    %v285 = vadd.f32 %v283, %v284
    %v286 = vsel %vm86, %v210, 0.0
    %v287 = vadd.f32 %v285, %v286
    %v288 = vsel %vm86, %v211, 0.0
    %v289 = vadd.f32 %v287, %v288
    %v290 = vsel %vm86, %v212, 0.0
    %v291 = vadd.f32 %v289, %v290
    %v292 = vrot.slane %v291, 4
    %v293 = vadd.f32 %v291, %v292
    %v294 = vrot.slane %v293, 2
    %v295 = vadd.f32 %v293, %v294
    %v296 = vrot.slane %v295, 1
    %v297 = vadd.f32 %v295, %v296
    %v298 = vmul.f32 %v297, 0.003125
    %v299 = vmul.f32 %v172, %v172
    %v300 = vsub.f32 %v298, %v299
    %v301 = vld [vmem:[%s1] sm:$0x1]
    %v302 = vadd.f32 %v300, 1e-05
    %v303 = vrsqrt.pop %v302
    %v304 = vmul.f32 %v303, %v302
    %v305 = vmul.f32 %v304, %v303
    %v306 = vmul.f32 0.5, %v305
    %v307 = vsub.f32 1.5, %v306
    %v308 = vmul.f32 %v303, %v307
    %vm309 = vweird.f32 %v302
    %vm310 = vweird.f32 %v303
    %vm311 = vmor %vm309, %vm310
    %v312 = vsel %vm311, %v303, %v308
    %v313 = vmul.f32 %v301, %v312
    %v314 = vld [vmem:[%s2] sm:$0x1]
    %v315 = vmul.f32 %v172, %v313
    %v316 = vsub.f32 %v314, %v315
    %v318 = vperm.slane %v313, 0
    %v320 = vmul.f32 %v46, %v318
    %v321 = vmul.f32 %v47, %v318
    %v322 = vmul.f32 %v48, %v318
    %v323 = vmul.f32 %v49, %v318
    %v324 = vmul.f32 %v50, %v318
    %v325 = vmul.f32 %v51, %v318
    %v326 = vmul.f32 %v52, %v318
    %v327 = vmul.f32 %v53, %v318
    %v328 = vmul.f32 %v54, %v318
    %v329 = vmul.f32 %v55, %v318
    %v330 = vmul.f32 %v56, %v318
    %v331 = vmul.f32 %v57, %v318
    %v332 = vmul.f32 %v58, %v318
    %v333 = vmul.f32 %v59, %v318
    %v334 = vmul.f32 %v60, %v318
    %v335 = vmul.f32 %v61, %v318
    %v336 = vmul.f32 %v62, %v318
    %v337 = vmul.f32 %v63, %v318
    %v338 = vmul.f32 %v64, %v318
    %v339 = vmul.f32 %v65, %v318
    %v340 = vmul.f32 %v66, %v318
    %v341 = vmul.f32 %v67, %v318
    %v342 = vmul.f32 %v68, %v318
    %v343 = vmul.f32 %v69, %v318
    %v344 = vmul.f32 %v70, %v318
    %v345 = vmul.f32 %v71, %v318
    %v346 = vmul.f32 %v72, %v318
    %v347 = vmul.f32 %v73, %v318
    %v348 = vmul.f32 %v74, %v318
    %v349 = vmul.f32 %v75, %v318
    %v350 = vmul.f32 %v76, %v318
    %v351 = vmul.f32 %v77, %v318
    %v352 = vmul.f32 %v78, %v318
    %v353 = vmul.f32 %v79, %v318
    %v354 = vmul.f32 %v80, %v318
    %v355 = vmul.f32 %v81, %v318
    %v356 = vmul.f32 %v82, %v318
    %v357 = vmul.f32 %v83, %v318
    %v358 = vmul.f32 %v84, %v318
    %v359 = vmul.f32 %v85, %v318
    %v361 = vperm.slane %v316, 0
    %v363 = vadd.f32 %v320, %v361
    %v364 = vadd.f32 %v321, %v361
    %v365 = vadd.f32 %v322, %v361
    %v366 = vadd.f32 %v323, %v361
    %v367 = vadd.f32 %v324, %v361
    %v368 = vadd.f32 %v325, %v361
    %v369 = vadd.f32 %v326, %v361
    %v370 = vadd.f32 %v327, %v361
    %v371 = vadd.f32 %v328, %v361
    %v372 = vadd.f32 %v329, %v361
    %v373 = vadd.f32 %v330, %v361
    %v374 = vadd.f32 %v331, %v361
    %v375 = vadd.f32 %v332, %v361
    %v376 = vadd.f32 %v333, %v361
    %v377 = vadd.f32 %v334, %v361
    %v378 = vadd.f32 %v335, %v361
    %v379 = vadd.f32 %v336, %v361
    %v380 = vadd.f32 %v337, %v361
    %v381 = vadd.f32 %v338, %v361
    %v382 = vadd.f32 %v339, %v361
    %v383 = vadd.f32 %v340, %v361
    %v384 = vadd.f32 %v341, %v361
    %v385 = vadd.f32 %v342, %v361
    %v386 = vadd.f32 %v343, %v361
    %v387 = vadd.f32 %v344, %v361
    %v388 = vadd.f32 %v345, %v361
    %v389 = vadd.f32 %v346, %v361
    %v390 = vadd.f32 %v347, %v361
    %v391 = vadd.f32 %v348, %v361
    %v392 = vadd.f32 %v349, %v361
    %v393 = vadd.f32 %v350, %v361
    %v394 = vadd.f32 %v351, %v361
    %v395 = vadd.f32 %v352, %v361
    %v396 = vadd.f32 %v353, %v361
    %v397 = vadd.f32 %v354, %v361
    %v398 = vadd.f32 %v355, %v361
    %v399 = vadd.f32 %v356, %v361
    %v400 = vadd.f32 %v357, %v361
    %v401 = vadd.f32 %v358, %v361
    %v402 = vadd.f32 %v359, %v361
    %443 = vrot.lane.b32.xlu0 %v363, 4
    %v444 = vpop.permute.xlu0 %443
    %445 = vrot.lane.b32.xlu0 %v364, 4
    %v446 = vpop.permute.xlu0 %445
    %447 = vrot.lane.b32.xlu0 %v365, 4
    %v448 = vpop.permute.xlu0 %447
    %449 = vrot.lane.b32.xlu0 %v366, 4
    %v450 = vpop.permute.xlu0 %449
    %451 = vrot.lane.b32.xlu0 %v367, 4
    %v452 = vpop.permute.xlu0 %451
    %453 = vrot.lane.b32.xlu0 %v368, 4
    %v454 = vpop.permute.xlu0 %453
    %455 = vrot.lane.b32.xlu0 %v369, 4
    %v456 = vpop.permute.xlu0 %455
    %457 = vrot.lane.b32.xlu0 %v370, 4
    %v458 = vpop.permute.xlu0 %457
    %459 = vrot.lane.b32.xlu0 %v371, 4
    %v460 = vpop.permute.xlu0 %459
    %461 = vrot.lane.b32.xlu0 %v372, 4
    %v462 = vpop.permute.xlu0 %461
    %463 = vrot.lane.b32.xlu0 %v373, 4
    %v464 = vpop.permute.xlu0 %463
    %465 = vrot.lane.b32.xlu0 %v374, 4
    %v466 = vpop.permute.xlu0 %465
    %467 = vrot.lane.b32.xlu0 %v375, 4
    %v468 = vpop.permute.xlu0 %467
    %469 = vrot.lane.b32.xlu0 %v376, 4
    %v470 = vpop.permute.xlu0 %469
    %471 = vrot.lane.b32.xlu0 %v377, 4
    %v472 = vpop.permute.xlu0 %471
    %473 = vrot.lane.b32.xlu0 %v378, 4
    %v474 = vpop.permute.xlu0 %473
    %475 = vrot.lane.b32.xlu0 %v379, 4
    %v476 = vpop.permute.xlu0 %475
    %477 = vrot.lane.b32.xlu0 %v380, 4
    %v478 = vpop.permute.xlu0 %477
    %479 = vrot.lane.b32.xlu0 %v381, 4
    %v480 = vpop.permute.xlu0 %479
    %481 = vrot.lane.b32.xlu0 %v382, 4
    %v482 = vpop.permute.xlu0 %481
    %483 = vrot.lane.b32.xlu0 %v383, 4
    %v484 = vpop.permute.xlu0 %483
    %485 = vrot.lane.b32.xlu0 %v384, 4
    %v486 = vpop.permute.xlu0 %485
    %487 = vrot.lane.b32.xlu0 %v385, 4
    %v488 = vpop.permute.xlu0 %487
    %489 = vrot.lane.b32.xlu0 %v386, 4
    %v490 = vpop.permute.xlu0 %489
    %491 = vrot.lane.b32.xlu0 %v387, 4
    %v492 = vpop.permute.xlu0 %491
    %493 = vrot.lane.b32.xlu0 %v388, 4
    %v494 = vpop.permute.xlu0 %493
    %495 = vrot.lane.b32.xlu0 %v389, 4
    %v496 = vpop.permute.xlu0 %495
    %497 = vrot.lane.b32.xlu0 %v390, 4
    %v498 = vpop.permute.xlu0 %497
    %499 = vrot.lane.b32.xlu0 %v391, 4
    %v500 = vpop.permute.xlu0 %499
    %501 = vrot.lane.b32.xlu0 %v392, 4
    %v502 = vpop.permute.xlu0 %501
    %503 = vrot.lane.b32.xlu0 %v393, 4
    %v504 = vpop.permute.xlu0 %503
    %505 = vrot.lane.b32.xlu0 %v394, 4
    %v506 = vpop.permute.xlu0 %505
    %507 = vrot.lane.b32.xlu0 %v395, 4
    %v508 = vpop.permute.xlu0 %507
    %509 = vrot.lane.b32.xlu0 %v396, 4
    %v510 = vpop.permute.xlu0 %509
    %511 = vrot.lane.b32.xlu0 %v397, 4
    %v512 = vpop.permute.xlu0 %511
    %513 = vrot.lane.b32.xlu0 %v398, 4
    %v514 = vpop.permute.xlu0 %513
    %515 = vrot.lane.b32.xlu0 %v399, 4
    %v516 = vpop.permute.xlu0 %515
    %517 = vrot.lane.b32.xlu0 %v400, 4
    %v518 = vpop.permute.xlu0 %517
    %519 = vrot.lane.b32.xlu0 %v401, 4
    %v520 = vpop.permute.xlu0 %519
    %521 = vrot.lane.b32.xlu0 %v402, 4
    %v522 = vpop.permute.xlu0 %521
    %vm563 = vcmask 64544
    %564 = vst.msk [vmem:[#allocation2] sm:$0xff] %vm563, %v444
    %565 = vst.msk [vmem:[#allocation2 + $0x8] sm:$0xff] %vm563, %v446
    %566 = vst.msk [vmem:[#allocation2 + $0x10] sm:$0xff] %vm563, %v448
    %567 = vst.msk [vmem:[#allocation2 + $0x18] sm:$0xff] %vm563, %v450
    %568 = vst.msk [vmem:[#allocation2 + $0x20] sm:$0xff] %vm563, %v452
    %569 = vst.msk [vmem:[#allocation2 + $0x28] sm:$0xff] %vm563, %v454
    %570 = vst.msk [vmem:[#allocation2 + $0x30] sm:$0xff] %vm563, %v456
    %571 = vst.msk [vmem:[#allocation2 + $0x38] sm:$0xff] %vm563, %v458
    %572 = vst.msk [vmem:[#allocation2 + $0x40] sm:$0xff] %vm563, %v460
    %573 = vst.msk [vmem:[#allocation2 + $0x48] sm:$0xff] %vm563, %v462
    %574 = vst.msk [vmem:[#allocation2 + $0x50] sm:$0xff] %vm563, %v464
    %575 = vst.msk [vmem:[#allocation2 + $0x58] sm:$0xff] %vm563, %v466
    %576 = vst.msk [vmem:[#allocation2 + $0x60] sm:$0xff] %vm563, %v468
    %577 = vst.msk [vmem:[#allocation2 + $0x68] sm:$0xff] %vm563, %v470
    %578 = vst.msk [vmem:[#allocation2 + $0x70] sm:$0xff] %vm563, %v472
    %579 = vst.msk [vmem:[#allocation2 + $0x78] sm:$0xff] %vm563, %v474
    %580 = vst.msk [vmem:[#allocation2 + $0x80] sm:$0xff] %vm563, %v476
    %581 = vst.msk [vmem:[#allocation2 + $0x88] sm:$0xff] %vm563, %v478
    %582 = vst.msk [vmem:[#allocation2 + $0x90] sm:$0xff] %vm563, %v480
    %583 = vst.msk [vmem:[#allocation2 + $0x98] sm:$0xff] %vm563, %v482
    %584 = vst.msk [vmem:[#allocation2 + $0xa0] sm:$0xff] %vm563, %v484
    %585 = vst.msk [vmem:[#allocation2 + $0xa8] sm:$0xff] %vm563, %v486
    %586 = vst.msk [vmem:[#allocation2 + $0xb0] sm:$0xff] %vm563, %v488
    %587 = vst.msk [vmem:[#allocation2 + $0xb8] sm:$0xff] %vm563, %v490
    %588 = vst.msk [vmem:[#allocation2 + $0xc0] sm:$0xff] %vm563, %v492
    %589 = vst.msk [vmem:[#allocation2 + $0xc8] sm:$0xff] %vm563, %v494
    %590 = vst.msk [vmem:[#allocation2 + $0xd0] sm:$0xff] %vm563, %v496
    %591 = vst.msk [vmem:[#allocation2 + $0xd8] sm:$0xff] %vm563, %v498
    %592 = vst.msk [vmem:[#allocation2 + $0xe0] sm:$0xff] %vm563, %v500
    %593 = vst.msk [vmem:[#allocation2 + $0xe8] sm:$0xff] %vm563, %v502
    %594 = vst.msk [vmem:[#allocation2 + $0xf0] sm:$0xff] %vm563, %v504
    %595 = vst.msk [vmem:[#allocation2 + $0xf8] sm:$0xff] %vm563, %v506
    %596 = vst.msk [vmem:[#allocation2 + $0x100] sm:$0xff] %vm563, %v508
    %597 = vst.msk [vmem:[#allocation2 + $0x108] sm:$0xff] %vm563, %v510
    %598 = vst.msk [vmem:[#allocation2 + $0x110] sm:$0xff] %vm563, %v512
    %599 = vst.msk [vmem:[#allocation2 + $0x118] sm:$0xff] %vm563, %v514
    %600 = vst.msk [vmem:[#allocation2 + $0x120] sm:$0xff] %vm563, %v516
    %601 = vst.msk [vmem:[#allocation2 + $0x128] sm:$0xff] %vm563, %v518
    %602 = vst.msk [vmem:[#allocation2 + $0x130] sm:$0xff] %vm563, %v520
    %603 = vst.msk [vmem:[#allocation2 + $0x138] sm:$0xff] %vm563, %v522
    %604 = vst.msk [vmem:[#allocation2 + $0x1] sm:$0xff] %vm86, %v363
    %605 = vst.msk [vmem:[#allocation2 + $0x9] sm:$0xff] %vm86, %v364
    %606 = vst.msk [vmem:[#allocation2 + $0x11] sm:$0xff] %vm86, %v365
    %607 = vst.msk [vmem:[#allocation2 + $0x19] sm:$0xff] %vm86, %v366
    %608 = vst.msk [vmem:[#allocation2 + $0x21] sm:$0xff] %vm86, %v367
    %609 = vst.msk [vmem:[#allocation2 + $0x29] sm:$0xff] %vm86, %v368
    %610 = vst.msk [vmem:[#allocation2 + $0x31] sm:$0xff] %vm86, %v369
    %611 = vst.msk [vmem:[#allocation2 + $0x39] sm:$0xff] %vm86, %v370
    %612 = vst.msk [vmem:[#allocation2 + $0x41] sm:$0xff] %vm86, %v371
    %613 = vst.msk [vmem:[#allocation2 + $0x49] sm:$0xff] %vm86, %v372
    %614 = vst.msk [vmem:[#allocation2 + $0x51] sm:$0xff] %vm86, %v373
    %615 = vst.msk [vmem:[#allocation2 + $0x59] sm:$0xff] %vm86, %v374
    %616 = vst.msk [vmem:[#allocation2 + $0x61] sm:$0xff] %vm86, %v375
    %617 = vst.msk [vmem:[#allocation2 + $0x69] sm:$0xff] %vm86, %v376
    %618 = vst.msk [vmem:[#allocation2 + $0x71] sm:$0xff] %vm86, %v377
    %619 = vst.msk [vmem:[#allocation2 + $0x79] sm:$0xff] %vm86, %v378
    %620 = vst.msk [vmem:[#allocation2 + $0x81] sm:$0xff] %vm86, %v379
    %621 = vst.msk [vmem:[#allocation2 + $0x89] sm:$0xff] %vm86, %v380
    %622 = vst.msk [vmem:[#allocation2 + $0x91] sm:$0xff] %vm86, %v381
    %623 = vst.msk [vmem:[#allocation2 + $0x99] sm:$0xff] %vm86, %v382
    %624 = vst.msk [vmem:[#allocation2 + $0xa1] sm:$0xff] %vm86, %v383
    %625 = vst.msk [vmem:[#allocation2 + $0xa9] sm:$0xff] %vm86, %v384
    %626 = vst.msk [vmem:[#allocation2 + $0xb1] sm:$0xff] %vm86, %v385
    %627 = vst.msk [vmem:[#allocation2 + $0xb9] sm:$0xff] %vm86, %v386
    %628 = vst.msk [vmem:[#allocation2 + $0xc1] sm:$0xff] %vm86, %v387
    %629 = vst.msk [vmem:[#allocation2 + $0xc9] sm:$0xff] %vm86, %v388
    %630 = vst.msk [vmem:[#allocation2 + $0xd1] sm:$0xff] %vm86, %v389
    %631 = vst.msk [vmem:[#allocation2 + $0xd9] sm:$0xff] %vm86, %v390
    %632 = vst.msk [vmem:[#allocation2 + $0xe1] sm:$0xff] %vm86, %v391
    %633 = vst.msk [vmem:[#allocation2 + $0xe9] sm:$0xff] %vm86, %v392
    %634 = vst.msk [vmem:[#allocation2 + $0xf1] sm:$0xff] %vm86, %v393
    %635 = vst.msk [vmem:[#allocation2 + $0xf9] sm:$0xff] %vm86, %v394
    %636 = vst.msk [vmem:[#allocation2 + $0x101] sm:$0xff] %vm86, %v395
    %637 = vst.msk [vmem:[#allocation2 + $0x109] sm:$0xff] %vm86, %v396
    %638 = vst.msk [vmem:[#allocation2 + $0x111] sm:$0xff] %vm86, %v397
    %639 = vst.msk [vmem:[#allocation2 + $0x119] sm:$0xff] %vm86, %v398
    %640 = vst.msk [vmem:[#allocation2 + $0x121] sm:$0xff] %vm86, %v399
    %641 = vst.msk [vmem:[#allocation2 + $0x129] sm:$0xff] %vm86, %v400
    %642 = vst.msk [vmem:[#allocation2 + $0x131] sm:$0xff] %vm86, %v401
    %vm643 = vcmask 30720
    %644 = vst.msk [vmem:[#allocation2 + $0x139] sm:$0x7f] %vm643, %v402
    %645 = vrot.lane.b32.xlu0 %v363, 8
    %v646 = vpop.permute.xlu0 %645
    %647 = vrot.lane.b32.xlu0 %v364, 8
    %v648 = vpop.permute.xlu0 %647
    %649 = vrot.lane.b32.xlu0 %v365, 8
    %v650 = vpop.permute.xlu0 %649
    %651 = vrot.lane.b32.xlu0 %v366, 8
    %v652 = vpop.permute.xlu0 %651
    %653 = vrot.lane.b32.xlu0 %v367, 8
    %v654 = vpop.permute.xlu0 %653
    %655 = vrot.lane.b32.xlu0 %v368, 8
    %v656 = vpop.permute.xlu0 %655
    %657 = vrot.lane.b32.xlu0 %v369, 8
    %v658 = vpop.permute.xlu0 %657
    %659 = vrot.lane.b32.xlu0 %v370, 8
    %v660 = vpop.permute.xlu0 %659
    %661 = vrot.lane.b32.xlu0 %v371, 8
    %v662 = vpop.permute.xlu0 %661
    %663 = vrot.lane.b32.xlu0 %v372, 8
    %v664 = vpop.permute.xlu0 %663
    %665 = vrot.lane.b32.xlu0 %v373, 8
    %v666 = vpop.permute.xlu0 %665
    %667 = vrot.lane.b32.xlu0 %v374, 8
    %v668 = vpop.permute.xlu0 %667
    %669 = vrot.lane.b32.xlu0 %v375, 8
    %v670 = vpop.permute.xlu0 %669
    %671 = vrot.lane.b32.xlu0 %v376, 8
    %v672 = vpop.permute.xlu0 %671
    %673 = vrot.lane.b32.xlu0 %v377, 8
    %v674 = vpop.permute.xlu0 %673
    %675 = vrot.lane.b32.xlu0 %v378, 8
    %v676 = vpop.permute.xlu0 %675
    %677 = vrot.lane.b32.xlu0 %v379, 8
    %v678 = vpop.permute.xlu0 %677
    %679 = vrot.lane.b32.xlu0 %v380, 8
    %v680 = vpop.permute.xlu0 %679
    %681 = vrot.lane.b32.xlu0 %v381, 8
    %v682 = vpop.permute.xlu0 %681
    %683 = vrot.lane.b32.xlu0 %v382, 8
    %v684 = vpop.permute.xlu0 %683
    %685 = vrot.lane.b32.xlu0 %v383, 8
    %v686 = vpop.permute.xlu0 %685
    %687 = vrot.lane.b32.xlu0 %v384, 8
    %v688 = vpop.permute.xlu0 %687
    %689 = vrot.lane.b32.xlu0 %v385, 8
    %v690 = vpop.permute.xlu0 %689
    %691 = vrot.lane.b32.xlu0 %v386, 8
    %v692 = vpop.permute.xlu0 %691
    %693 = vrot.lane.b32.xlu0 %v387, 8
    %v694 = vpop.permute.xlu0 %693
    %695 = vrot.lane.b32.xlu0 %v388, 8
    %v696 = vpop.permute.xlu0 %695
    %697 = vrot.lane.b32.xlu0 %v389, 8
    %v698 = vpop.permute.xlu0 %697
    %699 = vrot.lane.b32.xlu0 %v390, 8
    %v700 = vpop.permute.xlu0 %699
    %701 = vrot.lane.b32.xlu0 %v391, 8
    %v702 = vpop.permute.xlu0 %701
    %703 = vrot.lane.b32.xlu0 %v392, 8
    %v704 = vpop.permute.xlu0 %703
    %705 = vrot.lane.b32.xlu0 %v393, 8
    %v706 = vpop.permute.xlu0 %705
    %707 = vrot.lane.b32.xlu0 %v394, 8
    %v708 = vpop.permute.xlu0 %707
    %709 = vrot.lane.b32.xlu0 %v395, 8
    %v710 = vpop.permute.xlu0 %709
    %711 = vrot.lane.b32.xlu0 %v396, 8
    %v712 = vpop.permute.xlu0 %711
    %713 = vrot.lane.b32.xlu0 %v397, 8
    %v714 = vpop.permute.xlu0 %713
    %715 = vrot.lane.b32.xlu0 %v398, 8
    %v716 = vpop.permute.xlu0 %715
    %717 = vrot.lane.b32.xlu0 %v399, 8
    %v718 = vpop.permute.xlu0 %717
    %719 = vrot.lane.b32.xlu0 %v400, 8
    %v720 = vpop.permute.xlu0 %719
    %721 = vrot.lane.b32.xlu0 %v401, 8
    %v722 = vpop.permute.xlu0 %721
    %723 = vrot.lane.b32.xlu0 %v402, 8
    %v724 = vpop.permute.xlu0 %723
    %vm765 = vcmask 97345
    %766 = vst.msk [vmem:[#allocation2 - $0x1] sm:$0xfe] %vm765, %v646
    %vm767 = vcmask 97344
    %768 = vst.msk [vmem:[#allocation2 + $0x7] sm:$0xff] %vm767, %v648
    %769 = vst.msk [vmem:[#allocation2 + $0xf] sm:$0xff] %vm767, %v650
    %770 = vst.msk [vmem:[#allocation2 + $0x17] sm:$0xff] %vm767, %v652
    %771 = vst.msk [vmem:[#allocation2 + $0x1f] sm:$0xff] %vm767, %v654
    %772 = vst.msk [vmem:[#allocation2 + $0x27] sm:$0xff] %vm767, %v656
    %773 = vst.msk [vmem:[#allocation2 + $0x2f] sm:$0xff] %vm767, %v658
    %774 = vst.msk [vmem:[#allocation2 + $0x37] sm:$0xff] %vm767, %v660
    %775 = vst.msk [vmem:[#allocation2 + $0x3f] sm:$0xff] %vm767, %v662
    %776 = vst.msk [vmem:[#allocation2 + $0x47] sm:$0xff] %vm767, %v664
    %777 = vst.msk [vmem:[#allocation2 + $0x4f] sm:$0xff] %vm767, %v666
    %778 = vst.msk [vmem:[#allocation2 + $0x57] sm:$0xff] %vm767, %v668
    %779 = vst.msk [vmem:[#allocation2 + $0x5f] sm:$0xff] %vm767, %v670
    %780 = vst.msk [vmem:[#allocation2 + $0x67] sm:$0xff] %vm767, %v672
    %781 = vst.msk [vmem:[#allocation2 + $0x6f] sm:$0xff] %vm767, %v674
    %782 = vst.msk [vmem:[#allocation2 + $0x77] sm:$0xff] %vm767, %v676
    %783 = vst.msk [vmem:[#allocation2 + $0x7f] sm:$0xff] %vm767, %v678
    %784 = vst.msk [vmem:[#allocation2 + $0x87] sm:$0xff] %vm767, %v680
    %785 = vst.msk [vmem:[#allocation2 + $0x8f] sm:$0xff] %vm767, %v682
    %786 = vst.msk [vmem:[#allocation2 + $0x97] sm:$0xff] %vm767, %v684
    %787 = vst.msk [vmem:[#allocation2 + $0x9f] sm:$0xff] %vm767, %v686
    %788 = vst.msk [vmem:[#allocation2 + $0xa7] sm:$0xff] %vm767, %v688
    %789 = vst.msk [vmem:[#allocation2 + $0xaf] sm:$0xff] %vm767, %v690
    %790 = vst.msk [vmem:[#allocation2 + $0xb7] sm:$0xff] %vm767, %v692
    %791 = vst.msk [vmem:[#allocation2 + $0xbf] sm:$0xff] %vm767, %v694
    %792 = vst.msk [vmem:[#allocation2 + $0xc7] sm:$0xff] %vm767, %v696
    %793 = vst.msk [vmem:[#allocation2 + $0xcf] sm:$0xff] %vm767, %v698
    %794 = vst.msk [vmem:[#allocation2 + $0xd7] sm:$0xff] %vm767, %v700
    %795 = vst.msk [vmem:[#allocation2 + $0xdf] sm:$0xff] %vm767, %v702
    %796 = vst.msk [vmem:[#allocation2 + $0xe7] sm:$0xff] %vm767, %v704
    %797 = vst.msk [vmem:[#allocation2 + $0xef] sm:$0xff] %vm767, %v706
    %798 = vst.msk [vmem:[#allocation2 + $0xf7] sm:$0xff] %vm767, %v708
    %799 = vst.msk [vmem:[#allocation2 + $0xff] sm:$0xff] %vm767, %v710
    %800 = vst.msk [vmem:[#allocation2 + $0x107] sm:$0xff] %vm767, %v712
    %801 = vst.msk [vmem:[#allocation2 + $0x10f] sm:$0xff] %vm767, %v714
    %802 = vst.msk [vmem:[#allocation2 + $0x117] sm:$0xff] %vm767, %v716
    %803 = vst.msk [vmem:[#allocation2 + $0x11f] sm:$0xff] %vm767, %v718
    %804 = vst.msk [vmem:[#allocation2 + $0x127] sm:$0xff] %vm767, %v720
    %805 = vst.msk [vmem:[#allocation2 + $0x12f] sm:$0xff] %vm767, %v722
    %806 = vst.msk [vmem:[#allocation2 + $0x137] sm:$0xff] %vm767, %v724
    %vm807 = vcmask 24576
    %808 = vst.msk [vmem:[#allocation2] sm:$0x1] %vm807, %v363
    %vm809 = vcmask 97351
    %810 = vst.msk [vmem:[#allocation2 + $0x98] sm:$0x80] %vm809, %v684
    %811 = vst.msk [vmem:[#allocation2 + $0xa0] sm:$0x1] %vm807, %v383
    %812 = vst.msk [vmem:[#allocation2 + $0x138] sm:$0x80] %vm809, %v724
    %v813 = vld [vmem:[#allocation2] sm:$0xff]
    %v814 = vld [vmem:[#allocation2 + $0x8] sm:$0xff]
    %v815 = vld [vmem:[#allocation2 + $0x10] sm:$0xff]
    %v816 = vld [vmem:[#allocation2 + $0x18] sm:$0xff]
    %v817 = vld [vmem:[#allocation2 + $0x20] sm:$0xff]
    %v818 = vld [vmem:[#allocation2 + $0x28] sm:$0xff]
    %v819 = vld [vmem:[#allocation2 + $0x30] sm:$0xff]
    %v820 = vld [vmem:[#allocation2 + $0x38] sm:$0xff]
    %v821 = vld [vmem:[#allocation2 + $0x40] sm:$0xff]
    %v822 = vld [vmem:[#allocation2 + $0x48] sm:$0xff]
    %v823 = vld [vmem:[#allocation2 + $0x50] sm:$0xff]
    %v824 = vld [vmem:[#allocation2 + $0x58] sm:$0xff]
    %v825 = vld [vmem:[#allocation2 + $0x60] sm:$0xff]
    %v826 = vld [vmem:[#allocation2 + $0x68] sm:$0xff]
    %v827 = vld [vmem:[#allocation2 + $0x70] sm:$0xff]
    %v828 = vld [vmem:[#allocation2 + $0x78] sm:$0xff]
    %v829 = vld [vmem:[#allocation2 + $0x80] sm:$0xff]
    %v830 = vld [vmem:[#allocation2 + $0x88] sm:$0xff]
    %v831 = vld [vmem:[#allocation2 + $0x90] sm:$0xff]
    %v832 = vld [vmem:[#allocation2 + $0x98] sm:$0xff]
    %v833 = vld [vmem:[#allocation2 + $0xa0] sm:$0xff]
    %v834 = vld [vmem:[#allocation2 + $0xa8] sm:$0xff]
    %v835 = vld [vmem:[#allocation2 + $0xb0] sm:$0xff]
    %v836 = vld [vmem:[#allocation2 + $0xb8] sm:$0xff]
    %v837 = vld [vmem:[#allocation2 + $0xc0] sm:$0xff]
    %v838 = vld [vmem:[#allocation2 + $0xc8] sm:$0xff]
    %v839 = vld [vmem:[#allocation2 + $0xd0] sm:$0xff]
    %v840 = vld [vmem:[#allocation2 + $0xd8] sm:$0xff]
    %v841 = vld [vmem:[#allocation2 + $0xe0] sm:$0xff]
    %v842 = vld [vmem:[#allocation2 + $0xe8] sm:$0xff]
    %v843 = vld [vmem:[#allocation2 + $0xf0] sm:$0xff]
    %v844 = vld [vmem:[#allocation2 + $0xf8] sm:$0xff]
    %v845 = vld [vmem:[#allocation2 + $0x100] sm:$0xff]
    %v846 = vld [vmem:[#allocation2 + $0x108] sm:$0xff]
    %v847 = vld [vmem:[#allocation2 + $0x110] sm:$0xff]
    %v848 = vld [vmem:[#allocation2 + $0x118] sm:$0xff]
    %v849 = vld [vmem:[#allocation2 + $0x120] sm:$0xff]
    %v850 = vld [vmem:[#allocation2 + $0x128] sm:$0xff]
    %v851 = vld [vmem:[#allocation2 + $0x130] sm:$0xff]
    %v852 = vld [vmem:[#allocation2 + $0x138] sm:$0xff]
    %v853 = vpack.c.bf16 %v814, %v813
    %v854 = vpack.c.bf16 %v816, %v815
    %v855 = vpack.c.bf16 %v818, %v817
    %v856 = vpack.c.bf16 %v820, %v819
    %v857 = vpack.c.bf16 %v822, %v821
    %v858 = vpack.c.bf16 %v824, %v823
    %v859 = vpack.c.bf16 %v826, %v825
    %v860 = vpack.c.bf16 %v828, %v827
    %v861 = vpack.c.bf16 %v830, %v829
    %v862 = vpack.c.bf16 %v832, %v831
    %v863 = vpack.c.bf16 %v834, %v833
    %v864 = vpack.c.bf16 %v836, %v835
    %v865 = vpack.c.bf16 %v838, %v837
    %v866 = vpack.c.bf16 %v840, %v839
    %v867 = vpack.c.bf16 %v842, %v841
    %v868 = vpack.c.bf16 %v844, %v843
    %v869 = vpack.c.bf16 %v846, %v845
    %v870 = vpack.c.bf16 %v848, %v847
    %v871 = vpack.c.bf16 %v850, %v849
    %v872 = vpack.c.bf16 %v852, %v851
    %v873 = vld [vmem:[%s3] sm:$0xf]
    %v874 = vld [vmem:[%s3 + $0x4] sm:$0x3]
    %v875 = vld [vmem:[%s4] sm:$0x1]
    %v877 = vperm.slane %v875, 0
    %v881 = vunpack.c.l.b16 %v873
    %v882 = vunpack.c.l.b16 %v874
    %v883 = vpack.c.b16 %v882, %v881
    %vm884 = vcmask 97280
    %v886 = vsel %vm884, %v853, 0
    %v889 = vsel %vm884, %v854, 0
    %v892 = vsel %vm884, %v855, 0
    %v895 = vsel %vm884, %v856, 0
    %v898 = vsel %vm884, %v857, 0
    %v901 = vsel %vm884, %v858, 0
    %v904 = vsel %vm884, %v859, 0
    %v907 = vsel %vm884, %v860, 0
    %v910 = vsel %vm884, %v861, 0
    %v913 = vsel %vm884, %v862, 0
    %v916 = vsel %vm884, %v863, 0
    %v919 = vsel %vm884, %v864, 0
    %v922 = vsel %vm884, %v865, 0
    %v925 = vsel %vm884, %v866, 0
    %v928 = vsel %vm884, %v867, 0
    %v931 = vsel %vm884, %v868, 0
    %v934 = vsel %vm884, %v869, 0
    %v937 = vsel %vm884, %v870, 0
    %v940 = vsel %vm884, %v871, 0
    %v943 = vsel %vm884, %v872, 0
    %vm945 = vcmask 1045504
    %v947 = vsel %vm945, %v883, 0
    %949 = vmatpush.bf16.msra.mxu0 0
    %950 = vmatpush.bf16.msra.mxu0 0
    %951 = vmatpush.bf16.msra.mxu0 0
    %952 = vmatpush.bf16.msra.mxu0 0
    %953 = vmatpush.bf16.msra.mxu0 0
    %954 = vmatpush.bf16.msra.mxu0 0
    %955 = vmatpush.bf16.msra.mxu0 0
    %956 = vmatpush.bf16.msra.mxu0 %v947
    %957 = vmatmul.bf16.gmra.mxu0 %v886
    %v958 = vpop.f32.mrf.mxu0
    %v959 = vadd.f32 %v877, %v958
    %v960 = vpop.f32.mrf.mxu0
    %v961 = vadd.f32 %v877, %v960
    %962 = vmatmul.bf16.gmra.mxu0 %v889
    %v963 = vpop.f32.mrf.mxu0
    %v964 = vadd.f32 %v877, %v963
    %v965 = vpop.f32.mrf.mxu0
    %v966 = vadd.f32 %v877, %v965
    %967 = vmatmul.bf16.gmra.mxu0 %v892
    %v968 = vpop.f32.mrf.mxu0
    %v969 = vadd.f32 %v877, %v968
    %v970 = vpop.f32.mrf.mxu0
    %v971 = vadd.f32 %v877, %v970
    %972 = vmatmul.bf16.gmra.mxu0 %v895
    %v973 = vpop.f32.mrf.mxu0
    %v974 = vadd.f32 %v877, %v973
    %v975 = vpop.f32.mrf.mxu0
    %v976 = vadd.f32 %v877, %v975
    %977 = vmatmul.bf16.gmra.mxu0 %v898
    %v978 = vpop.f32.mrf.mxu0
    %v979 = vadd.f32 %v877, %v978
    %v980 = vpop.f32.mrf.mxu0
    %v981 = vadd.f32 %v877, %v980
    %982 = vmatmul.bf16.gmra.mxu0 %v901
    %v983 = vpop.f32.mrf.mxu0
    %v984 = vadd.f32 %v877, %v983
    %v985 = vpop.f32.mrf.mxu0
    %v986 = vadd.f32 %v877, %v985
    %987 = vmatmul.bf16.gmra.mxu0 %v904
    %v988 = vpop.f32.mrf.mxu0
    %v989 = vadd.f32 %v877, %v988
    %v990 = vpop.f32.mrf.mxu0
    %v991 = vadd.f32 %v877, %v990
    %992 = vmatmul.bf16.gmra.mxu0 %v907
    %v993 = vpop.f32.mrf.mxu0
    %v994 = vadd.f32 %v877, %v993
    %v995 = vpop.f32.mrf.mxu0
    %v996 = vadd.f32 %v877, %v995
    %997 = vmatmul.bf16.gmra.mxu0 %v910
    %v998 = vpop.f32.mrf.mxu0
    %v999 = vadd.f32 %v877, %v998
    %v1000 = vpop.f32.mrf.mxu0
    %v1001 = vadd.f32 %v877, %v1000
    %1002 = vmatmul.bf16.gmra.mxu0 %v913
    %v1003 = vpop.f32.mrf.mxu0
    %v1004 = vadd.f32 %v877, %v1003
    %v1005 = vpop.f32.mrf.mxu0
    %v1006 = vadd.f32 %v877, %v1005
    %1007 = vmatmul.bf16.gmra.mxu0 %v916
    %v1008 = vpop.f32.mrf.mxu0
    %v1009 = vadd.f32 %v877, %v1008
    %v1010 = vpop.f32.mrf.mxu0
    %v1011 = vadd.f32 %v877, %v1010
    %1012 = vmatmul.bf16.gmra.mxu0 %v919
    %v1013 = vpop.f32.mrf.mxu0
    %v1014 = vadd.f32 %v877, %v1013
    %v1015 = vpop.f32.mrf.mxu0
    %v1016 = vadd.f32 %v877, %v1015
    %1017 = vmatmul.bf16.gmra.mxu0 %v922
    %v1018 = vpop.f32.mrf.mxu0
    %v1019 = vadd.f32 %v877, %v1018
    %v1020 = vpop.f32.mrf.mxu0
    %v1021 = vadd.f32 %v877, %v1020
    %1022 = vmatmul.bf16.gmra.mxu0 %v925
    %v1023 = vpop.f32.mrf.mxu0
    %v1024 = vadd.f32 %v877, %v1023
    %v1025 = vpop.f32.mrf.mxu0
    %v1026 = vadd.f32 %v877, %v1025
    %1027 = vmatmul.bf16.gmra.mxu0 %v928
    %v1028 = vpop.f32.mrf.mxu0
    %v1029 = vadd.f32 %v877, %v1028
    %v1030 = vpop.f32.mrf.mxu0
    %v1031 = vadd.f32 %v877, %v1030
    %1032 = vmatmul.bf16.gmra.mxu0 %v931
    %v1033 = vpop.f32.mrf.mxu0
    %v1034 = vadd.f32 %v877, %v1033
    %v1035 = vpop.f32.mrf.mxu0
    %v1036 = vadd.f32 %v877, %v1035
    %1037 = vmatmul.bf16.gmra.mxu0 %v934
    %v1038 = vpop.f32.mrf.mxu0
    %v1039 = vadd.f32 %v877, %v1038
    %v1040 = vpop.f32.mrf.mxu0
    %v1041 = vadd.f32 %v877, %v1040
    %1042 = vmatmul.bf16.gmra.mxu0 %v937
    %v1043 = vpop.f32.mrf.mxu0
    %v1044 = vadd.f32 %v877, %v1043
    %v1045 = vpop.f32.mrf.mxu0
    %v1046 = vadd.f32 %v877, %v1045
    %1047 = vmatmul.bf16.gmra.mxu0 %v940
    %v1048 = vpop.f32.mrf.mxu0
    %v1049 = vadd.f32 %v877, %v1048
    %v1050 = vpop.f32.mrf.mxu0
    %v1051 = vadd.f32 %v877, %v1050
    %1052 = vmatmul.bf16.gmra.mxu0 %v943
    %v1053 = vpop.f32.mrf.mxu0
    %v1054 = vadd.f32 %v877, %v1053
    %v1055 = vpop.f32.mrf.mxu0
    %v1056 = vadd.f32 %v877, %v1055
    %1057 = vdwg.mxu0
    %v1058 = vmax.f32 %v959, 0.0
    %v1059 = vmax.f32 %v961, 0.0
    %v1060 = vmax.f32 %v964, 0.0
    %v1061 = vmax.f32 %v966, 0.0
    %v1062 = vmax.f32 %v969, 0.0
    %v1063 = vmax.f32 %v971, 0.0
    %v1064 = vmax.f32 %v974, 0.0
    %v1065 = vmax.f32 %v976, 0.0
    %v1066 = vmax.f32 %v979, 0.0
    %v1067 = vmax.f32 %v981, 0.0
    %v1068 = vmax.f32 %v984, 0.0
    %v1069 = vmax.f32 %v986, 0.0
    %v1070 = vmax.f32 %v989, 0.0
    %v1071 = vmax.f32 %v991, 0.0
    %v1072 = vmax.f32 %v994, 0.0
    %v1073 = vmax.f32 %v996, 0.0
    %v1074 = vmax.f32 %v999, 0.0
    %v1075 = vmax.f32 %v1001, 0.0
    %v1076 = vmax.f32 %v1004, 0.0
    %v1077 = vmax.f32 %v1006, 0.0
    %v1078 = vmax.f32 %v1009, 0.0
    %v1079 = vmax.f32 %v1011, 0.0
    %v1080 = vmax.f32 %v1014, 0.0
    %v1081 = vmax.f32 %v1016, 0.0
    %v1082 = vmax.f32 %v1019, 0.0
    %v1083 = vmax.f32 %v1021, 0.0
    %v1084 = vmax.f32 %v1024, 0.0
    %v1085 = vmax.f32 %v1026, 0.0
    %v1086 = vmax.f32 %v1029, 0.0
    %v1087 = vmax.f32 %v1031, 0.0
    %v1088 = vmax.f32 %v1034, 0.0
    %v1089 = vmax.f32 %v1036, 0.0
    %v1090 = vmax.f32 %v1039, 0.0
    %v1091 = vmax.f32 %v1041, 0.0
    %v1092 = vmax.f32 %v1044, 0.0
    %v1093 = vmax.f32 %v1046, 0.0
    %v1094 = vmax.f32 %v1049, 0.0
    %v1095 = vmax.f32 %v1051, 0.0
    %v1096 = vmax.f32 %v1054, 0.0
    %v1097 = vmax.f32 %v1056, 0.0
    %vm1098 = vcmask 64512
    %1099 = vst.msk [vmem:[#allocation3] sm:$0xff] %vm1098, %v1058
    %1100 = vst.msk [vmem:[#allocation3 + $0x8] sm:$0xff] %vm1098, %v1059
    %1101 = vst.msk [vmem:[#allocation3 + $0x10] sm:$0xff] %vm1098, %v1060
    %1102 = vst.msk [vmem:[#allocation3 + $0x18] sm:$0xff] %vm1098, %v1061
    %1103 = vst.msk [vmem:[#allocation3 + $0x20] sm:$0xff] %vm1098, %v1062
    %1104 = vst.msk [vmem:[#allocation3 + $0x28] sm:$0xff] %vm1098, %v1063
    %1105 = vst.msk [vmem:[#allocation3 + $0x30] sm:$0xff] %vm1098, %v1064
    %1106 = vst.msk [vmem:[#allocation3 + $0x38] sm:$0xff] %vm1098, %v1065
    %1107 = vst.msk [vmem:[#allocation3 + $0x40] sm:$0xff] %vm1098, %v1066
    %1108 = vst.msk [vmem:[#allocation3 + $0x48] sm:$0xff] %vm1098, %v1067
    %1109 = vst.msk [vmem:[#allocation3 + $0x50] sm:$0xff] %vm1098, %v1068
    %1110 = vst.msk [vmem:[#allocation3 + $0x58] sm:$0xff] %vm1098, %v1069
    %1111 = vst.msk [vmem:[#allocation3 + $0x60] sm:$0xff] %vm1098, %v1070
    %1112 = vst.msk [vmem:[#allocation3 + $0x68] sm:$0xff] %vm1098, %v1071
    %1113 = vst.msk [vmem:[#allocation3 + $0x70] sm:$0xff] %vm1098, %v1072
    %1114 = vst.msk [vmem:[#allocation3 + $0x78] sm:$0xff] %vm1098, %v1073
    %1115 = vst.msk [vmem:[#allocation3 + $0x80] sm:$0xff] %vm1098, %v1074
    %1116 = vst.msk [vmem:[#allocation3 + $0x88] sm:$0xff] %vm1098, %v1075
    %1117 = vst.msk [vmem:[#allocation3 + $0x90] sm:$0xff] %vm1098, %v1076
    %1118 = vst.msk [vmem:[#allocation3 + $0x98] sm:$0xff] %vm1098, %v1077
    %1119 = vst.msk [vmem:[#allocation3 + $0xa0] sm:$0xff] %vm1098, %v1078
    %1120 = vst.msk [vmem:[#allocation3 + $0xa8] sm:$0xff] %vm1098, %v1079
    %1121 = vst.msk [vmem:[#allocation3 + $0xb0] sm:$0xff] %vm1098, %v1080
    %1122 = vst.msk [vmem:[#allocation3 + $0xb8] sm:$0xff] %vm1098, %v1081
    %1123 = vst.msk [vmem:[#allocation3 + $0xc0] sm:$0xff] %vm1098, %v1082
    %1124 = vst.msk [vmem:[#allocation3 + $0xc8] sm:$0xff] %vm1098, %v1083
    %1125 = vst.msk [vmem:[#allocation3 + $0xd0] sm:$0xff] %vm1098, %v1084
    %1126 = vst.msk [vmem:[#allocation3 + $0xd8] sm:$0xff] %vm1098, %v1085
    %1127 = vst.msk [vmem:[#allocation3 + $0xe0] sm:$0xff] %vm1098, %v1086
    %1128 = vst.msk [vmem:[#allocation3 + $0xe8] sm:$0xff] %vm1098, %v1087
    %1129 = vst.msk [vmem:[#allocation3 + $0xf0] sm:$0xff] %vm1098, %v1088
    %1130 = vst.msk [vmem:[#allocation3 + $0xf8] sm:$0xff] %vm1098, %v1089
    %1131 = vst.msk [vmem:[#allocation3 + $0x100] sm:$0xff] %vm1098, %v1090
    %1132 = vst.msk [vmem:[#allocation3 + $0x108] sm:$0xff] %vm1098, %v1091
    %1133 = vst.msk [vmem:[#allocation3 + $0x110] sm:$0xff] %vm1098, %v1092
    %1134 = vst.msk [vmem:[#allocation3 + $0x118] sm:$0xff] %vm1098, %v1093
    %1135 = vst.msk [vmem:[#allocation3 + $0x120] sm:$0xff] %vm1098, %v1094
    %1136 = vst.msk [vmem:[#allocation3 + $0x128] sm:$0xff] %vm1098, %v1095
    %1137 = vst.msk [vmem:[#allocation3 + $0x130] sm:$0xff] %vm1098, %v1096
    %1138 = vst.msk [vmem:[#allocation3 + $0x138] sm:$0xff] %vm1098, %v1097
    %v1139 = vld [vmem:[#allocation3] ss:$2 sm:$0xff]
    %s1140 = scalar_lea.vmem [#allocation3], 16
    %v1141 = vld [vmem:[%s1140] ss:$2 sm:$0xff]
    %s1142 = scalar_lea.vmem [#allocation3], 32
    %v1143 = vld [vmem:[%s1142] ss:$2 sm:$0xff]
    %s1144 = scalar_lea.vmem [#allocation3], 48
    %v1145 = vld [vmem:[%s1144] ss:$2 sm:$0xff]
    %s1146 = scalar_lea.vmem [#allocation3], 64
    %v1147 = vld [vmem:[%s1146] ss:$2 sm:$0xff]
    %s1148 = scalar_lea.vmem [#allocation3], 80
    %v1149 = vld [vmem:[%s1148] ss:$2 sm:$0xff]
    %s1150 = scalar_lea.vmem [#allocation3], 96
    %v1151 = vld [vmem:[%s1150] ss:$2 sm:$0xff]
    %s1152 = scalar_lea.vmem [#allocation3], 112
    %v1153 = vld [vmem:[%s1152] ss:$2 sm:$0xff]
    %s1154 = scalar_lea.vmem [#allocation3], 128
    %v1155 = vld [vmem:[%s1154] ss:$2 sm:$0xff]
    %s1156 = scalar_lea.vmem [#allocation3], 144
    %v1157 = vld [vmem:[%s1156] ss:$2 sm:$0xff]
    %s1158 = scalar_lea.vmem [#allocation3], 160
    %v1159 = vld [vmem:[%s1158] ss:$2 sm:$0xff]
    %s1160 = scalar_lea.vmem [#allocation3], 176
    %v1161 = vld [vmem:[%s1160] ss:$2 sm:$0xff]
    %s1162 = scalar_lea.vmem [#allocation3], 192
    %v1163 = vld [vmem:[%s1162] ss:$2 sm:$0xff]
    %s1164 = scalar_lea.vmem [#allocation3], 208
    %v1165 = vld [vmem:[%s1164] ss:$2 sm:$0xff]
    %s1166 = scalar_lea.vmem [#allocation3], 224
    %v1167 = vld [vmem:[%s1166] ss:$2 sm:$0xff]
    %s1168 = scalar_lea.vmem [#allocation3], 240
    %v1169 = vld [vmem:[%s1168] ss:$2 sm:$0xff]
    %s1170 = scalar_lea.vmem [#allocation3], 256
    %v1171 = vld [vmem:[%s1170] ss:$2 sm:$0xff]
    %s1172 = scalar_lea.vmem [#allocation3], 272
    %v1173 = vld [vmem:[%s1172] ss:$2 sm:$0xff]
    %s1174 = scalar_lea.vmem [#allocation3], 288
    %v1175 = vld [vmem:[%s1174] ss:$2 sm:$0xff]
    %s1176 = scalar_lea.vmem [#allocation3], 304
    %v1177 = vld [vmem:[%s1176] ss:$2 sm:$0xff]
    %s1178 = scalar_lea.vmem [#allocation3], 1
    %v1179 = vld [vmem:[%s1178] ss:$2 sm:$0xff]
    %s1180 = scalar_lea.vmem [#allocation3], 17
    %v1181 = vld [vmem:[%s1180] ss:$2 sm:$0xff]
    %s1182 = scalar_lea.vmem [#allocation3], 33
    %v1183 = vld [vmem:[%s1182] ss:$2 sm:$0xff]
    %s1184 = scalar_lea.vmem [#allocation3], 49
    %v1185 = vld [vmem:[%s1184] ss:$2 sm:$0xff]
    %s1186 = scalar_lea.vmem [#allocation3], 65
    %v1187 = vld [vmem:[%s1186] ss:$2 sm:$0xff]
    %s1188 = scalar_lea.vmem [#allocation3], 81
    %v1189 = vld [vmem:[%s1188] ss:$2 sm:$0xff]
    %s1190 = scalar_lea.vmem [#allocation3], 97
    %v1191 = vld [vmem:[%s1190] ss:$2 sm:$0xff]
    %s1192 = scalar_lea.vmem [#allocation3], 113
    %v1193 = vld [vmem:[%s1192] ss:$2 sm:$0xff]
    %s1194 = scalar_lea.vmem [#allocation3], 129
    %v1195 = vld [vmem:[%s1194] ss:$2 sm:$0xff]
    %s1196 = scalar_lea.vmem [#allocation3], 145
    %v1197 = vld [vmem:[%s1196] ss:$2 sm:$0xff]
    %s1198 = scalar_lea.vmem [#allocation3], 161
    %v1199 = vld [vmem:[%s1198] ss:$2 sm:$0xff]
    %s1200 = scalar_lea.vmem [#allocation3], 177
    %v1201 = vld [vmem:[%s1200] ss:$2 sm:$0xff]
    %s1202 = scalar_lea.vmem [#allocation3], 193
    %v1203 = vld [vmem:[%s1202] ss:$2 sm:$0xff]
    %s1204 = scalar_lea.vmem [#allocation3], 209
    %v1205 = vld [vmem:[%s1204] ss:$2 sm:$0xff]
    %s1206 = scalar_lea.vmem [#allocation3], 225
    %v1207 = vld [vmem:[%s1206] ss:$2 sm:$0xff]
    %s1208 = scalar_lea.vmem [#allocation3], 241
    %v1209 = vld [vmem:[%s1208] ss:$2 sm:$0xff]
    %s1210 = scalar_lea.vmem [#allocation3], 257
    %v1211 = vld [vmem:[%s1210] ss:$2 sm:$0xff]
    %s1212 = scalar_lea.vmem [#allocation3], 273
    %v1213 = vld [vmem:[%s1212] ss:$2 sm:$0xff]
    %s1214 = scalar_lea.vmem [#allocation3], 289
    %v1215 = vld [vmem:[%s1214] ss:$2 sm:$0xff]
    %s1216 = scalar_lea.vmem [#allocation3], 305
    %v1217 = vld [vmem:[%s1216] ss:$2 sm:$0xff]
    %v1218 = vmax.f32 %v1139, %v1179
    %v1219 = vmax.f32 %v1141, %v1181
    %v1220 = vmax.f32 %v1143, %v1183
    %v1221 = vmax.f32 %v1145, %v1185
    %v1222 = vmax.f32 %v1147, %v1187
    %v1223 = vmax.f32 %v1149, %v1189
    %v1224 = vmax.f32 %v1151, %v1191
    %v1225 = vmax.f32 %v1153, %v1193
    %v1226 = vmax.f32 %v1155, %v1195
    %v1227 = vmax.f32 %v1157, %v1197
    %v1228 = vmax.f32 %v1159, %v1199
    %v1229 = vmax.f32 %v1161, %v1201
    %v1230 = vmax.f32 %v1163, %v1203
    %v1231 = vmax.f32 %v1165, %v1205
    %v1232 = vmax.f32 %v1167, %v1207
    %v1233 = vmax.f32 %v1169, %v1209
    %v1234 = vmax.f32 %v1171, %v1211
    %v1235 = vmax.f32 %v1173, %v1213
    %v1236 = vmax.f32 %v1175, %v1215
    %v1237 = vmax.f32 %v1177, %v1217
    %1258 = vrot.lane.b32.xlu0 %v1218, 8
    %v1259 = vpop.permute.xlu0 %1258
    %1260 = vrot.lane.b32.xlu0 %v1219, 8
    %v1261 = vpop.permute.xlu0 %1260
    %1262 = vrot.lane.b32.xlu0 %v1220, 8
    %v1263 = vpop.permute.xlu0 %1262
    %1264 = vrot.lane.b32.xlu0 %v1221, 8
    %v1265 = vpop.permute.xlu0 %1264
    %1266 = vrot.lane.b32.xlu0 %v1222, 8
    %v1267 = vpop.permute.xlu0 %1266
    %1268 = vrot.lane.b32.xlu0 %v1223, 8
    %v1269 = vpop.permute.xlu0 %1268
    %1270 = vrot.lane.b32.xlu0 %v1224, 8
    %v1271 = vpop.permute.xlu0 %1270
    %1272 = vrot.lane.b32.xlu0 %v1225, 8
    %v1273 = vpop.permute.xlu0 %1272
    %1274 = vrot.lane.b32.xlu0 %v1226, 8
    %v1275 = vpop.permute.xlu0 %1274
    %1276 = vrot.lane.b32.xlu0 %v1227, 8
    %v1277 = vpop.permute.xlu0 %1276
    %1278 = vrot.lane.b32.xlu0 %v1228, 8
    %v1279 = vpop.permute.xlu0 %1278
    %1280 = vrot.lane.b32.xlu0 %v1229, 8
    %v1281 = vpop.permute.xlu0 %1280
    %1282 = vrot.lane.b32.xlu0 %v1230, 8
    %v1283 = vpop.permute.xlu0 %1282
    %1284 = vrot.lane.b32.xlu0 %v1231, 8
    %v1285 = vpop.permute.xlu0 %1284
    %1286 = vrot.lane.b32.xlu0 %v1232, 8
    %v1287 = vpop.permute.xlu0 %1286
    %1288 = vrot.lane.b32.xlu0 %v1233, 8
    %v1289 = vpop.permute.xlu0 %1288
    %1290 = vrot.lane.b32.xlu0 %v1234, 8
    %v1291 = vpop.permute.xlu0 %1290
    %1292 = vrot.lane.b32.xlu0 %v1235, 8
    %v1293 = vpop.permute.xlu0 %1292
    %1294 = vrot.lane.b32.xlu0 %v1236, 8
    %v1295 = vpop.permute.xlu0 %1294
    %1296 = vrot.lane.b32.xlu0 %v1237, 8
    %v1297 = vpop.permute.xlu0 %1296
    %vm1318 = vcmask 130112
    %1319 = vst.msk [vmem:[#allocation4] sm:$0xff] %vm1318, %v1259
    %1320 = vst.msk [vmem:[#allocation4 + $0x8] sm:$0xff] %vm1318, %v1261
    %1321 = vst.msk [vmem:[#allocation4 + $0x10] sm:$0xff] %vm1318, %v1263
    %1322 = vst.msk [vmem:[#allocation4 + $0x18] sm:$0xff] %vm1318, %v1265
    %1323 = vst.msk [vmem:[#allocation4 + $0x20] sm:$0xff] %vm1318, %v1267
    %1324 = vst.msk [vmem:[#allocation4 + $0x28] sm:$0xff] %vm1318, %v1269
    %1325 = vst.msk [vmem:[#allocation4 + $0x30] sm:$0xff] %vm1318, %v1271
    %1326 = vst.msk [vmem:[#allocation4 + $0x38] sm:$0xff] %vm1318, %v1273
    %1327 = vst.msk [vmem:[#allocation4 + $0x40] sm:$0xff] %vm1318, %v1275
    %1328 = vst.msk [vmem:[#allocation4 + $0x48] sm:$0xff] %vm1318, %v1277
    %1329 = vst.msk [vmem:[#allocation4 + $0x50] sm:$0xff] %vm1318, %v1279
    %1330 = vst.msk [vmem:[#allocation4 + $0x58] sm:$0xff] %vm1318, %v1281
    %1331 = vst.msk [vmem:[#allocation4 + $0x60] sm:$0xff] %vm1318, %v1283
    %1332 = vst.msk [vmem:[#allocation4 + $0x68] sm:$0xff] %vm1318, %v1285
    %1333 = vst.msk [vmem:[#allocation4 + $0x70] sm:$0xff] %vm1318, %v1287
    %1334 = vst.msk [vmem:[#allocation4 + $0x78] sm:$0xff] %vm1318, %v1289
    %1335 = vst.msk [vmem:[#allocation4 + $0x80] sm:$0xff] %vm1318, %v1291
    %1336 = vst.msk [vmem:[#allocation4 + $0x88] sm:$0xff] %vm1318, %v1293
    %1337 = vst.msk [vmem:[#allocation4 + $0x90] sm:$0xff] %vm1318, %v1295
    %1338 = vst.msk [vmem:[#allocation4 + $0x98] sm:$0xff] %vm1318, %v1297
    %1339 = vst.msk [vmem:[#allocation4 + $0x1] sm:$0xff] %vm1098, %v1218
    %1340 = vst.msk [vmem:[#allocation4 + $0x9] sm:$0xff] %vm1098, %v1219
    %1341 = vst.msk [vmem:[#allocation4 + $0x11] sm:$0xff] %vm1098, %v1220
    %1342 = vst.msk [vmem:[#allocation4 + $0x19] sm:$0xff] %vm1098, %v1221
    %1343 = vst.msk [vmem:[#allocation4 + $0x21] sm:$0xff] %vm1098, %v1222
    %1344 = vst.msk [vmem:[#allocation4 + $0x29] sm:$0xff] %vm1098, %v1223
    %1345 = vst.msk [vmem:[#allocation4 + $0x31] sm:$0xff] %vm1098, %v1224
    %1346 = vst.msk [vmem:[#allocation4 + $0x39] sm:$0xff] %vm1098, %v1225
    %1347 = vst.msk [vmem:[#allocation4 + $0x41] sm:$0xff] %vm1098, %v1226
    %1348 = vst.msk [vmem:[#allocation4 + $0x49] sm:$0xff] %vm1098, %v1227
    %1349 = vst.msk [vmem:[#allocation4 + $0x51] sm:$0xff] %vm1098, %v1228
    %1350 = vst.msk [vmem:[#allocation4 + $0x59] sm:$0xff] %vm1098, %v1229
    %1351 = vst.msk [vmem:[#allocation4 + $0x61] sm:$0xff] %vm1098, %v1230
    %1352 = vst.msk [vmem:[#allocation4 + $0x69] sm:$0xff] %vm1098, %v1231
    %1353 = vst.msk [vmem:[#allocation4 + $0x71] sm:$0xff] %vm1098, %v1232
    %1354 = vst.msk [vmem:[#allocation4 + $0x79] sm:$0xff] %vm1098, %v1233
    %1355 = vst.msk [vmem:[#allocation4 + $0x81] sm:$0xff] %vm1098, %v1234
    %1356 = vst.msk [vmem:[#allocation4 + $0x89] sm:$0xff] %vm1098, %v1235
    %1357 = vst.msk [vmem:[#allocation4 + $0x91] sm:$0xff] %vm1098, %v1236
    %vm1358 = vcmask 63488
    %1359 = vst.msk [vmem:[#allocation4 + $0x99] sm:$0x7f] %vm1358, %v1237
    %1360 = vrot.lane.b32.xlu0 %v1218, 16
    %v1361 = vpop.permute.xlu0 %1360
    %1362 = vrot.lane.b32.xlu0 %v1219, 16
    %v1363 = vpop.permute.xlu0 %1362
    %1364 = vrot.lane.b32.xlu0 %v1220, 16
    %v1365 = vpop.permute.xlu0 %1364
    %1366 = vrot.lane.b32.xlu0 %v1221, 16
    %v1367 = vpop.permute.xlu0 %1366
    %1368 = vrot.lane.b32.xlu0 %v1222, 16
    %v1369 = vpop.permute.xlu0 %1368
    %1370 = vrot.lane.b32.xlu0 %v1223, 16
    %v1371 = vpop.permute.xlu0 %1370
    %1372 = vrot.lane.b32.xlu0 %v1224, 16
    %v1373 = vpop.permute.xlu0 %1372
    %1374 = vrot.lane.b32.xlu0 %v1225, 16
    %v1375 = vpop.permute.xlu0 %1374
    %1376 = vrot.lane.b32.xlu0 %v1226, 16
    %v1377 = vpop.permute.xlu0 %1376
    %1378 = vrot.lane.b32.xlu0 %v1227, 16
    %v1379 = vpop.permute.xlu0 %1378
    %1380 = vrot.lane.b32.xlu0 %v1228, 16
    %v1381 = vpop.permute.xlu0 %1380
    %1382 = vrot.lane.b32.xlu0 %v1229, 16
    %v1383 = vpop.permute.xlu0 %1382
    %1384 = vrot.lane.b32.xlu0 %v1230, 16
    %v1385 = vpop.permute.xlu0 %1384
    %1386 = vrot.lane.b32.xlu0 %v1231, 16
    %v1387 = vpop.permute.xlu0 %1386
    %1388 = vrot.lane.b32.xlu0 %v1232, 16
    %v1389 = vpop.permute.xlu0 %1388
    %1390 = vrot.lane.b32.xlu0 %v1233, 16
    %v1391 = vpop.permute.xlu0 %1390
    %1392 = vrot.lane.b32.xlu0 %v1234, 16
    %v1393 = vpop.permute.xlu0 %1392
    %1394 = vrot.lane.b32.xlu0 %v1235, 16
    %v1395 = vpop.permute.xlu0 %1394
    %1396 = vrot.lane.b32.xlu0 %v1236, 16
    %v1397 = vpop.permute.xlu0 %1396
    %1398 = vrot.lane.b32.xlu0 %v1237, 16
    %v1399 = vpop.permute.xlu0 %1398
    %vm1420 = vcmask 195713
    %1421 = vst.msk [vmem:[#allocation4 - $0x1] sm:$0xfe] %vm1420, %v1361
    %vm1422 = vcmask 195712
    %1423 = vst.msk [vmem:[#allocation4 + $0x7] sm:$0xff] %vm1422, %v1363
    %1424 = vst.msk [vmem:[#allocation4 + $0xf] sm:$0xff] %vm1422, %v1365
    %1425 = vst.msk [vmem:[#allocation4 + $0x17] sm:$0xff] %vm1422, %v1367
    %1426 = vst.msk [vmem:[#allocation4 + $0x1f] sm:$0xff] %vm1422, %v1369
    %1427 = vst.msk [vmem:[#allocation4 + $0x27] sm:$0xff] %vm1422, %v1371
    %1428 = vst.msk [vmem:[#allocation4 + $0x2f] sm:$0xff] %vm1422, %v1373
    %1429 = vst.msk [vmem:[#allocation4 + $0x37] sm:$0xff] %vm1422, %v1375
    %1430 = vst.msk [vmem:[#allocation4 + $0x3f] sm:$0xff] %vm1422, %v1377
    %1431 = vst.msk [vmem:[#allocation4 + $0x47] sm:$0xff] %vm1422, %v1379
    %1432 = vst.msk [vmem:[#allocation4 + $0x4f] sm:$0xff] %vm1422, %v1381
    %1433 = vst.msk [vmem:[#allocation4 + $0x57] sm:$0xff] %vm1422, %v1383
    %1434 = vst.msk [vmem:[#allocation4 + $0x5f] sm:$0xff] %vm1422, %v1385
    %1435 = vst.msk [vmem:[#allocation4 + $0x67] sm:$0xff] %vm1422, %v1387
    %1436 = vst.msk [vmem:[#allocation4 + $0x6f] sm:$0xff] %vm1422, %v1389
    %1437 = vst.msk [vmem:[#allocation4 + $0x77] sm:$0xff] %vm1422, %v1391
    %1438 = vst.msk [vmem:[#allocation4 + $0x7f] sm:$0xff] %vm1422, %v1393
    %1439 = vst.msk [vmem:[#allocation4 + $0x87] sm:$0xff] %vm1422, %v1395
    %1440 = vst.msk [vmem:[#allocation4 + $0x8f] sm:$0xff] %vm1422, %v1397
    %1441 = vst.msk [vmem:[#allocation4 + $0x97] sm:$0xff] %vm1422, %v1399
    %vm1442 = vcmask 57344
    %1443 = vst.msk [vmem:[#allocation4] sm:$0x1] %vm1442, %v1218
    %vm1444 = vcmask 195719
    %1445 = vst.msk [vmem:[#allocation4 + $0x48] sm:$0x80] %vm1444, %v1379
    %1446 = vst.msk [vmem:[#allocation4 + $0x50] sm:$0x1] %vm1442, %v1228
    %1447 = vst.msk [vmem:[#allocation4 + $0x98] sm:$0x80] %vm1444, %v1399
    %v1448 = vld [vmem:[#allocation4] sm:$0xff]
    %v1449 = vld [vmem:[#allocation4 + $0x8] sm:$0xff]
    %v1450 = vld [vmem:[#allocation4 + $0x10] sm:$0xff]
    %v1451 = vld [vmem:[#allocation4 + $0x18] sm:$0xff]
    %v1452 = vld [vmem:[#allocation4 + $0x20] sm:$0xff]
    %v1453 = vld [vmem:[#allocation4 + $0x28] sm:$0xff]
    %v1454 = vld [vmem:[#allocation4 + $0x30] sm:$0xff]
    %v1455 = vld [vmem:[#allocation4 + $0x38] sm:$0xff]
    %v1456 = vld [vmem:[#allocation4 + $0x40] sm:$0xff]
    %v1457 = vld [vmem:[#allocation4 + $0x48] sm:$0xff]
    %v1458 = vld [vmem:[#allocation4 + $0x50] sm:$0xff]
    %v1459 = vld [vmem:[#allocation4 + $0x58] sm:$0xff]
    %v1460 = vld [vmem:[#allocation4 + $0x60] sm:$0xff]
    %v1461 = vld [vmem:[#allocation4 + $0x68] sm:$0xff]
    %v1462 = vld [vmem:[#allocation4 + $0x70] sm:$0xff]
    %v1463 = vld [vmem:[#allocation4 + $0x78] sm:$0xff]
    %v1464 = vld [vmem:[#allocation4 + $0x80] sm:$0xff]
    %v1465 = vld [vmem:[#allocation4 + $0x88] sm:$0xff]
    %v1466 = vld [vmem:[#allocation4 + $0x90] sm:$0xff]
    %v1467 = vld [vmem:[#allocation4 + $0x98] sm:$0xff]
    %v1468 = vpack.c.bf16 %v1449, %v1448
    %v1469 = vpack.c.bf16 %v1451, %v1450
    %v1470 = vpack.c.bf16 %v1453, %v1452
    %v1471 = vpack.c.bf16 %v1455, %v1454
    %v1472 = vpack.c.bf16 %v1457, %v1456
    %v1473 = vpack.c.bf16 %v1459, %v1458
    %v1474 = vpack.c.bf16 %v1461, %v1460
    %v1475 = vpack.c.bf16 %v1463, %v1462
    %v1476 = vpack.c.bf16 %v1465, %v1464
    %v1477 = vpack.c.bf16 %v1467, %v1466
    %v1478 = vld [vmem:[%s5] sm:$0xf]
    %v1479 = vld [vmem:[%s5 + $0x4] sm:$0xf]
    %v1480 = vld [vmem:[%s5 + $0x8] sm:$0xf]
    %v1481 = vld [vmem:[%s6] sm:$0x1]
    %v1483 = vperm.slane %v1481, 0
    %v1488 = vunpack.c.l.b16 %v1478
    %v1489 = vunpack.c.l.b16 %v1479
    %v1490 = vunpack.c.l.b16 %v1480
    %v1491 = vpack.c.b16 %v1489, %v1488
    %v1492 = vpack.c.b16 %v1490, %v1490
    %vm1494 = vcmask 195584
    %v1496 = vsel %vm1494, %v1468, 0
    %v1499 = vsel %vm1494, %v1469, 0
    %v1502 = vsel %vm1494, %v1470, 0
    %v1505 = vsel %vm1494, %v1471, 0
    %v1508 = vsel %vm1494, %v1472, 0
    %v1511 = vsel %vm1494, %v1473, 0
    %v1514 = vsel %vm1494, %v1474, 0
    %v1517 = vsel %vm1494, %v1475, 0
    %v1520 = vsel %vm1494, %v1476, 0
    %v1523 = vsel %vm1494, %v1477, 0
    %vm1525 = vcmask 1043456
    %v1527 = vsel %vm1525, %v1492, 0
    %1529 = vmatpush.bf16.msra.mxu0 0
    %1530 = vmatpush.bf16.msra.mxu0 0
    %1531 = vmatpush.bf16.msra.mxu0 0
    %1532 = vmatpush.bf16.msra.mxu0 0
    %1533 = vmatpush.bf16.msra.mxu0 0
    %1534 = vmatpush.bf16.msra.mxu0 0
    %1535 = vmatpush.bf16.msra.mxu0 %v1527
    %1536 = vmatpush.bf16.msra.mxu0 %v1491
    %1537 = vmatmul.bf16.gmra.mxu0 %v1496
    %v1538 = vpop.f32.mrf.mxu0
    %v1539 = vadd.f32 %v1483, %v1538
    %v1540 = vpop.f32.mrf.mxu0
    %v1541 = vadd.f32 %v1483, %v1540
    %1542 = vmatmul.bf16.gmra.mxu0 %v1499
    %v1543 = vpop.f32.mrf.mxu0
    %v1544 = vadd.f32 %v1483, %v1543
    %v1545 = vpop.f32.mrf.mxu0
    %v1546 = vadd.f32 %v1483, %v1545
    %1547 = vmatmul.bf16.gmra.mxu0 %v1502
    %v1548 = vpop.f32.mrf.mxu0
    %v1549 = vadd.f32 %v1483, %v1548
    %v1550 = vpop.f32.mrf.mxu0
    %v1551 = vadd.f32 %v1483, %v1550
    %1552 = vmatmul.bf16.gmra.mxu0 %v1505
    %v1553 = vpop.f32.mrf.mxu0
    %v1554 = vadd.f32 %v1483, %v1553
    %v1555 = vpop.f32.mrf.mxu0
    %v1556 = vadd.f32 %v1483, %v1555
    %1557 = vmatmul.bf16.gmra.mxu0 %v1508
    %v1558 = vpop.f32.mrf.mxu0
    %v1559 = vadd.f32 %v1483, %v1558
    %v1560 = vpop.f32.mrf.mxu0
    %v1561 = vadd.f32 %v1483, %v1560
    %1562 = vmatmul.bf16.gmra.mxu0 %v1511
    %v1563 = vpop.f32.mrf.mxu0
    %v1564 = vadd.f32 %v1483, %v1563
    %v1565 = vpop.f32.mrf.mxu0
    %v1566 = vadd.f32 %v1483, %v1565
    %1567 = vmatmul.bf16.gmra.mxu0 %v1514
    %v1568 = vpop.f32.mrf.mxu0
    %v1569 = vadd.f32 %v1483, %v1568
    %v1570 = vpop.f32.mrf.mxu0
    %v1571 = vadd.f32 %v1483, %v1570
    %1572 = vmatmul.bf16.gmra.mxu0 %v1517
    %v1573 = vpop.f32.mrf.mxu0
    %v1574 = vadd.f32 %v1483, %v1573
    %v1575 = vpop.f32.mrf.mxu0
    %v1576 = vadd.f32 %v1483, %v1575
    %1577 = vmatmul.bf16.gmra.mxu0 %v1520
    %v1578 = vpop.f32.mrf.mxu0
    %v1579 = vadd.f32 %v1483, %v1578
    %v1580 = vpop.f32.mrf.mxu0
    %v1581 = vadd.f32 %v1483, %v1580
    %1582 = vmatmul.bf16.gmra.mxu0 %v1523
    %v1583 = vpop.f32.mrf.mxu0
    %v1584 = vadd.f32 %v1483, %v1583
    %v1585 = vpop.f32.mrf.mxu0
    %v1586 = vadd.f32 %v1483, %v1585
    %1587 = vdwg.mxu0
    %v1588 = vmax.f32 %v1539, 0.0
    %v1589 = vmax.f32 %v1541, 0.0
    %v1590 = vmax.f32 %v1544, 0.0
    %v1591 = vmax.f32 %v1546, 0.0
    %v1592 = vmax.f32 %v1549, 0.0
    %v1593 = vmax.f32 %v1551, 0.0
    %v1594 = vmax.f32 %v1554, 0.0
    %v1595 = vmax.f32 %v1556, 0.0
    %v1596 = vmax.f32 %v1559, 0.0
    %v1597 = vmax.f32 %v1561, 0.0
    %v1598 = vmax.f32 %v1564, 0.0
    %v1599 = vmax.f32 %v1566, 0.0
    %v1600 = vmax.f32 %v1569, 0.0
    %v1601 = vmax.f32 %v1571, 0.0
    %v1602 = vmax.f32 %v1574, 0.0
    %v1603 = vmax.f32 %v1576, 0.0
    %v1604 = vmax.f32 %v1579, 0.0
    %v1605 = vmax.f32 %v1581, 0.0
    %v1606 = vmax.f32 %v1584, 0.0
    %v1607 = vmax.f32 %v1586, 0.0
    %vm1608 = vcmask 130048
    %1609 = vst.msk [vmem:[#allocation5] sm:$0xff] %vm1608, %v1588
    %1610 = vst.msk [vmem:[#allocation5 + $0x8] sm:$0xff] %vm1608, %v1589
    %1611 = vst.msk [vmem:[#allocation5 + $0x10] sm:$0xff] %vm1608, %v1590
    %1612 = vst.msk [vmem:[#allocation5 + $0x18] sm:$0xff] %vm1608, %v1591
    %1613 = vst.msk [vmem:[#allocation5 + $0x20] sm:$0xff] %vm1608, %v1592
    %1614 = vst.msk [vmem:[#allocation5 + $0x28] sm:$0xff] %vm1608, %v1593
    %1615 = vst.msk [vmem:[#allocation5 + $0x30] sm:$0xff] %vm1608, %v1594
    %1616 = vst.msk [vmem:[#allocation5 + $0x38] sm:$0xff] %vm1608, %v1595
    %1617 = vst.msk [vmem:[#allocation5 + $0x40] sm:$0xff] %vm1608, %v1596
    %1618 = vst.msk [vmem:[#allocation5 + $0x48] sm:$0xff] %vm1608, %v1597
    %1619 = vst.msk [vmem:[#allocation5 + $0x50] sm:$0xff] %vm1608, %v1598
    %1620 = vst.msk [vmem:[#allocation5 + $0x58] sm:$0xff] %vm1608, %v1599
    %1621 = vst.msk [vmem:[#allocation5 + $0x60] sm:$0xff] %vm1608, %v1600
    %1622 = vst.msk [vmem:[#allocation5 + $0x68] sm:$0xff] %vm1608, %v1601
    %1623 = vst.msk [vmem:[#allocation5 + $0x70] sm:$0xff] %vm1608, %v1602
    %1624 = vst.msk [vmem:[#allocation5 + $0x78] sm:$0xff] %vm1608, %v1603
    %1625 = vst.msk [vmem:[#allocation5 + $0x80] sm:$0xff] %vm1608, %v1604
    %1626 = vst.msk [vmem:[#allocation5 + $0x88] sm:$0xff] %vm1608, %v1605
    %1627 = vst.msk [vmem:[#allocation5 + $0x90] sm:$0xff] %vm1608, %v1606
    %1628 = vst.msk [vmem:[#allocation5 + $0x98] sm:$0xff] %vm1608, %v1607
    %v1629 = vld [vmem:[#allocation5] ss:$2 sm:$0xff]
    %s1630 = scalar_lea.vmem [#allocation5], 16
    %v1631 = vld [vmem:[%s1630] ss:$2 sm:$0xff]
    %s1632 = scalar_lea.vmem [#allocation5], 32
    %v1633 = vld [vmem:[%s1632] ss:$2 sm:$0xff]
    %s1634 = scalar_lea.vmem [#allocation5], 48
    %v1635 = vld [vmem:[%s1634] ss:$2 sm:$0xff]
    %s1636 = scalar_lea.vmem [#allocation5], 64
    %v1637 = vld [vmem:[%s1636] ss:$2 sm:$0xff]
    %s1638 = scalar_lea.vmem [#allocation5], 80
    %v1639 = vld [vmem:[%s1638] ss:$2 sm:$0xff]
    %s1640 = scalar_lea.vmem [#allocation5], 96
    %v1641 = vld [vmem:[%s1640] ss:$2 sm:$0xff]
    %s1642 = scalar_lea.vmem [#allocation5], 112
    %v1643 = vld [vmem:[%s1642] ss:$2 sm:$0xff]
    %s1644 = scalar_lea.vmem [#allocation5], 128
    %v1645 = vld [vmem:[%s1644] ss:$2 sm:$0xff]
    %s1646 = scalar_lea.vmem [#allocation5], 144
    %v1647 = vld [vmem:[%s1646] ss:$2 sm:$0xff]
    %s1648 = scalar_lea.vmem [#allocation5], 1
    %v1649 = vld [vmem:[%s1648] ss:$2 sm:$0xff]
    %s1650 = scalar_lea.vmem [#allocation5], 17
    %v1651 = vld [vmem:[%s1650] ss:$2 sm:$0xff]
    %s1652 = scalar_lea.vmem [#allocation5], 33
    %v1653 = vld [vmem:[%s1652] ss:$2 sm:$0xff]
    %s1654 = scalar_lea.vmem [#allocation5], 49
    %v1655 = vld [vmem:[%s1654] ss:$2 sm:$0xff]
    %s1656 = scalar_lea.vmem [#allocation5], 65
    %v1657 = vld [vmem:[%s1656] ss:$2 sm:$0xff]
    %s1658 = scalar_lea.vmem [#allocation5], 81
    %v1659 = vld [vmem:[%s1658] ss:$2 sm:$0xff]
    %s1660 = scalar_lea.vmem [#allocation5], 97
    %v1661 = vld [vmem:[%s1660] ss:$2 sm:$0xff]
    %s1662 = scalar_lea.vmem [#allocation5], 113
    %v1663 = vld [vmem:[%s1662] ss:$2 sm:$0xff]
    %s1664 = scalar_lea.vmem [#allocation5], 129
    %v1665 = vld [vmem:[%s1664] ss:$2 sm:$0xff]
    %s1666 = scalar_lea.vmem [#allocation5], 145
    %v1667 = vld [vmem:[%s1666] ss:$2 sm:$0xff]
    %v1668 = vmax.f32 %v1629, %v1649
    %v1669 = vmax.f32 %v1631, %v1651
    %v1670 = vmax.f32 %v1633, %v1653
    %v1671 = vmax.f32 %v1635, %v1655
    %v1672 = vmax.f32 %v1637, %v1657
    %v1673 = vmax.f32 %v1639, %v1659
    %v1674 = vmax.f32 %v1641, %v1661
    %v1675 = vmax.f32 %v1643, %v1663
    %v1676 = vmax.f32 %v1645, %v1665
    %v1677 = vmax.f32 %v1647, %v1667
    %1688 = vrot.lane.b32.xlu0 %v1668, 16
    %v1689 = vpop.permute.xlu0 %1688
    %1690 = vrot.lane.b32.xlu0 %v1669, 16
    %v1691 = vpop.permute.xlu0 %1690
    %1692 = vrot.lane.b32.xlu0 %v1670, 16
    %v1693 = vpop.permute.xlu0 %1692
    %1694 = vrot.lane.b32.xlu0 %v1671, 16
    %v1695 = vpop.permute.xlu0 %1694
    %1696 = vrot.lane.b32.xlu0 %v1672, 16
    %v1697 = vpop.permute.xlu0 %1696
    %1698 = vrot.lane.b32.xlu0 %v1673, 16
    %v1699 = vpop.permute.xlu0 %1698
    %1700 = vrot.lane.b32.xlu0 %v1674, 16
    %v1701 = vpop.permute.xlu0 %1700
    %1702 = vrot.lane.b32.xlu0 %v1675, 16
    %v1703 = vpop.permute.xlu0 %1702
    %1704 = vrot.lane.b32.xlu0 %v1676, 16
    %v1705 = vpop.permute.xlu0 %1704
    %1706 = vrot.lane.b32.xlu0 %v1677, 16
    %v1707 = vpop.permute.xlu0 %1706
    %vm1718 = vcmask 261248
    %1719 = vst.msk [vmem:[#allocation6] sm:$0xff] %vm1718, %v1689
    %1720 = vst.msk [vmem:[#allocation6 + $0x8] sm:$0xff] %vm1718, %v1691
    %1721 = vst.msk [vmem:[#allocation6 + $0x10] sm:$0xff] %vm1718, %v1693
    %1722 = vst.msk [vmem:[#allocation6 + $0x18] sm:$0xff] %vm1718, %v1695
    %1723 = vst.msk [vmem:[#allocation6 + $0x20] sm:$0xff] %vm1718, %v1697
    %1724 = vst.msk [vmem:[#allocation6 + $0x28] sm:$0xff] %vm1718, %v1699
    %1725 = vst.msk [vmem:[#allocation6 + $0x30] sm:$0xff] %vm1718, %v1701
    %1726 = vst.msk [vmem:[#allocation6 + $0x38] sm:$0xff] %vm1718, %v1703
    %1727 = vst.msk [vmem:[#allocation6 + $0x40] sm:$0xff] %vm1718, %v1705
    %1728 = vst.msk [vmem:[#allocation6 + $0x48] sm:$0xff] %vm1718, %v1707
    %1729 = vst.msk [vmem:[#allocation6 + $0x1] sm:$0xff] %vm1608, %v1668
    %1730 = vst.msk [vmem:[#allocation6 + $0x9] sm:$0xff] %vm1608, %v1669
    %1731 = vst.msk [vmem:[#allocation6 + $0x11] sm:$0xff] %vm1608, %v1670
    %1732 = vst.msk [vmem:[#allocation6 + $0x19] sm:$0xff] %vm1608, %v1671
    %1733 = vst.msk [vmem:[#allocation6 + $0x21] sm:$0xff] %vm1608, %v1672
    %1734 = vst.msk [vmem:[#allocation6 + $0x29] sm:$0xff] %vm1608, %v1673
    %1735 = vst.msk [vmem:[#allocation6 + $0x31] sm:$0xff] %vm1608, %v1674
    %1736 = vst.msk [vmem:[#allocation6 + $0x39] sm:$0xff] %vm1608, %v1675
    %1737 = vst.msk [vmem:[#allocation6 + $0x41] sm:$0xff] %vm1608, %v1676
    %vm1738 = vcmask 129024
    %1739 = vst.msk [vmem:[#allocation6 + $0x49] sm:$0x7f] %vm1738, %v1677
    %1740 = vrot.lane.b32.xlu0 %v1668, 32
    %v1741 = vpop.permute.xlu0 %1740
    %1742 = vrot.lane.b32.xlu0 %v1669, 32
    %v1743 = vpop.permute.xlu0 %1742
    %1744 = vrot.lane.b32.xlu0 %v1670, 32
    %v1745 = vpop.permute.xlu0 %1744
    %1746 = vrot.lane.b32.xlu0 %v1671, 32
    %v1747 = vpop.permute.xlu0 %1746
    %1748 = vrot.lane.b32.xlu0 %v1672, 32
    %v1749 = vpop.permute.xlu0 %1748
    %1750 = vrot.lane.b32.xlu0 %v1673, 32
    %v1751 = vpop.permute.xlu0 %1750
    %1752 = vrot.lane.b32.xlu0 %v1674, 32
    %v1753 = vpop.permute.xlu0 %1752
    %1754 = vrot.lane.b32.xlu0 %v1675, 32
    %v1755 = vpop.permute.xlu0 %1754
    %1756 = vrot.lane.b32.xlu0 %v1676, 32
    %v1757 = vpop.permute.xlu0 %1756
    %1758 = vrot.lane.b32.xlu0 %v1677, 32
    %v1759 = vpop.permute.xlu0 %1758
    %vm1770 = vcmask 392449
    %1771 = vst.msk [vmem:[#allocation6 - $0x1] sm:$0xfe] %vm1770, %v1741
    %vm1772 = vcmask 392448
    %1773 = vst.msk [vmem:[#allocation6 + $0x7] sm:$0xff] %vm1772, %v1743
    %1774 = vst.msk [vmem:[#allocation6 + $0xf] sm:$0xff] %vm1772, %v1745
    %1775 = vst.msk [vmem:[#allocation6 + $0x17] sm:$0xff] %vm1772, %v1747
    %1776 = vst.msk [vmem:[#allocation6 + $0x1f] sm:$0xff] %vm1772, %v1749
    %1777 = vst.msk [vmem:[#allocation6 + $0x27] sm:$0xff] %vm1772, %v1751
    %1778 = vst.msk [vmem:[#allocation6 + $0x2f] sm:$0xff] %vm1772, %v1753
    %1779 = vst.msk [vmem:[#allocation6 + $0x37] sm:$0xff] %vm1772, %v1755
    %1780 = vst.msk [vmem:[#allocation6 + $0x3f] sm:$0xff] %vm1772, %v1757
    %1781 = vst.msk [vmem:[#allocation6 + $0x47] sm:$0xff] %vm1772, %v1759
    %vm1782 = vcmask 122880
    %1783 = vst.msk [vmem:[#allocation6] sm:$0x1] %vm1782, %v1668
    %vm1784 = vcmask 392455
    %1785 = vst.msk [vmem:[#allocation6 + $0x20] sm:$0x80] %vm1784, %v1749
    %1786 = vst.msk [vmem:[#allocation6 + $0x28] sm:$0x1] %vm1782, %v1673
    %1787 = vst.msk [vmem:[#allocation6 + $0x48] sm:$0x80] %vm1784, %v1759
    %v1788 = vld [vmem:[#allocation6] sm:$0xff]
    %v1789 = vld [vmem:[#allocation6 + $0x8] sm:$0xff]
    %v1790 = vld [vmem:[#allocation6 + $0x10] sm:$0xff]
    %v1791 = vld [vmem:[#allocation6 + $0x18] sm:$0xff]
    %v1792 = vld [vmem:[#allocation6 + $0x20] sm:$0xff]
    %v1793 = vld [vmem:[#allocation6 + $0x28] sm:$0xff]
    %v1794 = vld [vmem:[#allocation6 + $0x30] sm:$0xff]
    %v1795 = vld [vmem:[#allocation6 + $0x38] sm:$0xff]
    %v1796 = vld [vmem:[#allocation6 + $0x40] sm:$0xff]
    %v1797 = vld [vmem:[#allocation6 + $0x48] sm:$0xff]
    %v1798 = vpack.c.bf16 %v1789, %v1788
    %v1799 = vpack.c.bf16 %v1791, %v1790
    %v1800 = vpack.c.bf16 %v1793, %v1792
    %v1801 = vpack.c.bf16 %v1795, %v1794
    %v1802 = vpack.c.bf16 %v1797, %v1796
    %v1803 = vld [vmem:[%s7] sm:$0xf]
    %v1804 = vld [vmem:[%s7 + $0x4] sm:$0xf]
    %v1805 = vld [vmem:[%s7 + $0x8] sm:$0xf]
    %v1806 = vld [vmem:[%s7 + $0xc] sm:$0xf]
    %v1807 = vld [vmem:[%s7 + $0x10] sm:$0xf]
    %v1808 = vld [vmem:[%s7 + $0x14] sm:$0xf]
    %v1809 = vld [vmem:[%s8] sm:$0x1]
    %v1811 = vperm.slane %v1809, 0
    %v1819 = vunpack.c.l.b16 %v1803
    %v1820 = vunpack.c.l.b16 %v1804
    %v1821 = vunpack.c.l.b16 %v1805
    %v1822 = vunpack.c.l.b16 %v1806
    %v1823 = vunpack.c.l.b16 %v1807
    %v1824 = vunpack.c.l.b16 %v1808
    %v1825 = vpack.c.b16 %v1820, %v1819
    %v1826 = vpack.c.b16 %v1822, %v1821
    %v1827 = vpack.c.b16 %v1824, %v1823
    %vm1831 = vcmask 392192
    %v1833 = vsel %vm1831, %v1798, 0
    %v1836 = vsel %vm1831, %v1799, 0
    %v1839 = vsel %vm1831, %v1800, 0
    %v1842 = vsel %vm1831, %v1801, 0
    %v1845 = vsel %vm1831, %v1802, 0
    %1847 = vmatpush.bf16.msra.mxu0 0
    %1848 = vmatpush.bf16.msra.mxu0 0
    %1849 = vmatpush.bf16.msra.mxu0 0
    %1850 = vmatpush.bf16.msra.mxu0 0
    %1851 = vmatpush.bf16.msra.mxu0 0
    %1852 = vmatpush.bf16.msra.mxu0 %v1827
    %1853 = vmatpush.bf16.msra.mxu0 %v1826
    %1854 = vmatpush.bf16.msra.mxu0 %v1825
    %1855 = vmatmul.bf16.gmra.mxu0 %v1833
    %v1856 = vpop.f32.mrf.mxu0
    %v1857 = vadd.f32 %v1811, %v1856
    %v1858 = vpop.f32.mrf.mxu0
    %v1859 = vadd.f32 %v1811, %v1858
    %1860 = vmatmul.bf16.gmra.mxu0 %v1836
    %v1861 = vpop.f32.mrf.mxu0
    %v1862 = vadd.f32 %v1811, %v1861
    %v1863 = vpop.f32.mrf.mxu0
    %v1864 = vadd.f32 %v1811, %v1863
    %1865 = vmatmul.bf16.gmra.mxu0 %v1839
    %v1866 = vpop.f32.mrf.mxu0
    %v1867 = vadd.f32 %v1811, %v1866
    %v1868 = vpop.f32.mrf.mxu0
    %v1869 = vadd.f32 %v1811, %v1868
    %1870 = vmatmul.bf16.gmra.mxu0 %v1842
    %v1871 = vpop.f32.mrf.mxu0
    %v1872 = vadd.f32 %v1811, %v1871
    %v1873 = vpop.f32.mrf.mxu0
    %v1874 = vadd.f32 %v1811, %v1873
    %1875 = vmatmul.bf16.gmra.mxu0 %v1845
    %v1876 = vpop.f32.mrf.mxu0
    %v1877 = vadd.f32 %v1811, %v1876
    %v1878 = vpop.f32.mrf.mxu0
    %v1879 = vadd.f32 %v1811, %v1878
    %1880 = vdwg.mxu0
    %v1881 = vmax.f32 %v1857, 0.0
    %v1882 = vmax.f32 %v1859, 0.0
    %v1883 = vmax.f32 %v1862, 0.0
    %v1884 = vmax.f32 %v1864, 0.0
    %v1885 = vmax.f32 %v1867, 0.0
    %v1886 = vmax.f32 %v1869, 0.0
    %v1887 = vmax.f32 %v1872, 0.0
    %v1888 = vmax.f32 %v1874, 0.0
    %v1889 = vmax.f32 %v1877, 0.0
    %v1890 = vmax.f32 %v1879, 0.0
    %vm1891 = vcmask 261120
    %1892 = vst.msk [vmem:[#allocation7] sm:$0xff] %vm1891, %v1881
    %1893 = vst.msk [vmem:[#allocation7 + $0x8] sm:$0xff] %vm1891, %v1882
    %1894 = vst.msk [vmem:[#allocation7 + $0x10] sm:$0xff] %vm1891, %v1883
    %1895 = vst.msk [vmem:[#allocation7 + $0x18] sm:$0xff] %vm1891, %v1884
    %1896 = vst.msk [vmem:[#allocation7 + $0x20] sm:$0xff] %vm1891, %v1885
    %1897 = vst.msk [vmem:[#allocation7 + $0x28] sm:$0xff] %vm1891, %v1886
    %1898 = vst.msk [vmem:[#allocation7 + $0x30] sm:$0xff] %vm1891, %v1887
    %1899 = vst.msk [vmem:[#allocation7 + $0x38] sm:$0xff] %vm1891, %v1888
    %1900 = vst.msk [vmem:[#allocation7 + $0x40] sm:$0xff] %vm1891, %v1889
    %1901 = vst.msk [vmem:[#allocation7 + $0x48] sm:$0xff] %vm1891, %v1890
    %v1902 = vld [vmem:[#allocation7] ss:$2 sm:$0xff]
    %s1903 = scalar_lea.vmem [#allocation7], 16
    %v1904 = vld [vmem:[%s1903] ss:$2 sm:$0xff]
    %s1905 = scalar_lea.vmem [#allocation7], 32
    %v1906 = vld [vmem:[%s1905] ss:$2 sm:$0xff]
    %s1907 = scalar_lea.vmem [#allocation7], 48
    %v1908 = vld [vmem:[%s1907] ss:$2 sm:$0xff]
    %s1909 = scalar_lea.vmem [#allocation7], 64
    %v1910 = vld [vmem:[%s1909] ss:$2 sm:$0xff]
    %s1911 = scalar_lea.vmem [#allocation7], 1
    %v1912 = vld [vmem:[%s1911] ss:$2 sm:$0xff]
    %s1913 = scalar_lea.vmem [#allocation7], 17
    %v1914 = vld [vmem:[%s1913] ss:$2 sm:$0xff]
    %s1915 = scalar_lea.vmem [#allocation7], 33
    %v1916 = vld [vmem:[%s1915] ss:$2 sm:$0xff]
    %s1917 = scalar_lea.vmem [#allocation7], 49
    %v1918 = vld [vmem:[%s1917] ss:$2 sm:$0xff]
    %s1919 = scalar_lea.vmem [#allocation7], 65
    %v1920 = vld [vmem:[%s1919] ss:$2 sm:$0xff]
    %v1921 = vmax.f32 %v1902, %v1912
    %v1922 = vmax.f32 %v1904, %v1914
    %v1923 = vmax.f32 %v1906, %v1916
    %v1924 = vmax.f32 %v1908, %v1918
    %v1925 = vmax.f32 %v1910, %v1920
    %1931 = vrot.lane.b32.xlu0 %v1921, 32
    %v1932 = vpop.permute.xlu0 %1931
    %1933 = vrot.lane.b32.xlu0 %v1922, 32
    %v1934 = vpop.permute.xlu0 %1933
    %1935 = vrot.lane.b32.xlu0 %v1923, 32
    %v1936 = vpop.permute.xlu0 %1935
    %1937 = vrot.lane.b32.xlu0 %v1924, 32
    %v1938 = vpop.permute.xlu0 %1937
    %1939 = vrot.lane.b32.xlu0 %v1925, 32
    %v1940 = vpop.permute.xlu0 %1939
    %vm1946 = vcmask 523520
    %1947 = vst.msk [vmem:[#allocation8] sm:$0xff] %vm1946, %v1932
    %1948 = vst.msk [vmem:[#allocation8 + $0x8] sm:$0xff] %vm1946, %v1934
    %1949 = vst.msk [vmem:[#allocation8 + $0x10] sm:$0xff] %vm1946, %v1936
    %1950 = vst.msk [vmem:[#allocation8 + $0x18] sm:$0xff] %vm1946, %v1938
    %1951 = vst.msk [vmem:[#allocation8 + $0x20] sm:$0xff] %vm1946, %v1940
    %1952 = vst.msk [vmem:[#allocation8 + $0x1] sm:$0xff] %vm1891, %v1921
    %1953 = vst.msk [vmem:[#allocation8 + $0x9] sm:$0xff] %vm1891, %v1922
    %1954 = vst.msk [vmem:[#allocation8 + $0x11] sm:$0xff] %vm1891, %v1923
    %1955 = vst.msk [vmem:[#allocation8 + $0x19] sm:$0xff] %vm1891, %v1924
    %vm1956 = vcmask 260096
    %1957 = vst.msk [vmem:[#allocation8 + $0x21] sm:$0x7f] %vm1956, %v1925
    %1958 = vrot.lane.b32.xlu0 %v1921, 64
    %v1959 = vpop.permute.xlu0 %1958
    %1960 = vrot.lane.b32.xlu0 %v1922, 64
    %v1961 = vpop.permute.xlu0 %1960
    %1962 = vrot.lane.b32.xlu0 %v1923, 64
    %v1963 = vpop.permute.xlu0 %1962
    %1964 = vrot.lane.b32.xlu0 %v1924, 64
    %v1965 = vpop.permute.xlu0 %1964
    %1966 = vrot.lane.b32.xlu0 %v1925, 64
    %v1967 = vpop.permute.xlu0 %1966
    %vm1973 = vcmask 785921
    %1974 = vst.msk [vmem:[#allocation8 - $0x1] sm:$0xfe] %vm1973, %v1959
    %vm1975 = vcmask 785920
    %1976 = vst.msk [vmem:[#allocation8 + $0x7] sm:$0xff] %vm1975, %v1961
    %1977 = vst.msk [vmem:[#allocation8 + $0xf] sm:$0xff] %vm1975, %v1963
    %1978 = vst.msk [vmem:[#allocation8 + $0x17] sm:$0xff] %vm1975, %v1965
    %1979 = vst.msk [vmem:[#allocation8 + $0x1f] sm:$0xff] %vm1975, %v1967
    %vm1980 = vcmask 253952
    %1981 = vst.msk [vmem:[#allocation8] sm:$0x1] %vm1980, %v1921
    %vm1982 = vcmask 781827
    %1983 = vst.msk [vmem:[#allocation8 + $0x10] sm:$0x8] %vm1982, %v1963
    %vm1984 = vcmask 258052
    %1985 = vst.msk [vmem:[#allocation8 + $0x10] sm:$0x10] %vm1984, %v1923
    %vm1986 = vcmask 785927
    %1987 = vst.msk [vmem:[#allocation8 + $0x20] sm:$0x80] %vm1986, %v1967
    %v1988 = vld [vmem:[#allocation8] sm:$0xff]
    %v1989 = vld [vmem:[#allocation8 + $0x8] sm:$0xff]
    %v1990 = vld [vmem:[#allocation8 + $0x10] sm:$0xff]
    %v1991 = vld [vmem:[#allocation8 + $0x18] sm:$0xff]
    %v1992 = vld [vmem:[#allocation8 + $0x20] sm:$0xff]
    %v1993 = vpack.c.bf16 %v1989, %v1988
    %v1994 = vpack.c.bf16 %v1991, %v1990
    %v1995 = vpack.c.bf16 %v1992, %v1992
    %v1996 = vld [vmem:[%s9] sm:$0xf]
    %v1997 = vld [vmem:[%s9 + $0x4] sm:$0xf]
    %v1998 = vld [vmem:[%s9 + $0x8] sm:$0xf]
    %v1999 = vld [vmem:[%s9 + $0xc] sm:$0xf]
    %v2000 = vld [vmem:[%s9 + $0x10] sm:$0xf]
    %v2001 = vld [vmem:[%s9 + $0x14] sm:$0xf]
    %v2002 = vld [vmem:[%s9 + $0x18] sm:$0xf]
    %v2003 = vld [vmem:[%s9 + $0x1c] sm:$0xf]
    %v2004 = vld [vmem:[%s9 + $0x20] sm:$0xf]
    %v2005 = vld [vmem:[%s9 + $0x24] sm:$0xf]
    %v2006 = vld [vmem:[%s9 + $0x28] sm:$0xf]
    %v2007 = vld [vmem:[%s9 + $0x2c] sm:$0xf]
    %v2008 = vld [vmem:[%s10] sm:$0x1]
    %v2010 = vperm.slane %v2008, 0
    %v2024 = vunpack.c.l.b16 %v1996
    %v2025 = vunpack.c.l.b16 %v1997
    %v2026 = vunpack.c.l.b16 %v1998
    %v2027 = vunpack.c.l.b16 %v1999
    %v2028 = vunpack.c.l.b16 %v2000
    %v2029 = vunpack.c.l.b16 %v2001
    %v2030 = vunpack.c.l.b16 %v2002
    %v2031 = vunpack.c.l.b16 %v2003
    %v2032 = vunpack.c.l.b16 %v2004
    %v2033 = vunpack.c.l.b16 %v2005
    %v2034 = vunpack.c.l.b16 %v2006
    %v2035 = vunpack.c.l.b16 %v2007
    %v2036 = vpack.c.b16 %v2025, %v2024
    %v2037 = vpack.c.b16 %v2027, %v2026
    %v2038 = vpack.c.b16 %v2029, %v2028
    %v2039 = vpack.c.b16 %v2031, %v2030
    %v2040 = vpack.c.b16 %v2033, %v2032
    %v2041 = vpack.c.b16 %v2035, %v2034
    %vm2048 = vcmask 785408
    %v2050 = vsel %vm2048, %v1993, 0
    %v2053 = vsel %vm2048, %v1994, 0
    %v2056 = vsel %vm2048, %v1995, 0
    %2058 = vmatpush.bf16.msra.mxu0 0
    %2059 = vmatpush.bf16.msra.mxu0 0
    %2060 = vmatpush.bf16.msra.mxu0 %v2041
    %2061 = vmatpush.bf16.msra.mxu0 %v2040
    %2062 = vmatpush.bf16.msra.mxu0 %v2039
    %2063 = vmatpush.bf16.msra.mxu0 %v2038
    %2064 = vmatpush.bf16.msra.mxu0 %v2037
    %2065 = vmatpush.bf16.msra.mxu0 %v2036
    %2066 = vmatmul.bf16.gmra.mxu0 %v2050
    %v2067 = vpop.f32.mrf.mxu0
    %v2068 = vadd.f32 %v2010, %v2067
    %v2069 = vpop.f32.mrf.mxu0
    %v2070 = vadd.f32 %v2010, %v2069
    %2071 = vmatmul.bf16.gmra.mxu0 %v2053
    %v2072 = vpop.f32.mrf.mxu0
    %v2073 = vadd.f32 %v2010, %v2072
    %v2074 = vpop.f32.mrf.mxu0
    %v2075 = vadd.f32 %v2010, %v2074
    %2076 = vmatmul.bf16.gmra.mxu0 %v2056
    %v2077 = vpop.f32.mrf.mxu0
    %v2078 = vadd.f32 %v2010, %v2077
    %v2079 = vpop.f32.mrf.mxu0
    %2080 = vdwg.mxu0
    %v2081 = vmax.f32 %v2068, 0.0
    %v2082 = vmax.f32 %v2070, 0.0
    %v2083 = vmax.f32 %v2073, 0.0
    %v2084 = vmax.f32 %v2075, 0.0
    %v2085 = vmax.f32 %v2078, 0.0
    %vm2086 = vcmask 523264
    %2087 = vst.msk [vmem:[#allocation9] sm:$0xff] %vm2086, %v2081
    %2088 = vst.msk [vmem:[#allocation9 + $0x8] sm:$0xff] %vm2086, %v2082
    %2089 = vst.msk [vmem:[#allocation9 + $0x10] sm:$0xff] %vm2086, %v2083
    %2090 = vst.msk [vmem:[#allocation9 + $0x18] sm:$0xff] %vm2086, %v2084
    %2091 = vst.msk [vmem:[#allocation9 + $0x20] sm:$0xff] %vm2086, %v2085
    %v2092 = vld [vmem:[#allocation9] ss:$2 sm:$0xff]
    %s2093 = scalar_lea.vmem [#allocation9], 16
    %v2094 = vld [vmem:[%s2093] ss:$2 sm:$0xff]
    %s2095 = scalar_lea.vmem [#allocation9], 32
    %v2096 = vld [vmem:[%s2095] ss:$2 sm:$0xf]
    %s2097 = scalar_lea.vmem [#allocation9], 1
    %v2098 = vld [vmem:[%s2097] ss:$2 sm:$0xff]
    %s2099 = scalar_lea.vmem [#allocation9], 17
    %v2100 = vld [vmem:[%s2099] ss:$2 sm:$0xff]
    %s2101 = scalar_lea.vmem [#allocation9], 33
    %v2102 = vld [vmem:[%s2101] ss:$2 sm:$0xf]
    %v2103 = vmax.f32 %v2092, %v2098
    %v2104 = vmax.f32 %v2094, %v2100
    %v2105 = vmax.f32 %v2096, %v2102
    %2106 = vst.msk [vmem:[#allocation10] sm:$0xff] %vm2086, %v2103
    %2107 = vst.msk [vmem:[#allocation10 + $0x8] sm:$0xff] %vm2086, %v2104
    %vm2108 = vcmask 519168
    %2109 = vst.msk [vmem:[#allocation10 + $0x10] sm:$0xf] %vm2108, %v2105
    %v2110 = vld [vmem:[#allocation10] ss:$10 sm:$0x3]
    %v2111 = vpack.c.bf16 %v2110, %v2110
    %v2112 = vld [vmem:[%s11] sm:$0xff]
    %v2113 = vld [vmem:[%s11 + $0x8] sm:$0xff]
    %v2114 = vld [vmem:[%s11 + $0x10] sm:$0xff]
    %v2115 = vld [vmem:[%s11 + $0x18] sm:$0xff]
    %v2116 = vld [vmem:[%s11 + $0x20] sm:$0xff]
    %v2117 = vld [vmem:[%s11 + $0x28] sm:$0xff]
    %v2118 = vld [vmem:[%s11 + $0x30] sm:$0xff]
    %v2119 = vld [vmem:[%s11 + $0x38] sm:$0xff]
    %v2120 = vld [vmem:[%s11 + $0x40] sm:$0xff]
    %v2121 = vld [vmem:[%s11 + $0x48] sm:$0xff]
    %v2122 = vld [vmem:[%s11 + $0x50] sm:$0xff]
    %v2123 = vld [vmem:[%s11 + $0x58] sm:$0xff]
    %v2124 = vld [vmem:[%s11 + $0x60] sm:$0xff]
    %v2125 = vld [vmem:[%s11 + $0x68] sm:$0xff]
    %v2126 = vld [vmem:[%s11 + $0x70] sm:$0xff]
    %v2127 = vld [vmem:[%s11 + $0x78] sm:$0xff]
    %s2128 = scalar_lea.vmem [#allocation10], 1
    %v2129 = vld [vmem:[%s2128] ss:$10 sm:$0x3]
    %v2130 = vpack.c.bf16 %v2129, %v2129
    %s2131 = scalar_lea.vmem %s11, 128
    %v2132 = vld [vmem:[%s2131] sm:$0xff]
    %v2133 = vld [vmem:[%s2131 + $0x8] sm:$0xff]
    %v2134 = vld [vmem:[%s2131 + $0x10] sm:$0xff]
    %v2135 = vld [vmem:[%s2131 + $0x18] sm:$0xff]
    %v2136 = vld [vmem:[%s2131 + $0x20] sm:$0xff]
    %v2137 = vld [vmem:[%s2131 + $0x28] sm:$0xff]
    %v2138 = vld [vmem:[%s2131 + $0x30] sm:$0xff]
    %v2139 = vld [vmem:[%s2131 + $0x38] sm:$0xff]
    %v2140 = vld [vmem:[%s2131 + $0x40] sm:$0xff]
    %v2141 = vld [vmem:[%s2131 + $0x48] sm:$0xff]
    %v2142 = vld [vmem:[%s2131 + $0x50] sm:$0xff]
    %v2143 = vld [vmem:[%s2131 + $0x58] sm:$0xff]
    %v2144 = vld [vmem:[%s2131 + $0x60] sm:$0xff]
    %v2145 = vld [vmem:[%s2131 + $0x68] sm:$0xff]
    %v2146 = vld [vmem:[%s2131 + $0x70] sm:$0xff]
    %v2147 = vld [vmem:[%s2131 + $0x78] sm:$0xff]
    %v2164 = vunpack.c.l.b16 %v2132
    %v2165 = vunpack.c.h.b16 %v2132
    %v2166 = vunpack.c.l.b16 %v2133
    %v2167 = vunpack.c.h.b16 %v2133
    %v2168 = vunpack.c.l.b16 %v2134
    %v2169 = vunpack.c.h.b16 %v2134
    %v2170 = vunpack.c.l.b16 %v2135
    %v2171 = vunpack.c.h.b16 %v2135
    %v2172 = vunpack.c.l.b16 %v2136
    %v2173 = vunpack.c.h.b16 %v2136
    %v2174 = vunpack.c.l.b16 %v2137
    %v2175 = vunpack.c.h.b16 %v2137
    %v2176 = vunpack.c.l.b16 %v2138
    %v2177 = vunpack.c.h.b16 %v2138
    %v2178 = vunpack.c.l.b16 %v2139
    %v2179 = vunpack.c.h.b16 %v2139
    %v2180 = vunpack.c.l.b16 %v2140
    %v2181 = vunpack.c.h.b16 %v2140
    %v2182 = vunpack.c.l.b16 %v2141
    %v2183 = vunpack.c.h.b16 %v2141
    %v2184 = vunpack.c.l.b16 %v2142
    %v2185 = vunpack.c.h.b16 %v2142
    %v2186 = vunpack.c.l.b16 %v2143
    %v2187 = vunpack.c.h.b16 %v2143
    %v2188 = vunpack.c.l.b16 %v2144
    %v2189 = vunpack.c.h.b16 %v2144
    %v2190 = vunpack.c.l.b16 %v2145
    %v2191 = vunpack.c.h.b16 %v2145
    %v2192 = vunpack.c.l.b16 %v2146
    %v2193 = vunpack.c.h.b16 %v2146
    %v2194 = vunpack.c.l.b16 %v2147
    %v2195 = vunpack.c.h.b16 %v2147
    %v2196 = vpack.c.b16 %v2168, %v2164
    %v2197 = vpack.c.b16 %v2169, %v2165
    %v2198 = vpack.c.b16 %v2170, %v2166
    %v2199 = vpack.c.b16 %v2171, %v2167
    %v2200 = vpack.c.b16 %v2176, %v2172
    %v2201 = vpack.c.b16 %v2177, %v2173
    %v2202 = vpack.c.b16 %v2178, %v2174
    %v2203 = vpack.c.b16 %v2179, %v2175
    %v2204 = vpack.c.b16 %v2184, %v2180
    %v2205 = vpack.c.b16 %v2185, %v2181
    %v2206 = vpack.c.b16 %v2186, %v2182
    %v2207 = vpack.c.b16 %v2187, %v2183
    %v2208 = vpack.c.b16 %v2192, %v2188
    %v2209 = vpack.c.b16 %v2193, %v2189
    %v2210 = vpack.c.b16 %v2194, %v2190
    %v2211 = vpack.c.b16 %v2195, %v2191
    %v2229 = vsel %vm2086, %v2130, 0
    %2231 = vmatpush.bf16.msra.mxu0 0
    %2232 = vmatpush.bf16.msra.mxu0 0
    %2233 = vmatpush.bf16.msra.mxu0 0
    %2234 = vmatpush.bf16.msra.mxu0 0
    %2235 = vmatpush.bf16.msra.mxu0 %v2208
    %2236 = vmatpush.bf16.msra.mxu0 %v2204
    %2237 = vmatpush.bf16.msra.mxu0 %v2200
    %2238 = vmatpush.bf16.msra.mxu0 %v2196
    %2239 = vmatmul.bf16.gmra.mxu0 %v2229
    %v2240 = vpop.f32.mrf.mxu0
    %v2241 = vadd.f32 0.0, %v2240
    %v2242 = vpop.f32.mrf.mxu0
    %2243 = vdwg.mxu0
    %2244 = vmatpush.bf16.msra.mxu0 0
    %2245 = vmatpush.bf16.msra.mxu0 0
    %2246 = vmatpush.bf16.msra.mxu0 0
    %2247 = vmatpush.bf16.msra.mxu0 0
    %2248 = vmatpush.bf16.msra.mxu0 %v2209
    %2249 = vmatpush.bf16.msra.mxu0 %v2205
    %2250 = vmatpush.bf16.msra.mxu0 %v2201
    %2251 = vmatpush.bf16.msra.mxu0 %v2197
    %2252 = vmatmul.bf16.gmra.mxu0 %v2229
    %v2253 = vpop.f32.mrf.mxu0
    %v2254 = vadd.f32 0.0, %v2253
    %v2255 = vpop.f32.mrf.mxu0
    %2256 = vdwg.mxu0
    %2257 = vmatpush.bf16.msra.mxu0 0
    %2258 = vmatpush.bf16.msra.mxu0 0
    %2259 = vmatpush.bf16.msra.mxu0 0
    %2260 = vmatpush.bf16.msra.mxu0 0
    %2261 = vmatpush.bf16.msra.mxu0 %v2210
    %2262 = vmatpush.bf16.msra.mxu0 %v2206
    %2263 = vmatpush.bf16.msra.mxu0 %v2202
    %2264 = vmatpush.bf16.msra.mxu0 %v2198
    %2265 = vmatmul.bf16.gmra.mxu0 %v2229
    %v2266 = vpop.f32.mrf.mxu0
    %v2267 = vadd.f32 0.0, %v2266
    %v2268 = vpop.f32.mrf.mxu0
    %2269 = vdwg.mxu0
    %2270 = vmatpush.bf16.msra.mxu0 0
    %2271 = vmatpush.bf16.msra.mxu0 0
    %2272 = vmatpush.bf16.msra.mxu0 0
    %2273 = vmatpush.bf16.msra.mxu0 0
    %2274 = vmatpush.bf16.msra.mxu0 %v2211
    %2275 = vmatpush.bf16.msra.mxu0 %v2207
    %2276 = vmatpush.bf16.msra.mxu0 %v2203
    %2277 = vmatpush.bf16.msra.mxu0 %v2199
    %2278 = vmatmul.bf16.gmra.mxu0 %v2229
    %v2279 = vpop.f32.mrf.mxu0
    %v2280 = vadd.f32 0.0, %v2279
    %v2281 = vpop.f32.mrf.mxu0
    %2282 = vdwg.mxu0
    %v2299 = vunpack.c.l.b16 %v2112
    %v2300 = vunpack.c.h.b16 %v2112
    %v2301 = vunpack.c.l.b16 %v2113
    %v2302 = vunpack.c.h.b16 %v2113
    %v2303 = vunpack.c.l.b16 %v2114
    %v2304 = vunpack.c.h.b16 %v2114
    %v2305 = vunpack.c.l.b16 %v2115
    %v2306 = vunpack.c.h.b16 %v2115
    %v2307 = vunpack.c.l.b16 %v2116
    %v2308 = vunpack.c.h.b16 %v2116
    %v2309 = vunpack.c.l.b16 %v2117
    %v2310 = vunpack.c.h.b16 %v2117
    %v2311 = vunpack.c.l.b16 %v2118
    %v2312 = vunpack.c.h.b16 %v2118
    %v2313 = vunpack.c.l.b16 %v2119
    %v2314 = vunpack.c.h.b16 %v2119
    %v2315 = vunpack.c.l.b16 %v2120
    %v2316 = vunpack.c.h.b16 %v2120
    %v2317 = vunpack.c.l.b16 %v2121
    %v2318 = vunpack.c.h.b16 %v2121
    %v2319 = vunpack.c.l.b16 %v2122
    %v2320 = vunpack.c.h.b16 %v2122
    %v2321 = vunpack.c.l.b16 %v2123
    %v2322 = vunpack.c.h.b16 %v2123
    %v2323 = vunpack.c.l.b16 %v2124
    %v2324 = vunpack.c.h.b16 %v2124
    %v2325 = vunpack.c.l.b16 %v2125
    %v2326 = vunpack.c.h.b16 %v2125
    %v2327 = vunpack.c.l.b16 %v2126
    %v2328 = vunpack.c.h.b16 %v2126
    %v2329 = vunpack.c.l.b16 %v2127
    %v2330 = vunpack.c.h.b16 %v2127
    %v2331 = vpack.c.b16 %v2303, %v2299
    %v2332 = vpack.c.b16 %v2304, %v2300
    %v2333 = vpack.c.b16 %v2305, %v2301
    %v2334 = vpack.c.b16 %v2306, %v2302
    %v2335 = vpack.c.b16 %v2311, %v2307
    %v2336 = vpack.c.b16 %v2312, %v2308
    %v2337 = vpack.c.b16 %v2313, %v2309
    %v2338 = vpack.c.b16 %v2314, %v2310
    %v2339 = vpack.c.b16 %v2319, %v2315
    %v2340 = vpack.c.b16 %v2320, %v2316
    %v2341 = vpack.c.b16 %v2321, %v2317
    %v2342 = vpack.c.b16 %v2322, %v2318
    %v2343 = vpack.c.b16 %v2327, %v2323
    %v2344 = vpack.c.b16 %v2328, %v2324
    %v2345 = vpack.c.b16 %v2329, %v2325
    %v2346 = vpack.c.b16 %v2330, %v2326
    %v2364 = vsel %vm2086, %v2111, 0
    %2366 = vmatpush.bf16.msra.mxu0 0
    %2367 = vmatpush.bf16.msra.mxu0 0
    %2368 = vmatpush.bf16.msra.mxu0 0
    %2369 = vmatpush.bf16.msra.mxu0 0
    %2370 = vmatpush.bf16.msra.mxu0 %v2343
    %2371 = vmatpush.bf16.msra.mxu0 %v2339
    %2372 = vmatpush.bf16.msra.mxu0 %v2335
    %2373 = vmatpush.bf16.msra.mxu0 %v2331
    %2374 = vmatmul.bf16.gmra.mxu0 %v2364
    %v2375 = vpop.f32.mrf.mxu0
    %v2376 = vadd.f32 %v2241, %v2375
    %v2377 = vpop.f32.mrf.mxu0
    %2378 = vdwg.mxu0
    %2379 = vmatpush.bf16.msra.mxu0 0
    %2380 = vmatpush.bf16.msra.mxu0 0
    %2381 = vmatpush.bf16.msra.mxu0 0
    %2382 = vmatpush.bf16.msra.mxu0 0
    %2383 = vmatpush.bf16.msra.mxu0 %v2344
    %2384 = vmatpush.bf16.msra.mxu0 %v2340
    %2385 = vmatpush.bf16.msra.mxu0 %v2336
    %2386 = vmatpush.bf16.msra.mxu0 %v2332
    %2387 = vmatmul.bf16.gmra.mxu0 %v2364
    %v2388 = vpop.f32.mrf.mxu0
    %v2389 = vadd.f32 %v2254, %v2388
    %v2390 = vpop.f32.mrf.mxu0
    %2391 = vdwg.mxu0
    %2392 = vmatpush.bf16.msra.mxu0 0
    %2393 = vmatpush.bf16.msra.mxu0 0
    %2394 = vmatpush.bf16.msra.mxu0 0
    %2395 = vmatpush.bf16.msra.mxu0 0
    %2396 = vmatpush.bf16.msra.mxu0 %v2345
    %2397 = vmatpush.bf16.msra.mxu0 %v2341
    %2398 = vmatpush.bf16.msra.mxu0 %v2337
    %2399 = vmatpush.bf16.msra.mxu0 %v2333
    %2400 = vmatmul.bf16.gmra.mxu0 %v2364
    %v2401 = vpop.f32.mrf.mxu0
    %v2402 = vadd.f32 %v2267, %v2401
    %v2403 = vpop.f32.mrf.mxu0
    %2404 = vdwg.mxu0
    %2405 = vmatpush.bf16.msra.mxu0 0
    %2406 = vmatpush.bf16.msra.mxu0 0
    %2407 = vmatpush.bf16.msra.mxu0 0
    %2408 = vmatpush.bf16.msra.mxu0 0
    %2409 = vmatpush.bf16.msra.mxu0 %v2346
    %2410 = vmatpush.bf16.msra.mxu0 %v2342
    %2411 = vmatpush.bf16.msra.mxu0 %v2338
    %2412 = vmatpush.bf16.msra.mxu0 %v2334
    %2413 = vmatmul.bf16.gmra.mxu0 %v2364
    %v2414 = vpop.f32.mrf.mxu0
    %v2415 = vadd.f32 %v2280, %v2414
    %v2416 = vpop.f32.mrf.mxu0
    %2417 = vdwg.mxu0
    %s2418 = scalar_lea.vmem [#allocation10], 2
    %v2419 = vld [vmem:[%s2418] ss:$10 sm:$0x3]
    %v2420 = vpack.c.bf16 %v2419, %v2419
    %s2421 = scalar_lea.vmem %s11, 256
    %v2422 = vld [vmem:[%s2421] sm:$0xff]
    %v2423 = vld [vmem:[%s2421 + $0x8] sm:$0xff]
    %v2424 = vld [vmem:[%s2421 + $0x10] sm:$0xff]
    %v2425 = vld [vmem:[%s2421 + $0x18] sm:$0xff]
    %v2426 = vld [vmem:[%s2421 + $0x20] sm:$0xff]
    %v2427 = vld [vmem:[%s2421 + $0x28] sm:$0xff]
    %v2428 = vld [vmem:[%s2421 + $0x30] sm:$0xff]
    %v2429 = vld [vmem:[%s2421 + $0x38] sm:$0xff]
    %v2430 = vld [vmem:[%s2421 + $0x40] sm:$0xff]
    %v2431 = vld [vmem:[%s2421 + $0x48] sm:$0xff]
    %v2432 = vld [vmem:[%s2421 + $0x50] sm:$0xff]
    %v2433 = vld [vmem:[%s2421 + $0x58] sm:$0xff]
    %v2434 = vld [vmem:[%s2421 + $0x60] sm:$0xff]
    %v2435 = vld [vmem:[%s2421 + $0x68] sm:$0xff]
    %v2436 = vld [vmem:[%s2421 + $0x70] sm:$0xff]
    %v2437 = vld [vmem:[%s2421 + $0x78] sm:$0xff]
    %v2454 = vunpack.c.l.b16 %v2422
    %v2455 = vunpack.c.h.b16 %v2422
    %v2456 = vunpack.c.l.b16 %v2423
    %v2457 = vunpack.c.h.b16 %v2423
    %v2458 = vunpack.c.l.b16 %v2424
    %v2459 = vunpack.c.h.b16 %v2424
    %v2460 = vunpack.c.l.b16 %v2425
    %v2461 = vunpack.c.h.b16 %v2425
    %v2462 = vunpack.c.l.b16 %v2426
    %v2463 = vunpack.c.h.b16 %v2426
    %v2464 = vunpack.c.l.b16 %v2427
    %v2465 = vunpack.c.h.b16 %v2427
    %v2466 = vunpack.c.l.b16 %v2428
    %v2467 = vunpack.c.h.b16 %v2428
    %v2468 = vunpack.c.l.b16 %v2429
    %v2469 = vunpack.c.h.b16 %v2429
    %v2470 = vunpack.c.l.b16 %v2430
    %v2471 = vunpack.c.h.b16 %v2430
    %v2472 = vunpack.c.l.b16 %v2431
    %v2473 = vunpack.c.h.b16 %v2431
    %v2474 = vunpack.c.l.b16 %v2432
    %v2475 = vunpack.c.h.b16 %v2432
    %v2476 = vunpack.c.l.b16 %v2433
    %v2477 = vunpack.c.h.b16 %v2433
    %v2478 = vunpack.c.l.b16 %v2434
    %v2479 = vunpack.c.h.b16 %v2434
    %v2480 = vunpack.c.l.b16 %v2435
    %v2481 = vunpack.c.h.b16 %v2435
    %v2482 = vunpack.c.l.b16 %v2436
    %v2483 = vunpack.c.h.b16 %v2436
    %v2484 = vunpack.c.l.b16 %v2437
    %v2485 = vunpack.c.h.b16 %v2437
    %v2486 = vpack.c.b16 %v2458, %v2454
    %v2487 = vpack.c.b16 %v2459, %v2455
    %v2488 = vpack.c.b16 %v2460, %v2456
    %v2489 = vpack.c.b16 %v2461, %v2457
    %v2490 = vpack.c.b16 %v2466, %v2462
    %v2491 = vpack.c.b16 %v2467, %v2463
    %v2492 = vpack.c.b16 %v2468, %v2464
    %v2493 = vpack.c.b16 %v2469, %v2465
    %v2494 = vpack.c.b16 %v2474, %v2470
    %v2495 = vpack.c.b16 %v2475, %v2471
    %v2496 = vpack.c.b16 %v2476, %v2472
    %v2497 = vpack.c.b16 %v2477, %v2473
    %v2498 = vpack.c.b16 %v2482, %v2478
    %v2499 = vpack.c.b16 %v2483, %v2479
    %v2500 = vpack.c.b16 %v2484, %v2480
    %v2501 = vpack.c.b16 %v2485, %v2481
    %v2519 = vsel %vm2086, %v2420, 0
    %2521 = vmatpush.bf16.msra.mxu0 0
    %2522 = vmatpush.bf16.msra.mxu0 0
    %2523 = vmatpush.bf16.msra.mxu0 0
    %2524 = vmatpush.bf16.msra.mxu0 0
    %2525 = vmatpush.bf16.msra.mxu0 %v2498
    %2526 = vmatpush.bf16.msra.mxu0 %v2494
    %2527 = vmatpush.bf16.msra.mxu0 %v2490
    %2528 = vmatpush.bf16.msra.mxu0 %v2486
    %2529 = vmatmul.bf16.gmra.mxu0 %v2519
    %v2530 = vpop.f32.mrf.mxu0
    %v2531 = vadd.f32 0.0, %v2530
    %v2532 = vpop.f32.mrf.mxu0
    %2533 = vdwg.mxu0
    %2534 = vmatpush.bf16.msra.mxu0 0
    %2535 = vmatpush.bf16.msra.mxu0 0
    %2536 = vmatpush.bf16.msra.mxu0 0
    %2537 = vmatpush.bf16.msra.mxu0 0
    %2538 = vmatpush.bf16.msra.mxu0 %v2499
    %2539 = vmatpush.bf16.msra.mxu0 %v2495
    %2540 = vmatpush.bf16.msra.mxu0 %v2491
    %2541 = vmatpush.bf16.msra.mxu0 %v2487
    %2542 = vmatmul.bf16.gmra.mxu0 %v2519
    %v2543 = vpop.f32.mrf.mxu0
    %v2544 = vadd.f32 0.0, %v2543
    %v2545 = vpop.f32.mrf.mxu0
    %2546 = vdwg.mxu0
    %2547 = vmatpush.bf16.msra.mxu0 0
    %2548 = vmatpush.bf16.msra.mxu0 0
    %2549 = vmatpush.bf16.msra.mxu0 0
    %2550 = vmatpush.bf16.msra.mxu0 0
    %2551 = vmatpush.bf16.msra.mxu0 %v2500
    %2552 = vmatpush.bf16.msra.mxu0 %v2496
    %2553 = vmatpush.bf16.msra.mxu0 %v2492
    %2554 = vmatpush.bf16.msra.mxu0 %v2488
    %2555 = vmatmul.bf16.gmra.mxu0 %v2519
    %v2556 = vpop.f32.mrf.mxu0
    %v2557 = vadd.f32 0.0, %v2556
    %v2558 = vpop.f32.mrf.mxu0
    %2559 = vdwg.mxu0
    %2560 = vmatpush.bf16.msra.mxu0 0
    %2561 = vmatpush.bf16.msra.mxu0 0
    %2562 = vmatpush.bf16.msra.mxu0 0
    %2563 = vmatpush.bf16.msra.mxu0 0
    %2564 = vmatpush.bf16.msra.mxu0 %v2501
    %2565 = vmatpush.bf16.msra.mxu0 %v2497
    %2566 = vmatpush.bf16.msra.mxu0 %v2493
    %2567 = vmatpush.bf16.msra.mxu0 %v2489
    %2568 = vmatmul.bf16.gmra.mxu0 %v2519
    %v2569 = vpop.f32.mrf.mxu0
    %v2570 = vadd.f32 0.0, %v2569
    %v2571 = vpop.f32.mrf.mxu0
    %2572 = vdwg.mxu0
    %v2573 = vadd.f32 %v2376, %v2531
    %v2574 = vadd.f32 %v2389, %v2544
    %v2575 = vadd.f32 %v2402, %v2557
    %v2576 = vadd.f32 %v2415, %v2570
    %s2577 = scalar_lea.vmem [#allocation10], 3
    %v2578 = vld [vmem:[%s2577] ss:$10 sm:$0x3]
    %v2579 = vpack.c.bf16 %v2578, %v2578
    %s2580 = scalar_lea.vmem %s11, 384
    %v2581 = vld [vmem:[%s2580] sm:$0xff]
    %v2582 = vld [vmem:[%s2580 + $0x8] sm:$0xff]
    %v2583 = vld [vmem:[%s2580 + $0x10] sm:$0xff]
    %v2584 = vld [vmem:[%s2580 + $0x18] sm:$0xff]
    %v2585 = vld [vmem:[%s2580 + $0x20] sm:$0xff]
    %v2586 = vld [vmem:[%s2580 + $0x28] sm:$0xff]
    %v2587 = vld [vmem:[%s2580 + $0x30] sm:$0xff]
    %v2588 = vld [vmem:[%s2580 + $0x38] sm:$0xff]
    %v2589 = vld [vmem:[%s2580 + $0x40] sm:$0xff]
    %v2590 = vld [vmem:[%s2580 + $0x48] sm:$0xff]
    %v2591 = vld [vmem:[%s2580 + $0x50] sm:$0xff]
    %v2592 = vld [vmem:[%s2580 + $0x58] sm:$0xff]
    %v2593 = vld [vmem:[%s2580 + $0x60] sm:$0xff]
    %v2594 = vld [vmem:[%s2580 + $0x68] sm:$0xff]
    %v2595 = vld [vmem:[%s2580 + $0x70] sm:$0xff]
    %v2596 = vld [vmem:[%s2580 + $0x78] sm:$0xff]
    %v2613 = vunpack.c.l.b16 %v2581
    %v2614 = vunpack.c.h.b16 %v2581
    %v2615 = vunpack.c.l.b16 %v2582
    %v2616 = vunpack.c.h.b16 %v2582
    %v2617 = vunpack.c.l.b16 %v2583
    %v2618 = vunpack.c.h.b16 %v2583
    %v2619 = vunpack.c.l.b16 %v2584
    %v2620 = vunpack.c.h.b16 %v2584
    %v2621 = vunpack.c.l.b16 %v2585
    %v2622 = vunpack.c.h.b16 %v2585
    %v2623 = vunpack.c.l.b16 %v2586
    %v2624 = vunpack.c.h.b16 %v2586
    %v2625 = vunpack.c.l.b16 %v2587
    %v2626 = vunpack.c.h.b16 %v2587
    %v2627 = vunpack.c.l.b16 %v2588
    %v2628 = vunpack.c.h.b16 %v2588
    %v2629 = vunpack.c.l.b16 %v2589
    %v2630 = vunpack.c.h.b16 %v2589
    %v2631 = vunpack.c.l.b16 %v2590
    %v2632 = vunpack.c.h.b16 %v2590
    %v2633 = vunpack.c.l.b16 %v2591
    %v2634 = vunpack.c.h.b16 %v2591
    %v2635 = vunpack.c.l.b16 %v2592
    %v2636 = vunpack.c.h.b16 %v2592
    %v2637 = vunpack.c.l.b16 %v2593
    %v2638 = vunpack.c.h.b16 %v2593
    %v2639 = vunpack.c.l.b16 %v2594
    %v2640 = vunpack.c.h.b16 %v2594
    %v2641 = vunpack.c.l.b16 %v2595
    %v2642 = vunpack.c.h.b16 %v2595
    %v2643 = vunpack.c.l.b16 %v2596
    %v2644 = vunpack.c.h.b16 %v2596
    %v2645 = vpack.c.b16 %v2617, %v2613
    %v2646 = vpack.c.b16 %v2618, %v2614
    %v2647 = vpack.c.b16 %v2619, %v2615
    %v2648 = vpack.c.b16 %v2620, %v2616
    %v2649 = vpack.c.b16 %v2625, %v2621
    %v2650 = vpack.c.b16 %v2626, %v2622
    %v2651 = vpack.c.b16 %v2627, %v2623
    %v2652 = vpack.c.b16 %v2628, %v2624
    %v2653 = vpack.c.b16 %v2633, %v2629
    %v2654 = vpack.c.b16 %v2634, %v2630
    %v2655 = vpack.c.b16 %v2635, %v2631
    %v2656 = vpack.c.b16 %v2636, %v2632
    %v2657 = vpack.c.b16 %v2641, %v2637
    %v2658 = vpack.c.b16 %v2642, %v2638
    %v2659 = vpack.c.b16 %v2643, %v2639
    %v2660 = vpack.c.b16 %v2644, %v2640
    %v2678 = vsel %vm2086, %v2579, 0
    %2680 = vmatpush.bf16.msra.mxu0 0
    %2681 = vmatpush.bf16.msra.mxu0 0
    %2682 = vmatpush.bf16.msra.mxu0 0
    %2683 = vmatpush.bf16.msra.mxu0 0
    %2684 = vmatpush.bf16.msra.mxu0 %v2657
    %2685 = vmatpush.bf16.msra.mxu0 %v2653
    %2686 = vmatpush.bf16.msra.mxu0 %v2649
    %2687 = vmatpush.bf16.msra.mxu0 %v2645
    %2688 = vmatmul.bf16.gmra.mxu0 %v2678
    %v2689 = vpop.f32.mrf.mxu0
    %v2690 = vadd.f32 0.0, %v2689
    %v2691 = vpop.f32.mrf.mxu0
    %2692 = vdwg.mxu0
    %2693 = vmatpush.bf16.msra.mxu0 0
    %2694 = vmatpush.bf16.msra.mxu0 0
    %2695 = vmatpush.bf16.msra.mxu0 0
    %2696 = vmatpush.bf16.msra.mxu0 0
    %2697 = vmatpush.bf16.msra.mxu0 %v2658
    %2698 = vmatpush.bf16.msra.mxu0 %v2654
    %2699 = vmatpush.bf16.msra.mxu0 %v2650
    %2700 = vmatpush.bf16.msra.mxu0 %v2646
    %2701 = vmatmul.bf16.gmra.mxu0 %v2678
    %v2702 = vpop.f32.mrf.mxu0
    %v2703 = vadd.f32 0.0, %v2702
    %v2704 = vpop.f32.mrf.mxu0
    %2705 = vdwg.mxu0
    %2706 = vmatpush.bf16.msra.mxu0 0
    %2707 = vmatpush.bf16.msra.mxu0 0
    %2708 = vmatpush.bf16.msra.mxu0 0
    %2709 = vmatpush.bf16.msra.mxu0 0
    %2710 = vmatpush.bf16.msra.mxu0 %v2659
    %2711 = vmatpush.bf16.msra.mxu0 %v2655
    %2712 = vmatpush.bf16.msra.mxu0 %v2651
    %2713 = vmatpush.bf16.msra.mxu0 %v2647
    %2714 = vmatmul.bf16.gmra.mxu0 %v2678
    %v2715 = vpop.f32.mrf.mxu0
    %v2716 = vadd.f32 0.0, %v2715
    %v2717 = vpop.f32.mrf.mxu0
    %2718 = vdwg.mxu0
    %2719 = vmatpush.bf16.msra.mxu0 0
    %2720 = vmatpush.bf16.msra.mxu0 0
    %2721 = vmatpush.bf16.msra.mxu0 0
    %2722 = vmatpush.bf16.msra.mxu0 0
    %2723 = vmatpush.bf16.msra.mxu0 %v2660
    %2724 = vmatpush.bf16.msra.mxu0 %v2656
    %2725 = vmatpush.bf16.msra.mxu0 %v2652
    %2726 = vmatpush.bf16.msra.mxu0 %v2648
    %2727 = vmatmul.bf16.gmra.mxu0 %v2678
    %v2728 = vpop.f32.mrf.mxu0
    %v2729 = vadd.f32 0.0, %v2728
    %v2730 = vpop.f32.mrf.mxu0
    %2731 = vdwg.mxu0
    %v2732 = vadd.f32 %v2573, %v2690
    %v2733 = vadd.f32 %v2574, %v2703
    %v2734 = vadd.f32 %v2575, %v2716
    %v2735 = vadd.f32 %v2576, %v2729
    %s2736 = scalar_lea.vmem [#allocation10], 4
    %v2737 = vld [vmem:[%s2736] ss:$10 sm:$0x3]
    %v2738 = vpack.c.bf16 %v2737, %v2737
    %s2739 = scalar_lea.vmem %s11, 512
    %v2740 = vld [vmem:[%s2739] sm:$0xff]
    %v2741 = vld [vmem:[%s2739 + $0x8] sm:$0xff]
    %v2742 = vld [vmem:[%s2739 + $0x10] sm:$0xff]
    %v2743 = vld [vmem:[%s2739 + $0x18] sm:$0xff]
    %v2744 = vld [vmem:[%s2739 + $0x20] sm:$0xff]
    %v2745 = vld [vmem:[%s2739 + $0x28] sm:$0xff]
    %v2746 = vld [vmem:[%s2739 + $0x30] sm:$0xff]
    %v2747 = vld [vmem:[%s2739 + $0x38] sm:$0xff]
    %v2748 = vld [vmem:[%s2739 + $0x40] sm:$0xff]
    %v2749 = vld [vmem:[%s2739 + $0x48] sm:$0xff]
    %v2750 = vld [vmem:[%s2739 + $0x50] sm:$0xff]
    %v2751 = vld [vmem:[%s2739 + $0x58] sm:$0xff]
    %v2752 = vld [vmem:[%s2739 + $0x60] sm:$0xff]
    %v2753 = vld [vmem:[%s2739 + $0x68] sm:$0xff]
    %v2754 = vld [vmem:[%s2739 + $0x70] sm:$0xff]
    %v2755 = vld [vmem:[%s2739 + $0x78] sm:$0xff]
    %v2772 = vunpack.c.l.b16 %v2740
    %v2773 = vunpack.c.h.b16 %v2740
    %v2774 = vunpack.c.l.b16 %v2741
    %v2775 = vunpack.c.h.b16 %v2741
    %v2776 = vunpack.c.l.b16 %v2742
    %v2777 = vunpack.c.h.b16 %v2742
    %v2778 = vunpack.c.l.b16 %v2743
    %v2779 = vunpack.c.h.b16 %v2743
    %v2780 = vunpack.c.l.b16 %v2744
    %v2781 = vunpack.c.h.b16 %v2744
    %v2782 = vunpack.c.l.b16 %v2745
    %v2783 = vunpack.c.h.b16 %v2745
    %v2784 = vunpack.c.l.b16 %v2746
    %v2785 = vunpack.c.h.b16 %v2746
    %v2786 = vunpack.c.l.b16 %v2747
    %v2787 = vunpack.c.h.b16 %v2747
    %v2788 = vunpack.c.l.b16 %v2748
    %v2789 = vunpack.c.h.b16 %v2748
    %v2790 = vunpack.c.l.b16 %v2749
    %v2791 = vunpack.c.h.b16 %v2749
    %v2792 = vunpack.c.l.b16 %v2750
    %v2793 = vunpack.c.h.b16 %v2750
    %v2794 = vunpack.c.l.b16 %v2751
    %v2795 = vunpack.c.h.b16 %v2751
    %v2796 = vunpack.c.l.b16 %v2752
    %v2797 = vunpack.c.h.b16 %v2752
    %v2798 = vunpack.c.l.b16 %v2753
    %v2799 = vunpack.c.h.b16 %v2753
    %v2800 = vunpack.c.l.b16 %v2754
    %v2801 = vunpack.c.h.b16 %v2754
    %v2802 = vunpack.c.l.b16 %v2755
    %v2803 = vunpack.c.h.b16 %v2755
    %v2804 = vpack.c.b16 %v2776, %v2772
    %v2805 = vpack.c.b16 %v2777, %v2773
    %v2806 = vpack.c.b16 %v2778, %v2774
    %v2807 = vpack.c.b16 %v2779, %v2775
    %v2808 = vpack.c.b16 %v2784, %v2780
    %v2809 = vpack.c.b16 %v2785, %v2781
    %v2810 = vpack.c.b16 %v2786, %v2782
    %v2811 = vpack.c.b16 %v2787, %v2783
    %v2812 = vpack.c.b16 %v2792, %v2788
    %v2813 = vpack.c.b16 %v2793, %v2789
    %v2814 = vpack.c.b16 %v2794, %v2790
    %v2815 = vpack.c.b16 %v2795, %v2791
    %v2816 = vpack.c.b16 %v2800, %v2796
    %v2817 = vpack.c.b16 %v2801, %v2797
    %v2818 = vpack.c.b16 %v2802, %v2798
    %v2819 = vpack.c.b16 %v2803, %v2799
    %v2837 = vsel %vm2086, %v2738, 0
    %2839 = vmatpush.bf16.msra.mxu0 0
    %2840 = vmatpush.bf16.msra.mxu0 0
    %2841 = vmatpush.bf16.msra.mxu0 0
    %2842 = vmatpush.bf16.msra.mxu0 0
    %2843 = vmatpush.bf16.msra.mxu0 %v2816
    %2844 = vmatpush.bf16.msra.mxu0 %v2812
    %2845 = vmatpush.bf16.msra.mxu0 %v2808
    %2846 = vmatpush.bf16.msra.mxu0 %v2804
    %2847 = vmatmul.bf16.gmra.mxu0 %v2837
    %v2848 = vpop.f32.mrf.mxu0
    %v2849 = vadd.f32 0.0, %v2848
    %v2850 = vpop.f32.mrf.mxu0
    %2851 = vdwg.mxu0
    %2852 = vmatpush.bf16.msra.mxu0 0
    %2853 = vmatpush.bf16.msra.mxu0 0
    %2854 = vmatpush.bf16.msra.mxu0 0
    %2855 = vmatpush.bf16.msra.mxu0 0
    %2856 = vmatpush.bf16.msra.mxu0 %v2817
    %2857 = vmatpush.bf16.msra.mxu0 %v2813
    %2858 = vmatpush.bf16.msra.mxu0 %v2809
    %2859 = vmatpush.bf16.msra.mxu0 %v2805
    %2860 = vmatmul.bf16.gmra.mxu0 %v2837
    %v2861 = vpop.f32.mrf.mxu0
    %v2862 = vadd.f32 0.0, %v2861
    %v2863 = vpop.f32.mrf.mxu0
    %2864 = vdwg.mxu0
    %2865 = vmatpush.bf16.msra.mxu0 0
    %2866 = vmatpush.bf16.msra.mxu0 0
    %2867 = vmatpush.bf16.msra.mxu0 0
    %2868 = vmatpush.bf16.msra.mxu0 0
    %2869 = vmatpush.bf16.msra.mxu0 %v2818
    %2870 = vmatpush.bf16.msra.mxu0 %v2814
    %2871 = vmatpush.bf16.msra.mxu0 %v2810
    %2872 = vmatpush.bf16.msra.mxu0 %v2806
    %2873 = vmatmul.bf16.gmra.mxu0 %v2837
    %v2874 = vpop.f32.mrf.mxu0
    %v2875 = vadd.f32 0.0, %v2874
    %v2876 = vpop.f32.mrf.mxu0
    %2877 = vdwg.mxu0
    %2878 = vmatpush.bf16.msra.mxu0 0
    %2879 = vmatpush.bf16.msra.mxu0 0
    %2880 = vmatpush.bf16.msra.mxu0 0
    %2881 = vmatpush.bf16.msra.mxu0 0
    %2882 = vmatpush.bf16.msra.mxu0 %v2819
    %2883 = vmatpush.bf16.msra.mxu0 %v2815
    %2884 = vmatpush.bf16.msra.mxu0 %v2811
    %2885 = vmatpush.bf16.msra.mxu0 %v2807
    %2886 = vmatmul.bf16.gmra.mxu0 %v2837
    %v2887 = vpop.f32.mrf.mxu0
    %v2888 = vadd.f32 0.0, %v2887
    %v2889 = vpop.f32.mrf.mxu0
    %2890 = vdwg.mxu0
    %v2891 = vadd.f32 %v2732, %v2849
    %v2892 = vadd.f32 %v2733, %v2862
    %v2893 = vadd.f32 %v2734, %v2875
    %v2894 = vadd.f32 %v2735, %v2888
    %s2895 = scalar_lea.vmem [#allocation10], 5
    %v2896 = vld [vmem:[%s2895] ss:$10 sm:$0x3]
    %v2897 = vpack.c.bf16 %v2896, %v2896
    %s2898 = scalar_lea.vmem %s11, 640
    %v2899 = vld [vmem:[%s2898] sm:$0xff]
    %v2900 = vld [vmem:[%s2898 + $0x8] sm:$0xff]
    %v2901 = vld [vmem:[%s2898 + $0x10] sm:$0xff]
    %v2902 = vld [vmem:[%s2898 + $0x18] sm:$0xff]
    %v2903 = vld [vmem:[%s2898 + $0x20] sm:$0xff]
    %v2904 = vld [vmem:[%s2898 + $0x28] sm:$0xff]
    %v2905 = vld [vmem:[%s2898 + $0x30] sm:$0xff]
    %v2906 = vld [vmem:[%s2898 + $0x38] sm:$0xff]
    %v2907 = vld [vmem:[%s2898 + $0x40] sm:$0xff]
    %v2908 = vld [vmem:[%s2898 + $0x48] sm:$0xff]
    %v2909 = vld [vmem:[%s2898 + $0x50] sm:$0xff]
    %v2910 = vld [vmem:[%s2898 + $0x58] sm:$0xff]
    %v2911 = vld [vmem:[%s2898 + $0x60] sm:$0xff]
    %v2912 = vld [vmem:[%s2898 + $0x68] sm:$0xff]
    %v2913 = vld [vmem:[%s2898 + $0x70] sm:$0xff]
    %v2914 = vld [vmem:[%s2898 + $0x78] sm:$0xff]
    %v2931 = vunpack.c.l.b16 %v2899
    %v2932 = vunpack.c.h.b16 %v2899
    %v2933 = vunpack.c.l.b16 %v2900
    %v2934 = vunpack.c.h.b16 %v2900
    %v2935 = vunpack.c.l.b16 %v2901
    %v2936 = vunpack.c.h.b16 %v2901
    %v2937 = vunpack.c.l.b16 %v2902
    %v2938 = vunpack.c.h.b16 %v2902
    %v2939 = vunpack.c.l.b16 %v2903
    %v2940 = vunpack.c.h.b16 %v2903
    %v2941 = vunpack.c.l.b16 %v2904
    %v2942 = vunpack.c.h.b16 %v2904
    %v2943 = vunpack.c.l.b16 %v2905
    %v2944 = vunpack.c.h.b16 %v2905
    %v2945 = vunpack.c.l.b16 %v2906
    %v2946 = vunpack.c.h.b16 %v2906
    %v2947 = vunpack.c.l.b16 %v2907
    %v2948 = vunpack.c.h.b16 %v2907
    %v2949 = vunpack.c.l.b16 %v2908
    %v2950 = vunpack.c.h.b16 %v2908
    %v2951 = vunpack.c.l.b16 %v2909
    %v2952 = vunpack.c.h.b16 %v2909
    %v2953 = vunpack.c.l.b16 %v2910
    %v2954 = vunpack.c.h.b16 %v2910
    %v2955 = vunpack.c.l.b16 %v2911
    %v2956 = vunpack.c.h.b16 %v2911
    %v2957 = vunpack.c.l.b16 %v2912
    %v2958 = vunpack.c.h.b16 %v2912
    %v2959 = vunpack.c.l.b16 %v2913
    %v2960 = vunpack.c.h.b16 %v2913
    %v2961 = vunpack.c.l.b16 %v2914
    %v2962 = vunpack.c.h.b16 %v2914
    %v2963 = vpack.c.b16 %v2935, %v2931
    %v2964 = vpack.c.b16 %v2936, %v2932
    %v2965 = vpack.c.b16 %v2937, %v2933
    %v2966 = vpack.c.b16 %v2938, %v2934
    %v2967 = vpack.c.b16 %v2943, %v2939
    %v2968 = vpack.c.b16 %v2944, %v2940
    %v2969 = vpack.c.b16 %v2945, %v2941
    %v2970 = vpack.c.b16 %v2946, %v2942
    %v2971 = vpack.c.b16 %v2951, %v2947
    %v2972 = vpack.c.b16 %v2952, %v2948
    %v2973 = vpack.c.b16 %v2953, %v2949
    %v2974 = vpack.c.b16 %v2954, %v2950
    %v2975 = vpack.c.b16 %v2959, %v2955
    %v2976 = vpack.c.b16 %v2960, %v2956
    %v2977 = vpack.c.b16 %v2961, %v2957
    %v2978 = vpack.c.b16 %v2962, %v2958
    %v2996 = vsel %vm2086, %v2897, 0
    %2998 = vmatpush.bf16.msra.mxu0 0
    %2999 = vmatpush.bf16.msra.mxu0 0
    %3000 = vmatpush.bf16.msra.mxu0 0
    %3001 = vmatpush.bf16.msra.mxu0 0
    %3002 = vmatpush.bf16.msra.mxu0 %v2975
    %3003 = vmatpush.bf16.msra.mxu0 %v2971
    %3004 = vmatpush.bf16.msra.mxu0 %v2967
    %3005 = vmatpush.bf16.msra.mxu0 %v2963
    %3006 = vmatmul.bf16.gmra.mxu0 %v2996
    %v3007 = vpop.f32.mrf.mxu0
    %v3008 = vadd.f32 0.0, %v3007
    %v3009 = vpop.f32.mrf.mxu0
    %3010 = vdwg.mxu0
    %3011 = vmatpush.bf16.msra.mxu0 0
    %3012 = vmatpush.bf16.msra.mxu0 0
    %3013 = vmatpush.bf16.msra.mxu0 0
    %3014 = vmatpush.bf16.msra.mxu0 0
    %3015 = vmatpush.bf16.msra.mxu0 %v2976
    %3016 = vmatpush.bf16.msra.mxu0 %v2972
    %3017 = vmatpush.bf16.msra.mxu0 %v2968
    %3018 = vmatpush.bf16.msra.mxu0 %v2964
    %3019 = vmatmul.bf16.gmra.mxu0 %v2996
    %v3020 = vpop.f32.mrf.mxu0
    %v3021 = vadd.f32 0.0, %v3020
    %v3022 = vpop.f32.mrf.mxu0
    %3023 = vdwg.mxu0
    %3024 = vmatpush.bf16.msra.mxu0 0
    %3025 = vmatpush.bf16.msra.mxu0 0
    %3026 = vmatpush.bf16.msra.mxu0 0
    %3027 = vmatpush.bf16.msra.mxu0 0
    %3028 = vmatpush.bf16.msra.mxu0 %v2977
    %3029 = vmatpush.bf16.msra.mxu0 %v2973
    %3030 = vmatpush.bf16.msra.mxu0 %v2969
    %3031 = vmatpush.bf16.msra.mxu0 %v2965
    %3032 = vmatmul.bf16.gmra.mxu0 %v2996
    %v3033 = vpop.f32.mrf.mxu0
    %v3034 = vadd.f32 0.0, %v3033
    %v3035 = vpop.f32.mrf.mxu0
    %3036 = vdwg.mxu0
    %3037 = vmatpush.bf16.msra.mxu0 0
    %3038 = vmatpush.bf16.msra.mxu0 0
    %3039 = vmatpush.bf16.msra.mxu0 0
    %3040 = vmatpush.bf16.msra.mxu0 0
    %3041 = vmatpush.bf16.msra.mxu0 %v2978
    %3042 = vmatpush.bf16.msra.mxu0 %v2974
    %3043 = vmatpush.bf16.msra.mxu0 %v2970
    %3044 = vmatpush.bf16.msra.mxu0 %v2966
    %3045 = vmatmul.bf16.gmra.mxu0 %v2996
    %v3046 = vpop.f32.mrf.mxu0
    %v3047 = vadd.f32 0.0, %v3046
    %v3048 = vpop.f32.mrf.mxu0
    %3049 = vdwg.mxu0
    %v3050 = vadd.f32 %v2891, %v3008
    %v3051 = vadd.f32 %v2892, %v3021
    %v3052 = vadd.f32 %v2893, %v3034
    %v3053 = vadd.f32 %v2894, %v3047
    %s3054 = scalar_lea.vmem [#allocation10], 6
    %v3055 = vld [vmem:[%s3054] ss:$10 sm:$0x3]
    %v3056 = vpack.c.bf16 %v3055, %v3055
    %s3057 = scalar_lea.vmem %s11, 768
    %v3058 = vld [vmem:[%s3057] sm:$0xff]
    %v3059 = vld [vmem:[%s3057 + $0x8] sm:$0xff]
    %v3060 = vld [vmem:[%s3057 + $0x10] sm:$0xff]
    %v3061 = vld [vmem:[%s3057 + $0x18] sm:$0xff]
    %v3062 = vld [vmem:[%s3057 + $0x20] sm:$0xff]
    %v3063 = vld [vmem:[%s3057 + $0x28] sm:$0xff]
    %v3064 = vld [vmem:[%s3057 + $0x30] sm:$0xff]
    %v3065 = vld [vmem:[%s3057 + $0x38] sm:$0xff]
    %v3066 = vld [vmem:[%s3057 + $0x40] sm:$0xff]
    %v3067 = vld [vmem:[%s3057 + $0x48] sm:$0xff]
    %v3068 = vld [vmem:[%s3057 + $0x50] sm:$0xff]
    %v3069 = vld [vmem:[%s3057 + $0x58] sm:$0xff]
    %v3070 = vld [vmem:[%s3057 + $0x60] sm:$0xff]
    %v3071 = vld [vmem:[%s3057 + $0x68] sm:$0xff]
    %v3072 = vld [vmem:[%s3057 + $0x70] sm:$0xff]
    %v3073 = vld [vmem:[%s3057 + $0x78] sm:$0xff]
    %v3090 = vunpack.c.l.b16 %v3058
    %v3091 = vunpack.c.h.b16 %v3058
    %v3092 = vunpack.c.l.b16 %v3059
    %v3093 = vunpack.c.h.b16 %v3059
    %v3094 = vunpack.c.l.b16 %v3060
    %v3095 = vunpack.c.h.b16 %v3060
    %v3096 = vunpack.c.l.b16 %v3061
    %v3097 = vunpack.c.h.b16 %v3061
    %v3098 = vunpack.c.l.b16 %v3062
    %v3099 = vunpack.c.h.b16 %v3062
    %v3100 = vunpack.c.l.b16 %v3063
    %v3101 = vunpack.c.h.b16 %v3063
    %v3102 = vunpack.c.l.b16 %v3064
    %v3103 = vunpack.c.h.b16 %v3064
    %v3104 = vunpack.c.l.b16 %v3065
    %v3105 = vunpack.c.h.b16 %v3065
    %v3106 = vunpack.c.l.b16 %v3066
    %v3107 = vunpack.c.h.b16 %v3066
    %v3108 = vunpack.c.l.b16 %v3067
    %v3109 = vunpack.c.h.b16 %v3067
    %v3110 = vunpack.c.l.b16 %v3068
    %v3111 = vunpack.c.h.b16 %v3068
    %v3112 = vunpack.c.l.b16 %v3069
    %v3113 = vunpack.c.h.b16 %v3069
    %v3114 = vunpack.c.l.b16 %v3070
    %v3115 = vunpack.c.h.b16 %v3070
    %v3116 = vunpack.c.l.b16 %v3071
    %v3117 = vunpack.c.h.b16 %v3071
    %v3118 = vunpack.c.l.b16 %v3072
    %v3119 = vunpack.c.h.b16 %v3072
    %v3120 = vunpack.c.l.b16 %v3073
    %v3121 = vunpack.c.h.b16 %v3073
    %v3122 = vpack.c.b16 %v3094, %v3090
    %v3123 = vpack.c.b16 %v3095, %v3091
    %v3124 = vpack.c.b16 %v3096, %v3092
    %v3125 = vpack.c.b16 %v3097, %v3093
    %v3126 = vpack.c.b16 %v3102, %v3098
    %v3127 = vpack.c.b16 %v3103, %v3099
    %v3128 = vpack.c.b16 %v3104, %v3100
    %v3129 = vpack.c.b16 %v3105, %v3101
    %v3130 = vpack.c.b16 %v3110, %v3106
    %v3131 = vpack.c.b16 %v3111, %v3107
    %v3132 = vpack.c.b16 %v3112, %v3108
    %v3133 = vpack.c.b16 %v3113, %v3109
    %v3134 = vpack.c.b16 %v3118, %v3114
    %v3135 = vpack.c.b16 %v3119, %v3115
    %v3136 = vpack.c.b16 %v3120, %v3116
    %v3137 = vpack.c.b16 %v3121, %v3117
    %v3155 = vsel %vm2086, %v3056, 0
    %3157 = vmatpush.bf16.msra.mxu0 0
    %3158 = vmatpush.bf16.msra.mxu0 0
    %3159 = vmatpush.bf16.msra.mxu0 0
    %3160 = vmatpush.bf16.msra.mxu0 0
    %3161 = vmatpush.bf16.msra.mxu0 %v3134
    %3162 = vmatpush.bf16.msra.mxu0 %v3130
    %3163 = vmatpush.bf16.msra.mxu0 %v3126
    %3164 = vmatpush.bf16.msra.mxu0 %v3122
    %3165 = vmatmul.bf16.gmra.mxu0 %v3155
    %v3166 = vpop.f32.mrf.mxu0
    %v3167 = vadd.f32 0.0, %v3166
    %v3168 = vpop.f32.mrf.mxu0
    %3169 = vdwg.mxu0
    %3170 = vmatpush.bf16.msra.mxu0 0
    %3171 = vmatpush.bf16.msra.mxu0 0
    %3172 = vmatpush.bf16.msra.mxu0 0
    %3173 = vmatpush.bf16.msra.mxu0 0
    %3174 = vmatpush.bf16.msra.mxu0 %v3135
    %3175 = vmatpush.bf16.msra.mxu0 %v3131
    %3176 = vmatpush.bf16.msra.mxu0 %v3127
    %3177 = vmatpush.bf16.msra.mxu0 %v3123
    %3178 = vmatmul.bf16.gmra.mxu0 %v3155
    %v3179 = vpop.f32.mrf.mxu0
    %v3180 = vadd.f32 0.0, %v3179
    %v3181 = vpop.f32.mrf.mxu0
    %3182 = vdwg.mxu0
    %3183 = vmatpush.bf16.msra.mxu0 0
    %3184 = vmatpush.bf16.msra.mxu0 0
    %3185 = vmatpush.bf16.msra.mxu0 0
    %3186 = vmatpush.bf16.msra.mxu0 0
    %3187 = vmatpush.bf16.msra.mxu0 %v3136
    %3188 = vmatpush.bf16.msra.mxu0 %v3132
    %3189 = vmatpush.bf16.msra.mxu0 %v3128
    %3190 = vmatpush.bf16.msra.mxu0 %v3124
    %3191 = vmatmul.bf16.gmra.mxu0 %v3155
    %v3192 = vpop.f32.mrf.mxu0
    %v3193 = vadd.f32 0.0, %v3192
    %v3194 = vpop.f32.mrf.mxu0
    %3195 = vdwg.mxu0
    %3196 = vmatpush.bf16.msra.mxu0 0
    %3197 = vmatpush.bf16.msra.mxu0 0
    %3198 = vmatpush.bf16.msra.mxu0 0
    %3199 = vmatpush.bf16.msra.mxu0 0
    %3200 = vmatpush.bf16.msra.mxu0 %v3137
    %3201 = vmatpush.bf16.msra.mxu0 %v3133
    %3202 = vmatpush.bf16.msra.mxu0 %v3129
    %3203 = vmatpush.bf16.msra.mxu0 %v3125
    %3204 = vmatmul.bf16.gmra.mxu0 %v3155
    %v3205 = vpop.f32.mrf.mxu0
    %v3206 = vadd.f32 0.0, %v3205
    %v3207 = vpop.f32.mrf.mxu0
    %3208 = vdwg.mxu0
    %v3209 = vadd.f32 %v3050, %v3167
    %v3210 = vadd.f32 %v3051, %v3180
    %v3211 = vadd.f32 %v3052, %v3193
    %v3212 = vadd.f32 %v3053, %v3206
    %s3213 = scalar_lea.vmem [#allocation10], 7
    %v3214 = vld [vmem:[%s3213] ss:$10 sm:$0x3]
    %v3215 = vpack.c.bf16 %v3214, %v3214
    %s3216 = scalar_lea.vmem %s11, 896
    %v3217 = vld [vmem:[%s3216] sm:$0xff]
    %v3218 = vld [vmem:[%s3216 + $0x8] sm:$0xff]
    %v3219 = vld [vmem:[%s3216 + $0x10] sm:$0xff]
    %v3220 = vld [vmem:[%s3216 + $0x18] sm:$0xff]
    %v3221 = vld [vmem:[%s3216 + $0x20] sm:$0xff]
    %v3222 = vld [vmem:[%s3216 + $0x28] sm:$0xff]
    %v3223 = vld [vmem:[%s3216 + $0x30] sm:$0xff]
    %v3224 = vld [vmem:[%s3216 + $0x38] sm:$0xff]
    %v3225 = vld [vmem:[%s3216 + $0x40] sm:$0xff]
    %v3226 = vld [vmem:[%s3216 + $0x48] sm:$0xff]
    %v3227 = vld [vmem:[%s3216 + $0x50] sm:$0xff]
    %v3228 = vld [vmem:[%s3216 + $0x58] sm:$0xff]
    %v3229 = vld [vmem:[%s3216 + $0x60] sm:$0xff]
    %v3230 = vld [vmem:[%s3216 + $0x68] sm:$0xff]
    %v3231 = vld [vmem:[%s3216 + $0x70] sm:$0xff]
    %v3232 = vld [vmem:[%s3216 + $0x78] sm:$0xff]
    %v3249 = vunpack.c.l.b16 %v3217
    %v3250 = vunpack.c.h.b16 %v3217
    %v3251 = vunpack.c.l.b16 %v3218
    %v3252 = vunpack.c.h.b16 %v3218
    %v3253 = vunpack.c.l.b16 %v3219
    %v3254 = vunpack.c.h.b16 %v3219
    %v3255 = vunpack.c.l.b16 %v3220
    %v3256 = vunpack.c.h.b16 %v3220
    %v3257 = vunpack.c.l.b16 %v3221
    %v3258 = vunpack.c.h.b16 %v3221
    %v3259 = vunpack.c.l.b16 %v3222
    %v3260 = vunpack.c.h.b16 %v3222
    %v3261 = vunpack.c.l.b16 %v3223
    %v3262 = vunpack.c.h.b16 %v3223
    %v3263 = vunpack.c.l.b16 %v3224
    %v3264 = vunpack.c.h.b16 %v3224
    %v3265 = vunpack.c.l.b16 %v3225
    %v3266 = vunpack.c.h.b16 %v3225
    %v3267 = vunpack.c.l.b16 %v3226
    %v3268 = vunpack.c.h.b16 %v3226
    %v3269 = vunpack.c.l.b16 %v3227
    %v3270 = vunpack.c.h.b16 %v3227
    %v3271 = vunpack.c.l.b16 %v3228
    %v3272 = vunpack.c.h.b16 %v3228
    %v3273 = vunpack.c.l.b16 %v3229
    %v3274 = vunpack.c.h.b16 %v3229
    %v3275 = vunpack.c.l.b16 %v3230
    %v3276 = vunpack.c.h.b16 %v3230
    %v3277 = vunpack.c.l.b16 %v3231
    %v3278 = vunpack.c.h.b16 %v3231
    %v3279 = vunpack.c.l.b16 %v3232
    %v3280 = vunpack.c.h.b16 %v3232
    %v3281 = vpack.c.b16 %v3253, %v3249
    %v3282 = vpack.c.b16 %v3254, %v3250
    %v3283 = vpack.c.b16 %v3255, %v3251
    %v3284 = vpack.c.b16 %v3256, %v3252
    %v3285 = vpack.c.b16 %v3261, %v3257
    %v3286 = vpack.c.b16 %v3262, %v3258
    %v3287 = vpack.c.b16 %v3263, %v3259
    %v3288 = vpack.c.b16 %v3264, %v3260
    %v3289 = vpack.c.b16 %v3269, %v3265
    %v3290 = vpack.c.b16 %v3270, %v3266
    %v3291 = vpack.c.b16 %v3271, %v3267
    %v3292 = vpack.c.b16 %v3272, %v3268
    %v3293 = vpack.c.b16 %v3277, %v3273
    %v3294 = vpack.c.b16 %v3278, %v3274
    %v3295 = vpack.c.b16 %v3279, %v3275
    %v3296 = vpack.c.b16 %v3280, %v3276
    %v3314 = vsel %vm2086, %v3215, 0
    %3316 = vmatpush.bf16.msra.mxu0 0
    %3317 = vmatpush.bf16.msra.mxu0 0
    %3318 = vmatpush.bf16.msra.mxu0 0
    %3319 = vmatpush.bf16.msra.mxu0 0
    %3320 = vmatpush.bf16.msra.mxu0 %v3293
    %3321 = vmatpush.bf16.msra.mxu0 %v3289
    %3322 = vmatpush.bf16.msra.mxu0 %v3285
    %3323 = vmatpush.bf16.msra.mxu0 %v3281
    %3324 = vmatmul.bf16.gmra.mxu0 %v3314
    %v3325 = vpop.f32.mrf.mxu0
    %v3326 = vadd.f32 0.0, %v3325
    %v3327 = vpop.f32.mrf.mxu0
    %3328 = vdwg.mxu0
    %3329 = vmatpush.bf16.msra.mxu0 0
    %3330 = vmatpush.bf16.msra.mxu0 0
    %3331 = vmatpush.bf16.msra.mxu0 0
    %3332 = vmatpush.bf16.msra.mxu0 0
    %3333 = vmatpush.bf16.msra.mxu0 %v3294
    %3334 = vmatpush.bf16.msra.mxu0 %v3290
    %3335 = vmatpush.bf16.msra.mxu0 %v3286
    %3336 = vmatpush.bf16.msra.mxu0 %v3282
    %3337 = vmatmul.bf16.gmra.mxu0 %v3314
    %v3338 = vpop.f32.mrf.mxu0
    %v3339 = vadd.f32 0.0, %v3338
    %v3340 = vpop.f32.mrf.mxu0
    %3341 = vdwg.mxu0
    %3342 = vmatpush.bf16.msra.mxu0 0
    %3343 = vmatpush.bf16.msra.mxu0 0
    %3344 = vmatpush.bf16.msra.mxu0 0
    %3345 = vmatpush.bf16.msra.mxu0 0
    %3346 = vmatpush.bf16.msra.mxu0 %v3295
    %3347 = vmatpush.bf16.msra.mxu0 %v3291
    %3348 = vmatpush.bf16.msra.mxu0 %v3287
    %3349 = vmatpush.bf16.msra.mxu0 %v3283
    %3350 = vmatmul.bf16.gmra.mxu0 %v3314
    %v3351 = vpop.f32.mrf.mxu0
    %v3352 = vadd.f32 0.0, %v3351
    %v3353 = vpop.f32.mrf.mxu0
    %3354 = vdwg.mxu0
    %3355 = vmatpush.bf16.msra.mxu0 0
    %3356 = vmatpush.bf16.msra.mxu0 0
    %3357 = vmatpush.bf16.msra.mxu0 0
    %3358 = vmatpush.bf16.msra.mxu0 0
    %3359 = vmatpush.bf16.msra.mxu0 %v3296
    %3360 = vmatpush.bf16.msra.mxu0 %v3292
    %3361 = vmatpush.bf16.msra.mxu0 %v3288
    %3362 = vmatpush.bf16.msra.mxu0 %v3284
    %3363 = vmatmul.bf16.gmra.mxu0 %v3314
    %v3364 = vpop.f32.mrf.mxu0
    %v3365 = vadd.f32 0.0, %v3364
    %v3366 = vpop.f32.mrf.mxu0
    %3367 = vdwg.mxu0
    %v3368 = vadd.f32 %v3209, %v3326
    %v3369 = vadd.f32 %v3210, %v3339
    %v3370 = vadd.f32 %v3211, %v3352
    %v3371 = vadd.f32 %v3212, %v3365
    %s3372 = scalar_lea.vmem [#allocation10], 8
    %v3373 = vld [vmem:[%s3372] ss:$10 sm:$0x3]
    %v3374 = vpack.c.bf16 %v3373, %v3373
    %s3375 = scalar_lea.vmem %s11, 1024
    %v3376 = vld [vmem:[%s3375] sm:$0xff]
    %v3377 = vld [vmem:[%s3375 + $0x8] sm:$0xff]
    %v3378 = vld [vmem:[%s3375 + $0x10] sm:$0xff]
    %v3379 = vld [vmem:[%s3375 + $0x18] sm:$0xff]
    %v3380 = vld [vmem:[%s3375 + $0x20] sm:$0xff]
    %v3381 = vld [vmem:[%s3375 + $0x28] sm:$0xff]
    %v3382 = vld [vmem:[%s3375 + $0x30] sm:$0xff]
    %v3383 = vld [vmem:[%s3375 + $0x38] sm:$0xff]
    %v3384 = vld [vmem:[%s3375 + $0x40] sm:$0xff]
    %v3385 = vld [vmem:[%s3375 + $0x48] sm:$0xff]
    %v3386 = vld [vmem:[%s3375 + $0x50] sm:$0xff]
    %v3387 = vld [vmem:[%s3375 + $0x58] sm:$0xff]
    %v3388 = vld [vmem:[%s3375 + $0x60] sm:$0xff]
    %v3389 = vld [vmem:[%s3375 + $0x68] sm:$0xff]
    %v3390 = vld [vmem:[%s3375 + $0x70] sm:$0xff]
    %v3391 = vld [vmem:[%s3375 + $0x78] sm:$0xff]
    %v3408 = vunpack.c.l.b16 %v3376
    %v3409 = vunpack.c.h.b16 %v3376
    %v3410 = vunpack.c.l.b16 %v3377
    %v3411 = vunpack.c.h.b16 %v3377
    %v3412 = vunpack.c.l.b16 %v3378
    %v3413 = vunpack.c.h.b16 %v3378
    %v3414 = vunpack.c.l.b16 %v3379
    %v3415 = vunpack.c.h.b16 %v3379
    %v3416 = vunpack.c.l.b16 %v3380
    %v3417 = vunpack.c.h.b16 %v3380
    %v3418 = vunpack.c.l.b16 %v3381
    %v3419 = vunpack.c.h.b16 %v3381
    %v3420 = vunpack.c.l.b16 %v3382
    %v3421 = vunpack.c.h.b16 %v3382
    %v3422 = vunpack.c.l.b16 %v3383
    %v3423 = vunpack.c.h.b16 %v3383
    %v3424 = vunpack.c.l.b16 %v3384
    %v3425 = vunpack.c.h.b16 %v3384
    %v3426 = vunpack.c.l.b16 %v3385
    %v3427 = vunpack.c.h.b16 %v3385
    %v3428 = vunpack.c.l.b16 %v3386
    %v3429 = vunpack.c.h.b16 %v3386
    %v3430 = vunpack.c.l.b16 %v3387
    %v3431 = vunpack.c.h.b16 %v3387
    %v3432 = vunpack.c.l.b16 %v3388
    %v3433 = vunpack.c.h.b16 %v3388
    %v3434 = vunpack.c.l.b16 %v3389
    %v3435 = vunpack.c.h.b16 %v3389
    %v3436 = vunpack.c.l.b16 %v3390
    %v3437 = vunpack.c.h.b16 %v3390
    %v3438 = vunpack.c.l.b16 %v3391
    %v3439 = vunpack.c.h.b16 %v3391
    %v3440 = vpack.c.b16 %v3412, %v3408
    %v3441 = vpack.c.b16 %v3413, %v3409
    %v3442 = vpack.c.b16 %v3414, %v3410
    %v3443 = vpack.c.b16 %v3415, %v3411
    %v3444 = vpack.c.b16 %v3420, %v3416
    %v3445 = vpack.c.b16 %v3421, %v3417
    %v3446 = vpack.c.b16 %v3422, %v3418
    %v3447 = vpack.c.b16 %v3423, %v3419
    %v3448 = vpack.c.b16 %v3428, %v3424
    %v3449 = vpack.c.b16 %v3429, %v3425
    %v3450 = vpack.c.b16 %v3430, %v3426
    %v3451 = vpack.c.b16 %v3431, %v3427
    %v3452 = vpack.c.b16 %v3436, %v3432
    %v3453 = vpack.c.b16 %v3437, %v3433
    %v3454 = vpack.c.b16 %v3438, %v3434
    %v3455 = vpack.c.b16 %v3439, %v3435
    %v3473 = vsel %vm2086, %v3374, 0
    %3475 = vmatpush.bf16.msra.mxu0 0
    %3476 = vmatpush.bf16.msra.mxu0 0
    %3477 = vmatpush.bf16.msra.mxu0 0
    %3478 = vmatpush.bf16.msra.mxu0 0
    %3479 = vmatpush.bf16.msra.mxu0 %v3452
    %3480 = vmatpush.bf16.msra.mxu0 %v3448
    %3481 = vmatpush.bf16.msra.mxu0 %v3444
    %3482 = vmatpush.bf16.msra.mxu0 %v3440
    %3483 = vmatmul.bf16.gmra.mxu0 %v3473
    %v3484 = vpop.f32.mrf.mxu0
    %v3485 = vadd.f32 0.0, %v3484
    %v3486 = vpop.f32.mrf.mxu0
    %3487 = vdwg.mxu0
    %3488 = vmatpush.bf16.msra.mxu0 0
    %3489 = vmatpush.bf16.msra.mxu0 0
    %3490 = vmatpush.bf16.msra.mxu0 0
    %3491 = vmatpush.bf16.msra.mxu0 0
    %3492 = vmatpush.bf16.msra.mxu0 %v3453
    %3493 = vmatpush.bf16.msra.mxu0 %v3449
    %3494 = vmatpush.bf16.msra.mxu0 %v3445
    %3495 = vmatpush.bf16.msra.mxu0 %v3441
    %3496 = vmatmul.bf16.gmra.mxu0 %v3473
    %v3497 = vpop.f32.mrf.mxu0
    %v3498 = vadd.f32 0.0, %v3497
    %v3499 = vpop.f32.mrf.mxu0
    %3500 = vdwg.mxu0
    %3501 = vmatpush.bf16.msra.mxu0 0
    %3502 = vmatpush.bf16.msra.mxu0 0
    %3503 = vmatpush.bf16.msra.mxu0 0
    %3504 = vmatpush.bf16.msra.mxu0 0
    %3505 = vmatpush.bf16.msra.mxu0 %v3454
    %3506 = vmatpush.bf16.msra.mxu0 %v3450
    %3507 = vmatpush.bf16.msra.mxu0 %v3446
    %3508 = vmatpush.bf16.msra.mxu0 %v3442
    %3509 = vmatmul.bf16.gmra.mxu0 %v3473
    %v3510 = vpop.f32.mrf.mxu0
    %v3511 = vadd.f32 0.0, %v3510
    %v3512 = vpop.f32.mrf.mxu0
    %3513 = vdwg.mxu0
    %3514 = vmatpush.bf16.msra.mxu0 0
    %3515 = vmatpush.bf16.msra.mxu0 0
    %3516 = vmatpush.bf16.msra.mxu0 0
    %3517 = vmatpush.bf16.msra.mxu0 0
    %3518 = vmatpush.bf16.msra.mxu0 %v3455
    %3519 = vmatpush.bf16.msra.mxu0 %v3451
    %3520 = vmatpush.bf16.msra.mxu0 %v3447
    %3521 = vmatpush.bf16.msra.mxu0 %v3443
    %3522 = vmatmul.bf16.gmra.mxu0 %v3473
    %v3523 = vpop.f32.mrf.mxu0
    %v3524 = vadd.f32 0.0, %v3523
    %v3525 = vpop.f32.mrf.mxu0
    %3526 = vdwg.mxu0
    %v3527 = vadd.f32 %v3368, %v3485
    %v3528 = vadd.f32 %v3369, %v3498
    %v3529 = vadd.f32 %v3370, %v3511
    %v3530 = vadd.f32 %v3371, %v3524
    %s3531 = scalar_lea.vmem [#allocation10], 9
    %v3532 = vld [vmem:[%s3531] ss:$10 sm:$0x3]
    %v3533 = vpack.c.bf16 %v3532, %v3532
    %s3534 = scalar_lea.vmem %s11, 1152
    %v3535 = vld [vmem:[%s3534] sm:$0xff]
    %v3536 = vld [vmem:[%s3534 + $0x8] sm:$0xff]
    %v3537 = vld [vmem:[%s3534 + $0x10] sm:$0xff]
    %v3538 = vld [vmem:[%s3534 + $0x18] sm:$0xff]
    %v3539 = vld [vmem:[%s3534 + $0x20] sm:$0xff]
    %v3540 = vld [vmem:[%s3534 + $0x28] sm:$0xff]
    %v3541 = vld [vmem:[%s3534 + $0x30] sm:$0xff]
    %v3542 = vld [vmem:[%s3534 + $0x38] sm:$0xff]
    %v3543 = vld [vmem:[%s3534 + $0x40] sm:$0xff]
    %v3544 = vld [vmem:[%s3534 + $0x48] sm:$0xff]
    %v3545 = vld [vmem:[%s3534 + $0x50] sm:$0xff]
    %v3546 = vld [vmem:[%s3534 + $0x58] sm:$0xff]
    %v3547 = vld [vmem:[%s3534 + $0x60] sm:$0xff]
    %v3548 = vld [vmem:[%s3534 + $0x68] sm:$0xff]
    %v3549 = vld [vmem:[%s3534 + $0x70] sm:$0xff]
    %v3550 = vld [vmem:[%s3534 + $0x78] sm:$0xff]
    %v3567 = vunpack.c.l.b16 %v3535
    %v3568 = vunpack.c.h.b16 %v3535
    %v3569 = vunpack.c.l.b16 %v3536
    %v3570 = vunpack.c.h.b16 %v3536
    %v3571 = vunpack.c.l.b16 %v3537
    %v3572 = vunpack.c.h.b16 %v3537
    %v3573 = vunpack.c.l.b16 %v3538
    %v3574 = vunpack.c.h.b16 %v3538
    %v3575 = vunpack.c.l.b16 %v3539
    %v3576 = vunpack.c.h.b16 %v3539
    %v3577 = vunpack.c.l.b16 %v3540
    %v3578 = vunpack.c.h.b16 %v3540
    %v3579 = vunpack.c.l.b16 %v3541
    %v3580 = vunpack.c.h.b16 %v3541
    %v3581 = vunpack.c.l.b16 %v3542
    %v3582 = vunpack.c.h.b16 %v3542
    %v3583 = vunpack.c.l.b16 %v3543
    %v3584 = vunpack.c.h.b16 %v3543
    %v3585 = vunpack.c.l.b16 %v3544
    %v3586 = vunpack.c.h.b16 %v3544
    %v3587 = vunpack.c.l.b16 %v3545
    %v3588 = vunpack.c.h.b16 %v3545
    %v3589 = vunpack.c.l.b16 %v3546
    %v3590 = vunpack.c.h.b16 %v3546
    %v3591 = vunpack.c.l.b16 %v3547
    %v3592 = vunpack.c.h.b16 %v3547
    %v3593 = vunpack.c.l.b16 %v3548
    %v3594 = vunpack.c.h.b16 %v3548
    %v3595 = vunpack.c.l.b16 %v3549
    %v3596 = vunpack.c.h.b16 %v3549
    %v3597 = vunpack.c.l.b16 %v3550
    %v3598 = vunpack.c.h.b16 %v3550
    %v3599 = vpack.c.b16 %v3571, %v3567
    %v3600 = vpack.c.b16 %v3572, %v3568
    %v3601 = vpack.c.b16 %v3573, %v3569
    %v3602 = vpack.c.b16 %v3574, %v3570
    %v3603 = vpack.c.b16 %v3579, %v3575
    %v3604 = vpack.c.b16 %v3580, %v3576
    %v3605 = vpack.c.b16 %v3581, %v3577
    %v3606 = vpack.c.b16 %v3582, %v3578
    %v3607 = vpack.c.b16 %v3587, %v3583
    %v3608 = vpack.c.b16 %v3588, %v3584
    %v3609 = vpack.c.b16 %v3589, %v3585
    %v3610 = vpack.c.b16 %v3590, %v3586
    %v3611 = vpack.c.b16 %v3595, %v3591
    %v3612 = vpack.c.b16 %v3596, %v3592
    %v3613 = vpack.c.b16 %v3597, %v3593
    %v3614 = vpack.c.b16 %v3598, %v3594
    %v3632 = vsel %vm2086, %v3533, 0
    %3634 = vmatpush.bf16.msra.mxu0 0
    %3635 = vmatpush.bf16.msra.mxu0 0
    %3636 = vmatpush.bf16.msra.mxu0 0
    %3637 = vmatpush.bf16.msra.mxu0 0
    %3638 = vmatpush.bf16.msra.mxu0 %v3611
    %3639 = vmatpush.bf16.msra.mxu0 %v3607
    %3640 = vmatpush.bf16.msra.mxu0 %v3603
    %3641 = vmatpush.bf16.msra.mxu0 %v3599
    %3642 = vmatmul.bf16.gmra.mxu0 %v3632
    %v3643 = vpop.f32.mrf.mxu0
    %v3644 = vadd.f32 0.0, %v3643
    %v3645 = vpop.f32.mrf.mxu0
    %3646 = vdwg.mxu0
    %3647 = vmatpush.bf16.msra.mxu0 0
    %3648 = vmatpush.bf16.msra.mxu0 0
    %3649 = vmatpush.bf16.msra.mxu0 0
    %3650 = vmatpush.bf16.msra.mxu0 0
    %3651 = vmatpush.bf16.msra.mxu0 %v3612
    %3652 = vmatpush.bf16.msra.mxu0 %v3608
    %3653 = vmatpush.bf16.msra.mxu0 %v3604
    %3654 = vmatpush.bf16.msra.mxu0 %v3600
    %3655 = vmatmul.bf16.gmra.mxu0 %v3632
    %v3656 = vpop.f32.mrf.mxu0
    %v3657 = vadd.f32 0.0, %v3656
    %v3658 = vpop.f32.mrf.mxu0
    %3659 = vdwg.mxu0
    %3660 = vmatpush.bf16.msra.mxu0 0
    %3661 = vmatpush.bf16.msra.mxu0 0
    %3662 = vmatpush.bf16.msra.mxu0 0
    %3663 = vmatpush.bf16.msra.mxu0 0
    %3664 = vmatpush.bf16.msra.mxu0 %v3613
    %3665 = vmatpush.bf16.msra.mxu0 %v3609
    %3666 = vmatpush.bf16.msra.mxu0 %v3605
    %3667 = vmatpush.bf16.msra.mxu0 %v3601
    %3668 = vmatmul.bf16.gmra.mxu0 %v3632
    %v3669 = vpop.f32.mrf.mxu0
    %v3670 = vadd.f32 0.0, %v3669
    %v3671 = vpop.f32.mrf.mxu0
    %3672 = vdwg.mxu0
    %3673 = vmatpush.bf16.msra.mxu0 0
    %3674 = vmatpush.bf16.msra.mxu0 0
    %3675 = vmatpush.bf16.msra.mxu0 0
    %3676 = vmatpush.bf16.msra.mxu0 0
    %3677 = vmatpush.bf16.msra.mxu0 %v3614
    %3678 = vmatpush.bf16.msra.mxu0 %v3610
    %3679 = vmatpush.bf16.msra.mxu0 %v3606
    %3680 = vmatpush.bf16.msra.mxu0 %v3602
    %3681 = vmatmul.bf16.gmra.mxu0 %v3632
    %v3682 = vpop.f32.mrf.mxu0
    %v3683 = vadd.f32 0.0, %v3682
    %v3684 = vpop.f32.mrf.mxu0
    %3685 = vdwg.mxu0
    %v3686 = vadd.f32 %v3527, %v3644
    %v3687 = vadd.f32 %v3528, %v3657
    %v3688 = vadd.f32 %v3529, %v3670
    %v3689 = vadd.f32 %v3530, %v3683
    %v3690 = vld [vmem:[%s12] sm:$0xf]
    %v3692 = vperm.slane %v3690, 0
    %v3693 = vperm.slane %v3690, 1
    %v3694 = vperm.slane %v3690, 2
    %v3695 = vperm.slane %v3690, 3
    %v3700 = vadd.f32 %v3686, %v3692
    %v3701 = vadd.f32 %v3687, %v3693
    %v3702 = vadd.f32 %v3688, %v3694
    %v3703 = vadd.f32 %v3689, %v3695
    %v3708 = vrot.slane %v3701, 6
    %v3709 = vrot.slane %v3702, 4
    %v3710 = vrot.slane %v3703, 2
    %vm3711 = vcmask 1041408
    %v3712 = vsel %vm3711, %v3700, %v3708
    %vm3713 = vcmask 1045508
    %v3714 = vsel %vm3713, %v3709, %v3710
    %v3715 = vsel %vm1525, %v3712, %v3714
    %3717 = vst [vmem:[#allocation11] sm:$0xff] %v3715
    // Predicated region
    $region54: #{cnn_forward.1} parent=1 // pred_check
      _
    $region55: #{cnn_forward.1} parent=1 // pred_check_branch
      %3719 = sbr.rel (0) target = $region57
    $region56: #{cnn_forward.1} parent=1 // pred_region
      %3721 = vsyncadd [#allocation12], 0
      %s3723 = sshll.u32 [#allocation11], 4
      %s3724 = int_to_ptr.vmem [resolvable:$true] %s3723
      %s3725 = sshll.u32 %s13, 4
      %s3726 = int_to_ptr.hbm [resolvable:$true] %s3725
      %3728 = dma.vmem_to_hbm [thread:$0]  %s3724, 128, %s3726, [#allocation12]
    $region57: #{cnn_forward.1} parent=1 // pred_fallthru
      _
    // Predicated region
    $region58: #{cnn_forward.1} parent=1 // pred_check
      _
    $region59: #{cnn_forward.1} parent=1 // pred_check_branch
      %3730 = sbr.rel (0) target = $region61
    $region60: #{cnn_forward.1} parent=1 // pred_region
      %3732 = dma.done [#allocation12], 128
    $region61: #{cnn_forward.1} parent=1 // pred_fallthru
      _
    %3733 = vsyncpa [#allocation12], 1

</llo_original>
